<compile_context>
chip_gen: v6e
topology: v6e:2x2x1
jax: 0.10.0
libtpu: 0.0.40
codegen_flags: <defaults>
</compile_context>

<pallas_src>
import functools

import jax
import jax.numpy as jnp
from jax.experimental import pallas as pl
from jax.experimental.pallas import tpu as pltpu


def _edge_hm_kernel(x_ref, w3_ref, b3_ref, w1a_ref, w1b_ref, b1_ref,
                    o_ref, xp_ref, *, W, cout_hm):
    """One batch element per grid step.

    x_ref  : (1, H*W, Cin)          flattened row-major spatial, channels minor
    w3_ref : (9, Cin, 2*Cin)        both heads' folded 3x3 weights, tap-major
    b3_ref : (1, 2*Cin)             folded BN biases of both heads
    w1a_ref: (2*Cin, Cout)          block-diag mapping silu_[hm|off] -> [hm|off] cols
    w1b_ref: (Cin, Cout)            residual x -> both heads' 1x1 weights
    b1_ref : (1, Cout)              1x1 biases of both heads
    o_ref  : (1, H*W, Cout)         Cout = Cout_hm + 2 (sigmoid cols then tanh cols)
    xp_ref : (2*PAD + H*W, Cin)     VMEM scratch: flat zero-padded input
    """
    _, HW, Cin = x_ref.shape
    cout = o_ref.shape[-1]
    c2 = w3_ref.shape[-1]                                 # 2*Cin
    pad = (xp_ref.shape[0] - HW) // 2

    x = x_ref[0].astype(jnp.float32)                      # (HW, Cin)

    # ---- in-kernel SAME zero padding (scratch persists; re-zero pads each step) ---
    xp_ref[0:pad, :] = jnp.zeros((pad, Cin), jnp.float32)
    xp_ref[pad + HW:pad + HW + pad, :] = jnp.zeros((pad, Cin), jnp.float32)
    xp_ref[pad:pad + HW, :] = x

    # Flat row-major spatial index s = y*W + x.  A (dy, dx) tap of the 3x3 conv
    # reads flat index s + (dy-1)*W + (dx-1); vertical overruns land in the zero
    # pad, horizontal wraparound is removed with per-column masks.
    col = jax.lax.broadcasted_iota(jnp.int32, (HW, Cin), 0) % W
    not_left = col != 0                                   # dx == 0 taps read column x-1
    not_right = col != (W - 1)                            # dx == 2 taps read column x+1

    # ---- fused 3x3 conv of BOTH heads: 9 contiguous-window taps, MXU matmuls ------
    acc = jnp.zeros((HW, c2), jnp.float32)
    for dy in range(3):
        for dx in range(3):
            k = dy * 3 + dx
            start = pad + (dy - 1) * W + (dx - 1)
            tap = xp_ref[start:start + HW, :]             # contiguous sublane window
            if dx == 0:
                tap = jnp.where(not_left, tap, 0.0)
            elif dx == 2:
                tap = jnp.where(not_right, tap, 0.0)
            acc = acc + jnp.dot(tap, w3_ref[k], preferred_element_type=jnp.float32)

    pre = acc + b3_ref[...]                               # BN bias (folded)
    silu = pre * jax.nn.sigmoid(pre)                      # SiLU, both heads (HW, 2*Cin)

    # ---- residual + both 1x1 convs: two small matmuls (no lane concat) ------------
    out = (jnp.dot(silu, w1a_ref[...], preferred_element_type=jnp.float32)
           + jnp.dot(x, w1b_ref[...], preferred_element_type=jnp.float32)
           + b1_ref[...])

    # sigmoid on the hm channels, tanh on the offset channels (lane select)
    lane = jax.lax.broadcasted_iota(jnp.int32, (HW, cout), 1)
    out = jnp.where(lane < cout_hm, jax.nn.sigmoid(out), jnp.tanh(out))
    o_ref[0] = out.astype(o_ref.dtype)


def _fuse_params(hm_params, off_params, cin):
    """Glue (runs in XLA, outside the kernel): stack both heads' parameters."""
    w3_hm, b3_hm, w1_hm, b1_hm = hm_params        # w3: (3,3,Cin,Cin) HWIO, BN folded
    w3_off, b3_off, w1_off, b1_off = off_params   # w1: (Cin, Cout_head)
    c_hm = w1_hm.shape[1]
    c_off = w1_off.shape[1]
    cout = c_hm + c_off

    # 3x3 taps of both heads stacked on the output-channel axis, tap-major.
    w3 = jnp.concatenate([w3_hm, w3_off], axis=-1).reshape(9, cin, 2 * cin)
    b3 = jnp.concatenate([b3_hm, b3_off]).reshape(1, 2 * cin)

    # out = silu @ w1a + x @ w1b + b1  ==  [(x + silu_h) @ w1_h + b1_h]_heads
    w1a = jnp.zeros((2 * cin, cout), jnp.float32)
    w1a = w1a.at[0:cin, 0:c_hm].set(w1_hm)              # silu_hm  -> hm columns
    w1a = w1a.at[cin:2 * cin, c_hm:cout].set(w1_off)    # silu_off -> off columns
    w1b = jnp.concatenate([w1_hm, w1_off], axis=1)      # residual x -> both heads
    b1 = jnp.concatenate([b1_hm, b1_off]).reshape(1, cout)
    return w3, b3, w1a, w1b, b1, c_hm, cout


def edge_hm_head_pallas(x_nchw, hm_params, off_params):
    """Returns (hm, offset) in NCHW, matching the PyTorch module."""
    B, Cin, H, W = x_nchw.shape
    HW = H * W
    w3, b3, w1a, w1b, b1, c_hm, cout = _fuse_params(hm_params, off_params, Cin)

    # single input array, channels minor, spatial flattened row-major
    x_flat = jnp.transpose(x_nchw, (0, 2, 3, 1)).reshape(B, HW, Cin)

    pad = ((W + 1 + 7) // 8) * 8            # >= W+1, sublane-aligned
    kernel = functools.partial(_edge_hm_kernel, W=W, cout_hm=c_hm)

    out = pl.pallas_call(
        kernel,
        out_shape=jax.ShapeDtypeStruct((B, HW, cout), x_nchw.dtype),
        grid=(B,),
        in_specs=[
            pl.BlockSpec((1, HW, Cin), lambda b: (b, 0, 0)),
            pl.BlockSpec((9, Cin, 2 * Cin), lambda b: (0, 0, 0)),
            pl.BlockSpec((1, 2 * Cin), lambda b: (0, 0)),
            pl.BlockSpec((2 * Cin, cout), lambda b: (0, 0)),
            pl.BlockSpec((Cin, cout), lambda b: (0, 0)),
            pl.BlockSpec((1, cout), lambda b: (0, 0)),
        ],
        out_specs=pl.BlockSpec((1, HW, cout), lambda b: (b, 0, 0)),
        scratch_shapes=[pltpu.VMEM((HW + 2 * pad, Cin), jnp.float32)],
        compiler_params=pltpu.CompilerParams(dimension_semantics=("parallel",)),
    )(x_flat, w3, b3, w1a, w1b, b1)

    out_nchw = jnp.transpose(out.reshape(B, H, W, cout), (0, 3, 1, 2))
    return out_nchw[:, :c_hm], out_nchw[:, c_hm:]


def init_base_block_params(key, in_ch, out_ch):
    """Deterministic synthetic params; BN folded into the 3x3 conv (eval mode)."""
    ks = jax.random.split(key, 7)
    w3 = 0.1 * jax.random.normal(ks[0], (3, 3, in_ch, in_ch), jnp.float32)   # HWIO
    gamma = 1.0 + 0.1 * jax.random.normal(ks[1], (in_ch,), jnp.float32)
    beta = 0.1 * jax.random.normal(ks[2], (in_ch,), jnp.float32)
    mean = 0.1 * jax.random.normal(ks[3], (in_ch,), jnp.float32)
    var = 1.0 + jnp.abs(jax.random.normal(ks[4], (in_ch,), jnp.float32))
    scale = gamma / jnp.sqrt(var + 1e-5)
    w3f = w3 * scale[None, None, None, :]        # fold BN scale on the output-channel axis
    b3f = beta - mean * scale                    # conv3x3 has no bias in BaseConv
    w1 = 0.1 * jax.random.normal(ks[5], (in_ch, out_ch), jnp.float32)
    b1 = 0.1 * jax.random.normal(ks[6], (out_ch,), jnp.float32)
    return w3f, b3f, w1, b1


# ----- pure-JAX reference (correctness check only) -----
def _ref_base_block(x_nhwc, w3, b3, w1, b1, act):
    y = jax.lax.conv_general_dilated(
        x_nhwc, w3, window_strides=(1, 1), padding="SAME",
        dimension_numbers=("NHWC", "HWIO", "NHWC")) + b3
    y = y * jax.nn.sigmoid(y)
    y = x_nhwc + y
    out = jnp.einsum("bhwc,co->bhwo", y, w1) + b1
    return jax.nn.sigmoid(out) if act == "sigmoid" else jnp.tanh(out)


def _ref_edge_hm_head(x_nchw, hm_params, off_params):
    x = jnp.transpose(x_nchw, (0, 2, 3, 1))
    hm = _ref_base_block(x, *hm_params, act="sigmoid")
    off = _ref_base_block(x, *off_params, act="tanh")
    return jnp.transpose(hm, (0, 3, 1, 2)), jnp.transpose(off, (0, 3, 1, 2))


if __name__ == "__main__":
    B, Cin, H, W = 2, 4, 16, 16
    Cout_hm = 4   # Edge_hm_head(in_channel=4, out_channel=4); offset head is fixed at 2

    key = jax.random.PRNGKey(0)
    kx, k_hm, k_off = jax.random.split(key, 3)
    x = jax.random.normal(kx, (B, Cin, H, W), jnp.float32)

    hm_params = init_base_block_params(k_hm, Cin, Cout_hm)
    off_params = init_base_block_params(k_off, Cin, 2)

    hm, off = edge_hm_head_pallas(x, hm_params, off_params)
    jax.block_until_ready((hm, off))

    hm_ref, off_ref = _ref_edge_hm_head(x, hm_params, off_params)
    assert hm.shape == (B, Cout_hm, H, W) and off.shape == (B, 2, H, W)
    assert jnp.allclose(hm, hm_ref, atol=1e-4, rtol=1e-4)
    assert jnp.allclose(off, off_ref, atol=1e-4, rtol=1e-4)

    print("KERNEL_OK")
</pallas_src>

<mosaic_0001>
module attributes {stable_mosaic.version = 11 : i64} {
  func.func @_edge_hm_kernel(%arg0: i32, %arg1: memref<1x256x4xf32, #tpu.memory_space<vmem>>, %arg2: memref<9x4x8xf32, #tpu.memory_space<vmem>>, %arg3: memref<1x8xf32, #tpu.memory_space<vmem>>, %arg4: memref<8x6xf32, #tpu.memory_space<vmem>>, %arg5: memref<4x6xf32, #tpu.memory_space<vmem>>, %arg6: memref<1x6xf32, #tpu.memory_space<vmem>>, %arg7: memref<1x256x6xf32, #tpu.memory_space<vmem>>, %arg8: memref<304x4xf32, #tpu.memory_space<vmem>>) attributes {dimension_semantics = [#tpu.dimension_semantics<parallel>], iteration_bounds = array<i64: 2>, scalar_prefetch = 0 : i64, scratch_operands = 1 : i64, tpu.core_type = #tpu.core_type<tc>, window_params = [{transform_indices = @transform_0, window_bounds = array<i64: 1, 256, 4>}, {pipeline_mode = #tpu.pipeline_mode<synchronous>, transform_indices = @transform_1, window_bounds = array<i64: 9, 4, 8>}, {pipeline_mode = #tpu.pipeline_mode<synchronous>, transform_indices = @transform_2, window_bounds = array<i64: 1, 8>}, {pipeline_mode = #tpu.pipeline_mode<synchronous>, transform_indices = @transform_3, window_bounds = array<i64: 8, 6>}, {pipeline_mode = #tpu.pipeline_mode<synchronous>, transform_indices = @transform_4, window_bounds = array<i64: 4, 6>}, {pipeline_mode = #tpu.pipeline_mode<synchronous>, transform_indices = @transform_5, window_bounds = array<i64: 1, 6>}, {transform_indices = @transform_6, window_bounds = array<i64: 1, 256, 6>}]} {
    %c0 = arith.constant 0 : index
    %c0_0 = arith.constant 0 : index
    %c0_1 = arith.constant 0 : index
    %0 = vector.load %arg1[%c0, %c0_0, %c0_1] : memref<1x256x4xf32, #tpu.memory_space<vmem>>, vector<1x256x4xf32>
    %1 = vector.shape_cast %0 : vector<1x256x4xf32> to vector<256x4xf32>
    %cst = arith.constant 0.000000e+00 : f32
    %2 = vector.broadcast %cst : f32 to vector<24x4xf32>
    %c0_2 = arith.constant 0 : index
    %c0_3 = arith.constant 0 : index
    %3 = vector.load %arg8[%c0_2, %c0_3] : memref<304x4xf32, #tpu.memory_space<vmem>>, vector<24x4xf32>
    tpu.vector_store %arg8[%c0_2, %c0_3], %2 {strides = array<i32>} : memref<304x4xf32, #tpu.memory_space<vmem>>, vector<24x4xf32>,
    %cst_4 = arith.constant 0.000000e+00 : f32
    %4 = vector.broadcast %cst_4 : f32 to vector<24x4xf32>
    %c280 = arith.constant 280 : index
    %c0_5 = arith.constant 0 : index
    %5 = vector.load %arg8[%c280, %c0_5] : memref<304x4xf32, #tpu.memory_space<vmem>>, vector<24x4xf32>
    tpu.vector_store %arg8[%c280, %c0_5], %4 {strides = array<i32>} : memref<304x4xf32, #tpu.memory_space<vmem>>, vector<24x4xf32>,
    %c24 = arith.constant 24 : index
    %c0_6 = arith.constant 0 : index
    %6 = vector.load %arg8[%c24, %c0_6] : memref<304x4xf32, #tpu.memory_space<vmem>>, vector<256x4xf32>
    tpu.vector_store %arg8[%c24, %c0_6], %1 {strides = array<i32>} : memref<304x4xf32, #tpu.memory_space<vmem>>, vector<256x4xf32>,
    %7 = tpu.iota {dimensions = array<i32: 0>} : vector<256x4xi32>
    %c16_i32 = arith.constant 16 : i32
    %c0_i32 = arith.constant 0 : i32
    %8 = arith.cmpi eq, %c16_i32, %c0_i32 : i32
    %c1_i32 = arith.constant 1 : i32
    %9 = arith.select %8, %c1_i32, %c16_i32 : i32
    %10 = vector.broadcast %9 : i32 to vector<256x4xi32>
    %11 = arith.remsi %7, %10 : vector<256x4xi32>
    %c0_i32_7 = arith.constant 0 : i32
    %12 = vector.broadcast %c0_i32_7 : i32 to vector<256x4xi32>
    %13 = arith.cmpi ne, %11, %12 : vector<256x4xi32>
    %c0_i32_8 = arith.constant 0 : i32
    %14 = vector.broadcast %c0_i32_8 : i32 to vector<256x4xi32>
    %15 = arith.cmpi slt, %11, %14 : vector<256x4xi32>
    %c0_i32_9 = arith.constant 0 : i32
    %16 = arith.cmpi slt, %9, %c0_i32_9 : i32
    %17 = vector.broadcast %16 : i1 to vector<256x4xi1>
    %18 = vector.broadcast %17 : vector<256x4xi1> to vector<256x4xi1>
    %19 = arith.xori %15, %18 : vector<256x4xi1>
    %20 = arith.andi %19, %13 : vector<256x4xi1>
    %21 = vector.broadcast %9 : i32 to vector<256x4xi32>
    %22 = arith.addi %11, %21 : vector<256x4xi32>
    %23 = arith.select %20, %22, %11 : vector<256x4xi1>, vector<256x4xi32>
    %c0_i32_10 = arith.constant 0 : i32
    %24 = vector.broadcast %c0_i32_10 : i32 to vector<256x4xi32>
    %25 = arith.cmpi ne, %23, %24 : vector<256x4xi32>
    %c15_i32 = arith.constant 15 : i32
    %26 = vector.broadcast %c15_i32 : i32 to vector<256x4xi32>
    %27 = arith.cmpi ne, %23, %26 : vector<256x4xi32>
    %cst_11 = arith.constant 0.000000e+00 : f32
    %28 = vector.broadcast %cst_11 : f32 to vector<256x8xf32>
    %c7 = arith.constant 7 : index
    %c0_12 = arith.constant 0 : index
    %29 = vector.load %arg8[%c7, %c0_12] : memref<304x4xf32, #tpu.memory_space<vmem>>, vector<256x4xf32>
    %cst_13 = arith.constant 0.000000e+00 : f32
    %30 = vector.broadcast %cst_13 : f32 to vector<256x4xf32>
    %31 = arith.select %25, %29, %30 : vector<256x4xi1>, vector<256x4xf32>
    %c0_14 = arith.constant 0 : index
    %c0_15 = arith.constant 0 : index
    %c0_16 = arith.constant 0 : index
    %32 = vector.load %arg2[%c0_14, %c0_15, %c0_16] : memref<9x4x8xf32, #tpu.memory_space<vmem>>, vector<1x4x8xf32>
    %33 = vector.shape_cast %32 : vector<1x4x8xf32> to vector<4x8xf32>
    %cst_17 = arith.constant dense<0.000000e+00> : vector<256x8xf32>
    %34 = tpu.matmul %31, %33, %cst_17 {dimension_numbers = #tpu.dot_dimension_numbers<[1], [0], [0], [1], [0, 0, 1, 1], [], []>} : vector<256x4xf32>, vector<4x8xf32>, vector<256x8xf32> -> vector<256x8xf32>
    %35 = arith.addf %28, %34 : vector<256x8xf32>
    %c8 = arith.constant 8 : index
    %c0_18 = arith.constant 0 : index
    %36 = vector.load %arg8[%c8, %c0_18] : memref<304x4xf32, #tpu.memory_space<vmem>>, vector<256x4xf32>
    %c1 = arith.constant 1 : index
    %c0_19 = arith.constant 0 : index
    %c0_20 = arith.constant 0 : index
    %37 = vector.load %arg2[%c1, %c0_19, %c0_20] : memref<9x4x8xf32, #tpu.memory_space<vmem>>, vector<1x4x8xf32>
    %38 = vector.shape_cast %37 : vector<1x4x8xf32> to vector<4x8xf32>
    %cst_21 = arith.constant dense<0.000000e+00> : vector<256x8xf32>
    %39 = tpu.matmul %36, %38, %cst_21 {dimension_numbers = #tpu.dot_dimension_numbers<[1], [0], [0], [1], [0, 0, 1, 1], [], []>} : vector<256x4xf32>, vector<4x8xf32>, vector<256x8xf32> -> vector<256x8xf32>
    %40 = arith.addf %35, %39 : vector<256x8xf32>
    %c9 = arith.constant 9 : index
    %c0_22 = arith.constant 0 : index
    %41 = vector.load %arg8[%c9, %c0_22] : memref<304x4xf32, #tpu.memory_space<vmem>>, vector<256x4xf32>
    %cst_23 = arith.constant 0.000000e+00 : f32
    %42 = vector.broadcast %cst_23 : f32 to vector<256x4xf32>
    %43 = arith.select %27, %41, %42 : vector<256x4xi1>, vector<256x4xf32>
    %c2 = arith.constant 2 : index
    %c0_24 = arith.constant 0 : index
    %c0_25 = arith.constant 0 : index
    %44 = vector.load %arg2[%c2, %c0_24, %c0_25] : memref<9x4x8xf32, #tpu.memory_space<vmem>>, vector<1x4x8xf32>
    %45 = vector.shape_cast %44 : vector<1x4x8xf32> to vector<4x8xf32>
    %cst_26 = arith.constant dense<0.000000e+00> : vector<256x8xf32>
    %46 = tpu.matmul %43, %45, %cst_26 {dimension_numbers = #tpu.dot_dimension_numbers<[1], [0], [0], [1], [0, 0, 1, 1], [], []>} : vector<256x4xf32>, vector<4x8xf32>, vector<256x8xf32> -> vector<256x8xf32>
    %47 = arith.addf %40, %46 : vector<256x8xf32>
    %c23 = arith.constant 23 : index
    %c0_27 = arith.constant 0 : index
    %48 = vector.load %arg8[%c23, %c0_27] : memref<304x4xf32, #tpu.memory_space<vmem>>, vector<256x4xf32>
    %cst_28 = arith.constant 0.000000e+00 : f32
    %49 = vector.broadcast %cst_28 : f32 to vector<256x4xf32>
    %50 = arith.select %25, %48, %49 : vector<256x4xi1>, vector<256x4xf32>
    %c3 = arith.constant 3 : index
    %c0_29 = arith.constant 0 : index
    %c0_30 = arith.constant 0 : index
    %51 = vector.load %arg2[%c3, %c0_29, %c0_30] : memref<9x4x8xf32, #tpu.memory_space<vmem>>, vector<1x4x8xf32>
    %52 = vector.shape_cast %51 : vector<1x4x8xf32> to vector<4x8xf32>
    %cst_31 = arith.constant dense<0.000000e+00> : vector<256x8xf32>
    %53 = tpu.matmul %50, %52, %cst_31 {dimension_numbers = #tpu.dot_dimension_numbers<[1], [0], [0], [1], [0, 0, 1, 1], [], []>} : vector<256x4xf32>, vector<4x8xf32>, vector<256x8xf32> -> vector<256x8xf32>
    %54 = arith.addf %47, %53 : vector<256x8xf32>
    %c24_32 = arith.constant 24 : index
    %c0_33 = arith.constant 0 : index
    %55 = vector.load %arg8[%c24_32, %c0_33] : memref<304x4xf32, #tpu.memory_space<vmem>>, vector<256x4xf32>
    %c4 = arith.constant 4 : index
    %c0_34 = arith.constant 0 : index
    %c0_35 = arith.constant 0 : index
    %56 = vector.load %arg2[%c4, %c0_34, %c0_35] : memref<9x4x8xf32, #tpu.memory_space<vmem>>, vector<1x4x8xf32>
    %57 = vector.shape_cast %56 : vector<1x4x8xf32> to vector<4x8xf32>
    %cst_36 = arith.constant dense<0.000000e+00> : vector<256x8xf32>
    %58 = tpu.matmul %55, %57, %cst_36 {dimension_numbers = #tpu.dot_dimension_numbers<[1], [0], [0], [1], [0, 0, 1, 1], [], []>} : vector<256x4xf32>, vector<4x8xf32>, vector<256x8xf32> -> vector<256x8xf32>
    %59 = arith.addf %54, %58 : vector<256x8xf32>
    %c25 = arith.constant 25 : index
    %c0_37 = arith.constant 0 : index
    %60 = vector.load %arg8[%c25, %c0_37] : memref<304x4xf32, #tpu.memory_space<vmem>>, vector<256x4xf32>
    %cst_38 = arith.constant 0.000000e+00 : f32
    %61 = vector.broadcast %cst_38 : f32 to vector<256x4xf32>
    %62 = arith.select %27, %60, %61 : vector<256x4xi1>, vector<256x4xf32>
    %c5 = arith.constant 5 : index
    %c0_39 = arith.constant 0 : index
    %c0_40 = arith.constant 0 : index
    %63 = vector.load %arg2[%c5, %c0_39, %c0_40] : memref<9x4x8xf32, #tpu.memory_space<vmem>>, vector<1x4x8xf32>
    %64 = vector.shape_cast %63 : vector<1x4x8xf32> to vector<4x8xf32>
    %cst_41 = arith.constant dense<0.000000e+00> : vector<256x8xf32>
    %65 = tpu.matmul %62, %64, %cst_41 {dimension_numbers = #tpu.dot_dimension_numbers<[1], [0], [0], [1], [0, 0, 1, 1], [], []>} : vector<256x4xf32>, vector<4x8xf32>, vector<256x8xf32> -> vector<256x8xf32>
    %66 = arith.addf %59, %65 : vector<256x8xf32>
    %c39 = arith.constant 39 : index
    %c0_42 = arith.constant 0 : index
    %67 = vector.load %arg8[%c39, %c0_42] : memref<304x4xf32, #tpu.memory_space<vmem>>, vector<256x4xf32>
    %cst_43 = arith.constant 0.000000e+00 : f32
    %68 = vector.broadcast %cst_43 : f32 to vector<256x4xf32>
    %69 = arith.select %25, %67, %68 : vector<256x4xi1>, vector<256x4xf32>
    %c6 = arith.constant 6 : index
    %c0_44 = arith.constant 0 : index
    %c0_45 = arith.constant 0 : index
    %70 = vector.load %arg2[%c6, %c0_44, %c0_45] : memref<9x4x8xf32, #tpu.memory_space<vmem>>, vector<1x4x8xf32>
    %71 = vector.shape_cast %70 : vector<1x4x8xf32> to vector<4x8xf32>
    %cst_46 = arith.constant dense<0.000000e+00> : vector<256x8xf32>
    %72 = tpu.matmul %69, %71, %cst_46 {dimension_numbers = #tpu.dot_dimension_numbers<[1], [0], [0], [1], [0, 0, 1, 1], [], []>} : vector<256x4xf32>, vector<4x8xf32>, vector<256x8xf32> -> vector<256x8xf32>
    %73 = arith.addf %66, %72 : vector<256x8xf32>
    %c40 = arith.constant 40 : index
    %c0_47 = arith.constant 0 : index
    %74 = vector.load %arg8[%c40, %c0_47] : memref<304x4xf32, #tpu.memory_space<vmem>>, vector<256x4xf32>
    %c7_48 = arith.constant 7 : index
    %c0_49 = arith.constant 0 : index
    %c0_50 = arith.constant 0 : index
    %75 = vector.load %arg2[%c7_48, %c0_49, %c0_50] : memref<9x4x8xf32, #tpu.memory_space<vmem>>, vector<1x4x8xf32>
    %76 = vector.shape_cast %75 : vector<1x4x8xf32> to vector<4x8xf32>
    %cst_51 = arith.constant dense<0.000000e+00> : vector<256x8xf32>
    %77 = tpu.matmul %74, %76, %cst_51 {dimension_numbers = #tpu.dot_dimension_numbers<[1], [0], [0], [1], [0, 0, 1, 1], [], []>} : vector<256x4xf32>, vector<4x8xf32>, vector<256x8xf32> -> vector<256x8xf32>
    %78 = arith.addf %73, %77 : vector<256x8xf32>
    %c41 = arith.constant 41 : index
    %c0_52 = arith.constant 0 : index
    %79 = vector.load %arg8[%c41, %c0_52] : memref<304x4xf32, #tpu.memory_space<vmem>>, vector<256x4xf32>
    %cst_53 = arith.constant 0.000000e+00 : f32
    %80 = vector.broadcast %cst_53 : f32 to vector<256x4xf32>
    %81 = arith.select %27, %79, %80 : vector<256x4xi1>, vector<256x4xf32>
    %c8_54 = arith.constant 8 : index
    %c0_55 = arith.constant 0 : index
    %c0_56 = arith.constant 0 : index
    %82 = vector.load %arg2[%c8_54, %c0_55, %c0_56] : memref<9x4x8xf32, #tpu.memory_space<vmem>>, vector<1x4x8xf32>
    %83 = vector.shape_cast %82 : vector<1x4x8xf32> to vector<4x8xf32>
    %cst_57 = arith.constant dense<0.000000e+00> : vector<256x8xf32>
    %84 = tpu.matmul %81, %83, %cst_57 {dimension_numbers = #tpu.dot_dimension_numbers<[1], [0], [0], [1], [0, 0, 1, 1], [], []>} : vector<256x4xf32>, vector<4x8xf32>, vector<256x8xf32> -> vector<256x8xf32>
    %85 = arith.addf %78, %84 : vector<256x8xf32>
    %c0_58 = arith.constant 0 : index
    %c0_59 = arith.constant 0 : index
    %86 = vector.load %arg3[%c0_58, %c0_59] : memref<1x8xf32, #tpu.memory_space<vmem>>, vector<1x8xf32>
    %87 = vector.broadcast %86 : vector<1x8xf32> to vector<256x8xf32>
    %88 = arith.addf %85, %87 : vector<256x8xf32>
    %89 = arith.negf %88 : vector<256x8xf32>
    %90 = math.exp %89 : vector<256x8xf32>
    %cst_60 = arith.constant 1.000000e+00 : f32
    %91 = vector.broadcast %cst_60 : f32 to vector<256x8xf32>
    %92 = arith.addf %91, %90 : vector<256x8xf32>
    %93 = arith.divf %91, %92 : vector<256x8xf32>
    %94 = arith.mulf %88, %93 : vector<256x8xf32>
    %c0_61 = arith.constant 0 : index
    %c0_62 = arith.constant 0 : index
    %95 = vector.load %arg4[%c0_61, %c0_62] : memref<8x6xf32, #tpu.memory_space<vmem>>, vector<8x6xf32>
    %cst_63 = arith.constant dense<0.000000e+00> : vector<256x6xf32>
    %96 = tpu.matmul %94, %95, %cst_63 {dimension_numbers = #tpu.dot_dimension_numbers<[1], [0], [0], [1], [0, 0, 1, 1], [], []>} : vector<256x8xf32>, vector<8x6xf32>, vector<256x6xf32> -> vector<256x6xf32>
    %c0_64 = arith.constant 0 : index
    %c0_65 = arith.constant 0 : index
    %97 = vector.load %arg5[%c0_64, %c0_65] : memref<4x6xf32, #tpu.memory_space<vmem>>, vector<4x6xf32>
    %cst_66 = arith.constant dense<0.000000e+00> : vector<256x6xf32>
    %98 = tpu.matmul %1, %97, %cst_66 {dimension_numbers = #tpu.dot_dimension_numbers<[1], [0], [0], [1], [0, 0, 1, 1], [], []>} : vector<256x4xf32>, vector<4x6xf32>, vector<256x6xf32> -> vector<256x6xf32>
    %99 = arith.addf %96, %98 : vector<256x6xf32>
    %c0_67 = arith.constant 0 : index
    %c0_68 = arith.constant 0 : index
    %100 = vector.load %arg6[%c0_67, %c0_68] : memref<1x6xf32, #tpu.memory_space<vmem>>, vector<1x6xf32>
    %101 = vector.broadcast %100 : vector<1x6xf32> to vector<256x6xf32>
    %102 = arith.addf %99, %101 : vector<256x6xf32>
    %103 = tpu.iota {dimensions = array<i32: 1>} : vector<256x6xi32>
    %c4_i32 = arith.constant 4 : i32
    %104 = vector.broadcast %c4_i32 : i32 to vector<256x6xi32>
    %105 = arith.cmpi slt, %103, %104 : vector<256x6xi32>
    %106 = arith.negf %102 : vector<256x6xf32>
    %107 = math.exp %106 : vector<256x6xf32>
    %cst_69 = arith.constant 1.000000e+00 : f32
    %108 = vector.broadcast %cst_69 : f32 to vector<256x6xf32>
    %109 = arith.addf %108, %107 : vector<256x6xf32>
    %110 = arith.divf %108, %109 : vector<256x6xf32>
    %111 = math.tanh %102 : vector<256x6xf32>
    %112 = arith.select %105, %110, %111 : vector<256x6xi1>, vector<256x6xf32>
    %c0_70 = arith.constant 0 : index
    %c0_71 = arith.constant 0 : index
    %c0_72 = arith.constant 0 : index
    %113 = vector.load %arg7[%c0_70, %c0_71, %c0_72] : memref<1x256x6xf32, #tpu.memory_space<vmem>>, vector<1x256x6xf32>
    %114 = vector.shape_cast %113 : vector<1x256x6xf32> to vector<256x6xf32>
    %115 = vector.shape_cast %112 : vector<256x6xf32> to vector<1x256x6xf32>
    tpu.vector_store %arg7[%c0_70, %c0_71, %c0_72], %115 {strides = array<i32>} : memref<1x256x6xf32, #tpu.memory_space<vmem>>, vector<1x256x6xf32>,
    return
  }
  func.func @transform_0(%arg0: i32) -> (i32, i32, i32) {
    %c0_i32 = arith.constant 0 : i32
    %c0_i32_0 = arith.constant 0 : i32
    %c0_i32_1 = arith.constant 0 : i32
    return %arg0, %c0_i32, %c0_i32_0 : i32, i32, i32
  }
  func.func @transform_1(%arg0: i32) -> (i32, i32, i32) {
    %c0_i32 = arith.constant 0 : i32
    %c0_i32_0 = arith.constant 0 : i32
    %c0_i32_1 = arith.constant 0 : i32
    %c0_i32_2 = arith.constant 0 : i32
    return %c0_i32, %c0_i32_0, %c0_i32_1 : i32, i32, i32
  }
  func.func @transform_2(%arg0: i32) -> (i32, i32) {
    %c0_i32 = arith.constant 0 : i32
    %c0_i32_0 = arith.constant 0 : i32
    %c0_i32_1 = arith.constant 0 : i32
    return %c0_i32, %c0_i32_0 : i32, i32
  }
  func.func @transform_3(%arg0: i32) -> (i32, i32) {
    %c0_i32 = arith.constant 0 : i32
    %c0_i32_0 = arith.constant 0 : i32
    %c0_i32_1 = arith.constant 0 : i32
    return %c0_i32, %c0_i32_0 : i32, i32
  }
  func.func @transform_4(%arg0: i32) -> (i32, i32) {
    %c0_i32 = arith.constant 0 : i32
    %c0_i32_0 = arith.constant 0 : i32
    %c0_i32_1 = arith.constant 0 : i32
    return %c0_i32, %c0_i32_0 : i32, i32
  }
  func.func @transform_5(%arg0: i32) -> (i32, i32) {
    %c0_i32 = arith.constant 0 : i32
    %c0_i32_0 = arith.constant 0 : i32
    %c0_i32_1 = arith.constant 0 : i32
    return %c0_i32, %c0_i32_0 : i32, i32
  }
  func.func @transform_6(%arg0: i32) -> (i32, i32, i32) {
    %c0_i32 = arith.constant 0 : i32
    %c0_i32_0 = arith.constant 0 : i32
    %c0_i32_1 = arith.constant 0 : i32
    return %arg0, %c0_i32, %c0_i32_0 : i32, i32, i32
  }
}

</mosaic_0001>

<llo_original>
// kernel: tpu_custom_call.1
$region0: #{tpu_custom_call.1}
  #allocation0 [shape = 'u32[]', space=smem, size = 0x4, offset = 0x4, fixed_abs, tag = 'smem constant byte address 0x4 - core index']
  #allocation1 [shape = 'u32[144,128]{1,0:T(1,128)}', space=vmem, size = 0x12000, scoped, tag = 'internal scratch']
  #allocation2 [shape = 'f32[304,4]{1,0:T(8,128)}', space=vmem, size = 0x26000, scoped, tag = 'scratch operand']
  %s0 = inlined_call_operand.vmem [shape: f32[2,256,4], index: 0, kind: input, shape index: {}]
  %s1 = inlined_call_operand.vmem [shape: f32[9,4,8], index: 1, kind: input, shape index: {}]
  %s2 = inlined_call_operand.vmem [shape: f32[1,8], index: 2, kind: input, shape index: {}]
  %s3 = inlined_call_operand.vmem [shape: f32[8,6], index: 3, kind: input, shape index: {}]
  %s4 = inlined_call_operand.vmem [shape: f32[4,6], index: 4, kind: input, shape index: {}]
  %s5 = inlined_call_operand.vmem [shape: f32[1,6], index: 5, kind: input, shape index: {}]
  %s6 = inlined_call_operand.vmem [shape: f32[2,256,6], index: 6, kind: output, shape index: {}]
  %s7 = sld [smem:[#allocation0]]
  $region57: #{tpu_custom_call.1} parent=0
    _
  %s9 = ssub.s32 1, %s7
  %s10 = scalar_select 0, %s9, %s7
  loop: start=0, step=1, limit=4
  $region2: #{tpu_custom_call.1} parent=0 // loop_pre_header
    _
  $region3: #{tpu_custom_call.1} parent=0 // loop_header
    %s12 = sphi 0, %s16
    %p13 = scmp.ge.s32.totalorder %s12, 4
    %s22 = sphi 0, %s24
    %s25 = sphi 0, %s22
    %s26 = sphi 0, %s25
    %s42 = sphi 0, %s26
    %s46 = sphi 0, %s46
    %s48 = sphi 0, %s46
    %s49 = sphi 0, %s48
    %s63 = sphi 0, %s49
    %s67 = sphi 0, %s67
    %s69 = sphi 0, %s67
    %s70 = sphi 0, %s69
    %s84 = sphi 0, %s70
    %s88 = sphi 0, %s88
    %s90 = sphi 0, %s88
    %s91 = sphi 0, %s90
    %s105 = sphi 0, %s91
    %s109 = sphi 0, %s109
    %s111 = sphi 0, %s109
    %s112 = sphi 0, %s111
    %s126 = sphi 0, %s112
    %s130 = sphi 0, %s130
    %s132 = sphi 0, %s130
    %s133 = sphi 0, %s132
    %s147 = sphi 0, %s133
    %s153 = sphi 0, %s155
    %s156 = sphi 0, %s153
    %s157 = sphi 0, %s156
    %s173 = sphi 0, %s157
  $region4: #{tpu_custom_call.1} parent=0 // loop_header_branch
    %15 = sbr.rel (%p13) target = $region8
  $region5: #{tpu_custom_call.1} parent=0 // loop_body
    %s17 = ssub.s32 %s12, 1
    %s18 = ssub.s32 %s12, 2
    %s19 = sadd.s32 %s12, 1
    %s20 = ssub.s32 %s12, %s19
    %p21 = scmp.eq.s32.totalorder %s20, 0
    %s23 = sadd.s32 %s22, 1
    %s24 = scalar_select %p21, %s22, %s23
    %p27 = pneg %p21
    %p28 = scmp.eq.s32.totalorder %s12, 1
    %p29 = por %p27, %p28
    %p30 = scmp.ne.s32.totalorder %s22, %s25
    %p31 = scmp.eq.s32.totalorder %s12, 0
    %p32 = por %p30, %p31
    %p33 = scmp.ne.s32.totalorder %s22, %s25
    %p34 = scmp.eq.s32.totalorder %s17, 1
    %p35 = por %p33, %p34
    %p36 = scmp.ne.s32.totalorder %s25, %s26
    %p37 = scmp.eq.s32.totalorder %s17, 0
    %p38 = por %p36, %p37
    %p39 = scmp.ne.s32.totalorder %s25, %s26
    %p40 = scmp.eq.s32.totalorder %s18, 1
    %p41 = por %p39, %p40
    %p43 = scmp.ne.s32.totalorder %s26, %s42
    %p44 = scmp.eq.s32.totalorder %s18, 0
    %p45 = por %p43, %p44
    %s47 = sadd.s32 %s46, 1
    %p50 = scmp.eq.s32.totalorder %s12, 1
    %p51 = scmp.ne.s32.totalorder %s46, %s48
    %p52 = scmp.eq.s32.totalorder %s12, 0
    %p53 = por %p51, %p52
    %p54 = scmp.ne.s32.totalorder %s46, %s48
    %p55 = scmp.eq.s32.totalorder %s17, 1
    %p56 = por %p54, %p55
    %p57 = scmp.ne.s32.totalorder %s48, %s49
    %p58 = scmp.eq.s32.totalorder %s17, 0
    %p59 = por %p57, %p58
    %p60 = scmp.ne.s32.totalorder %s48, %s49
    %p61 = scmp.eq.s32.totalorder %s18, 1
    %p62 = por %p60, %p61
    %p64 = scmp.ne.s32.totalorder %s49, %s63
    %p65 = scmp.eq.s32.totalorder %s18, 0
    %p66 = por %p64, %p65
    %s68 = sadd.s32 %s67, 1
    %p71 = scmp.eq.s32.totalorder %s12, 1
    %p72 = scmp.ne.s32.totalorder %s67, %s69
    %p73 = scmp.eq.s32.totalorder %s12, 0
    %p74 = por %p72, %p73
    %p75 = scmp.ne.s32.totalorder %s67, %s69
    %p76 = scmp.eq.s32.totalorder %s17, 1
    %p77 = por %p75, %p76
    %p78 = scmp.ne.s32.totalorder %s69, %s70
    %p79 = scmp.eq.s32.totalorder %s17, 0
    %p80 = por %p78, %p79
    %p81 = scmp.ne.s32.totalorder %s69, %s70
    %p82 = scmp.eq.s32.totalorder %s18, 1
    %p83 = por %p81, %p82
    %p85 = scmp.ne.s32.totalorder %s70, %s84
    %p86 = scmp.eq.s32.totalorder %s18, 0
    %p87 = por %p85, %p86
    %s89 = sadd.s32 %s88, 1
    %p92 = scmp.eq.s32.totalorder %s12, 1
    %p93 = scmp.ne.s32.totalorder %s88, %s90
    %p94 = scmp.eq.s32.totalorder %s12, 0
    %p95 = por %p93, %p94
    %p96 = scmp.ne.s32.totalorder %s88, %s90
    %p97 = scmp.eq.s32.totalorder %s17, 1
    %p98 = por %p96, %p97
    %p99 = scmp.ne.s32.totalorder %s90, %s91
    %p100 = scmp.eq.s32.totalorder %s17, 0
    %p101 = por %p99, %p100
    %p102 = scmp.ne.s32.totalorder %s90, %s91
    %p103 = scmp.eq.s32.totalorder %s18, 1
    %p104 = por %p102, %p103
    %p106 = scmp.ne.s32.totalorder %s91, %s105
    %p107 = scmp.eq.s32.totalorder %s18, 0
    %p108 = por %p106, %p107
    %s110 = sadd.s32 %s109, 1
    %p113 = scmp.eq.s32.totalorder %s12, 1
    %p114 = scmp.ne.s32.totalorder %s109, %s111
    %p115 = scmp.eq.s32.totalorder %s12, 0
    %p116 = por %p114, %p115
    %p117 = scmp.ne.s32.totalorder %s109, %s111
    %p118 = scmp.eq.s32.totalorder %s17, 1
    %p119 = por %p117, %p118
    %p120 = scmp.ne.s32.totalorder %s111, %s112
    %p121 = scmp.eq.s32.totalorder %s17, 0
    %p122 = por %p120, %p121
    %p123 = scmp.ne.s32.totalorder %s111, %s112
    %p124 = scmp.eq.s32.totalorder %s18, 1
    %p125 = por %p123, %p124
    %p127 = scmp.ne.s32.totalorder %s112, %s126
    %p128 = scmp.eq.s32.totalorder %s18, 0
    %p129 = por %p127, %p128
    %s131 = sadd.s32 %s130, 1
    %p134 = scmp.eq.s32.totalorder %s12, 1
    %p135 = scmp.ne.s32.totalorder %s130, %s132
    %p136 = scmp.eq.s32.totalorder %s12, 0
    %p137 = por %p135, %p136
    %p138 = scmp.ne.s32.totalorder %s130, %s132
    %p139 = scmp.eq.s32.totalorder %s17, 1
    %p140 = por %p138, %p139
    %p141 = scmp.ne.s32.totalorder %s132, %s133
    %p142 = scmp.eq.s32.totalorder %s17, 0
    %p143 = por %p141, %p142
    %p144 = scmp.ne.s32.totalorder %s132, %s133
    %p145 = scmp.eq.s32.totalorder %s18, 1
    %p146 = por %p144, %p145
    %p148 = scmp.ne.s32.totalorder %s133, %s147
    %p149 = scmp.eq.s32.totalorder %s18, 0
    %p150 = por %p148, %p149
    %s151 = ssub.s32 %s12, %s19
    %p152 = scmp.eq.s32.totalorder %s151, 0
    %s154 = sadd.s32 %s153, 1
    %s155 = scalar_select %p152, %s153, %s154
    %p158 = pneg %p152
    %p159 = scmp.eq.s32.totalorder %s12, 1
    %p160 = por %p158, %p159
    %p161 = scmp.ne.s32.totalorder %s153, %s156
    %p162 = scmp.eq.s32.totalorder %s12, 0
    %p163 = por %p161, %p162
    %p164 = scmp.ne.s32.totalorder %s153, %s156
    %p165 = scmp.eq.s32.totalorder %s17, 1
    %p166 = por %p164, %p165
    %p167 = scmp.ne.s32.totalorder %s156, %s157
    %p168 = scmp.eq.s32.totalorder %s17, 0
    %p169 = por %p167, %p168
    %p170 = scmp.ne.s32.totalorder %s156, %s157
    %p171 = scmp.eq.s32.totalorder %s18, 1
    %p172 = por %p170, %p171
    %p174 = scmp.ne.s32.totalorder %s157, %s173
    %p175 = scmp.eq.s32.totalorder %s18, 0
    %p176 = por %p174, %p175
    %p177 = scmp.le.s32.totalorder 1, %s12
    %p178 = scmp.lt.s32.totalorder %s12, 3
    %p179 = pnand %p177, %p178
    %p180 = pneg %p179
    // Predicated region
    $region9: #{tpu_custom_call.1} parent=5 // pred_check
      _
    $region10: #{tpu_custom_call.1} parent=5 // pred_check_branch
      %182 = sbr.rel (%p179) target = $region12
    $region11: #{tpu_custom_call.1} parent=5 // pred_region
      %s183 = ssub.s32 %s12, 1
      // Predicated region
      $region13: #{tpu_custom_call.1} parent=11 // pred_check
        %p184 = pneg %p59
      $region14: #{tpu_custom_call.1} parent=11 // pred_check_branch
        %186 = sbr.rel (%p184) target = $region16
      $region15: #{tpu_custom_call.1} parent=11 // pred_region
        _
      $region16: #{tpu_custom_call.1} parent=11 // pred_fallthru
        _
      // Predicated region
      $region17: #{tpu_custom_call.1} parent=11 // pred_check
        %p187 = pneg %p80
      $region18: #{tpu_custom_call.1} parent=11 // pred_check_branch
        %189 = sbr.rel (%p187) target = $region20
      $region19: #{tpu_custom_call.1} parent=11 // pred_region
        _
      $region20: #{tpu_custom_call.1} parent=11 // pred_fallthru
        _
      // Predicated region
      $region21: #{tpu_custom_call.1} parent=11 // pred_check
        %p190 = pneg %p101
      $region22: #{tpu_custom_call.1} parent=11 // pred_check_branch
        %192 = sbr.rel (%p190) target = $region24
      $region23: #{tpu_custom_call.1} parent=11 // pred_region
        _
      $region24: #{tpu_custom_call.1} parent=11 // pred_fallthru
        _
      // Predicated region
      $region25: #{tpu_custom_call.1} parent=11 // pred_check
        %p193 = pneg %p122
      $region26: #{tpu_custom_call.1} parent=11 // pred_check_branch
        %195 = sbr.rel (%p193) target = $region28
      $region27: #{tpu_custom_call.1} parent=11 // pred_region
        _
      $region28: #{tpu_custom_call.1} parent=11 // pred_fallthru
        _
      // Predicated region
      $region29: #{tpu_custom_call.1} parent=11 // pred_check
        %p196 = pneg %p143
      $region30: #{tpu_custom_call.1} parent=11 // pred_check_branch
        %198 = sbr.rel (%p196) target = $region32
      $region31: #{tpu_custom_call.1} parent=11 // pred_region
        _
      $region32: #{tpu_custom_call.1} parent=11 // pred_fallthru
        _
    $region12: #{tpu_custom_call.1} parent=5 // pred_fallthru
      _
    %p199 = scmp.lt.s32.totalorder %s12, 2
    // Predicated region
    $region33: #{tpu_custom_call.1} parent=5 // pred_check
      %p200 = pneg %p199
    $region34: #{tpu_custom_call.1} parent=5 // pred_check_branch
      %202 = sbr.rel (%p200) target = $region36
    $region35: #{tpu_custom_call.1} parent=5 // pred_region
      // Predicated region
      $region37: #{tpu_custom_call.1} parent=35 // pred_check
        %p203 = pneg %p32
      $region38: #{tpu_custom_call.1} parent=35 // pred_check_branch
        %205 = sbr.rel (%p203) target = $region40
      $region39: #{tpu_custom_call.1} parent=35 // pred_region
        %p206 = scmp.lt.s32.totalorder %s12, 1
        %s207 = scalar_select %p206, %s12, 1
        %s208 = smul.addr %s207, 32
        %s209 = smul.addr %s208, 8
        %s210 = scalar_lea.vmem %s0, %s209
      $region40: #{tpu_custom_call.1} parent=35 // pred_fallthru
        _
    $region36: #{tpu_custom_call.1} parent=5 // pred_fallthru
      _
    %p211 = scmp.le.s32.totalorder 1, %s12
    %p212 = scmp.lt.s32.totalorder %s12, 3
    %p213 = pnand %p211, %p212
    %p214 = pneg %p213
    // Predicated region
    $region41: #{tpu_custom_call.1} parent=5 // pred_check
      _
    $region42: #{tpu_custom_call.1} parent=5 // pred_check_branch
      %216 = sbr.rel (%p213) target = $region44
    $region43: #{tpu_custom_call.1} parent=5 // pred_region
      %s217 = ssub.s32 %s12, 1
      %p218 = scmp.lt.s32.totalorder %s17, 1
      %s219 = scalar_select %p218, %s17, 1
      %s220 = smul.addr %s219, 32
      %s221 = smul.addr %s220, 8
      %s222 = scalar_lea.vmem %s0, %s221
      %p223 = pneg %p38
      %p224 = pneg %p35
      %p225 = pneg %p59
      %p226 = pneg %p56
      %p227 = pneg %p80
      %p228 = pneg %p77
      %p229 = pneg %p101
      %p230 = pneg %p98
      %p231 = pneg %p122
      %p232 = pneg %p119
      %p233 = pneg %p143
      %p234 = pneg %p140
      %p235 = pneg %p169
      %p236 = pneg %p166
      %p237 = scmp.lt.s32.totalorder %s17, 1
      %s238 = scalar_select %p237, %s17, 1
      %s239 = smul.addr %s238, 32
      %s240 = smul.addr %s239, 8
      %s241 = scalar_lea.vmem %s6, %s240
      %p242 = scmp.lt.s32.totalorder %s17, 1
      %s243 = scalar_select %p242, %s17, 1
      %s244 = smul.addr %s243, 32
      %s245 = smul.addr %s244, 8
      %s246 = scalar_lea.vmem %s0, %s245
      %p247 = scmp.lt.s32.totalorder %s17, 1
      %s248 = scalar_select %p247, %s17, 1
      %s249 = smul.addr %s248, 32
      %s250 = smul.addr %s249, 8
      %s251 = scalar_lea.vmem %s6, %s250
      %v252 = vld [vmem:[%s246] sm:$0xff]
      %v253 = vld [vmem:[%s246 + $0x8] sm:$0xff]
      %v254 = vld [vmem:[%s246 + $0x10] sm:$0xff]
      %v255 = vld [vmem:[%s246 + $0x18] sm:$0xff]
      %v256 = vld [vmem:[%s246 + $0x20] sm:$0xff]
      %v257 = vld [vmem:[%s246 + $0x28] sm:$0xff]
      %v258 = vld [vmem:[%s246 + $0x30] sm:$0xff]
      %v259 = vld [vmem:[%s246 + $0x38] sm:$0xff]
      %v260 = vld [vmem:[%s246 + $0x40] sm:$0xff]
      %v261 = vld [vmem:[%s246 + $0x48] sm:$0xff]
      %v262 = vld [vmem:[%s246 + $0x50] sm:$0xff]
      %v263 = vld [vmem:[%s246 + $0x58] sm:$0xff]
      %v264 = vld [vmem:[%s246 + $0x60] sm:$0xff]
      %v265 = vld [vmem:[%s246 + $0x68] sm:$0xff]
      %v266 = vld [vmem:[%s246 + $0x70] sm:$0xff]
      %v267 = vld [vmem:[%s246 + $0x78] sm:$0xff]
      %v268 = vld [vmem:[%s246 + $0x80] sm:$0xff]
      %v269 = vld [vmem:[%s246 + $0x88] sm:$0xff]
      %v270 = vld [vmem:[%s246 + $0x90] sm:$0xff]
      %v271 = vld [vmem:[%s246 + $0x98] sm:$0xff]
      %v272 = vld [vmem:[%s246 + $0xa0] sm:$0xff]
      %v273 = vld [vmem:[%s246 + $0xa8] sm:$0xff]
      %v274 = vld [vmem:[%s246 + $0xb0] sm:$0xff]
      %v275 = vld [vmem:[%s246 + $0xb8] sm:$0xff]
      %v276 = vld [vmem:[%s246 + $0xc0] sm:$0xff]
      %v277 = vld [vmem:[%s246 + $0xc8] sm:$0xff]
      %v278 = vld [vmem:[%s246 + $0xd0] sm:$0xff]
      %v279 = vld [vmem:[%s246 + $0xd8] sm:$0xff]
      %v280 = vld [vmem:[%s246 + $0xe0] sm:$0xff]
      %v281 = vld [vmem:[%s246 + $0xe8] sm:$0xff]
      %v282 = vld [vmem:[%s246 + $0xf0] sm:$0xff]
      %v283 = vld [vmem:[%s246 + $0xf8] sm:$0xff]
      %vm284 = vcmask 31744
      %285 = vst.msk [vmem:[#allocation2] sm:$0xff] %vm284, 0.0
      %286 = vst.msk [vmem:[#allocation2 + $0x8] sm:$0xff] %vm284, 0.0
      %287 = vst.msk [vmem:[#allocation2 + $0x10] sm:$0xff] %vm284, 0.0
      %288 = vst.msk [vmem:[#allocation2 + $0x118] sm:$0xff] %vm284, 0.0
      %289 = vst.msk [vmem:[#allocation2 + $0x120] sm:$0xff] %vm284, 0.0
      %290 = vst.msk [vmem:[#allocation2 + $0x128] sm:$0xff] %vm284, 0.0
      %291 = vst.msk [vmem:[#allocation2 + $0x18] sm:$0xff] %vm284, %v252
      %292 = vst.msk [vmem:[#allocation2 + $0x20] sm:$0xff] %vm284, %v253
      %293 = vst.msk [vmem:[#allocation2 + $0x28] sm:$0xff] %vm284, %v254
      %294 = vst.msk [vmem:[#allocation2 + $0x30] sm:$0xff] %vm284, %v255
      %295 = vst.msk [vmem:[#allocation2 + $0x38] sm:$0xff] %vm284, %v256
      %296 = vst.msk [vmem:[#allocation2 + $0x40] sm:$0xff] %vm284, %v257
      %297 = vst.msk [vmem:[#allocation2 + $0x48] sm:$0xff] %vm284, %v258
      %298 = vst.msk [vmem:[#allocation2 + $0x50] sm:$0xff] %vm284, %v259
      %299 = vst.msk [vmem:[#allocation2 + $0x58] sm:$0xff] %vm284, %v260
      %300 = vst.msk [vmem:[#allocation2 + $0x60] sm:$0xff] %vm284, %v261
      %301 = vst.msk [vmem:[#allocation2 + $0x68] sm:$0xff] %vm284, %v262
      %302 = vst.msk [vmem:[#allocation2 + $0x70] sm:$0xff] %vm284, %v263
      %303 = vst.msk [vmem:[#allocation2 + $0x78] sm:$0xff] %vm284, %v264
      %304 = vst.msk [vmem:[#allocation2 + $0x80] sm:$0xff] %vm284, %v265
      %305 = vst.msk [vmem:[#allocation2 + $0x88] sm:$0xff] %vm284, %v266
      %306 = vst.msk [vmem:[#allocation2 + $0x90] sm:$0xff] %vm284, %v267
      %307 = vst.msk [vmem:[#allocation2 + $0x98] sm:$0xff] %vm284, %v268
      %308 = vst.msk [vmem:[#allocation2 + $0xa0] sm:$0xff] %vm284, %v269
      %309 = vst.msk [vmem:[#allocation2 + $0xa8] sm:$0xff] %vm284, %v270
      %310 = vst.msk [vmem:[#allocation2 + $0xb0] sm:$0xff] %vm284, %v271
      %311 = vst.msk [vmem:[#allocation2 + $0xb8] sm:$0xff] %vm284, %v272
      %312 = vst.msk [vmem:[#allocation2 + $0xc0] sm:$0xff] %vm284, %v273
      %313 = vst.msk [vmem:[#allocation2 + $0xc8] sm:$0xff] %vm284, %v274
      %314 = vst.msk [vmem:[#allocation2 + $0xd0] sm:$0xff] %vm284, %v275
      %315 = vst.msk [vmem:[#allocation2 + $0xd8] sm:$0xff] %vm284, %v276
      %316 = vst.msk [vmem:[#allocation2 + $0xe0] sm:$0xff] %vm284, %v277
      %317 = vst.msk [vmem:[#allocation2 + $0xe8] sm:$0xff] %vm284, %v278
      %318 = vst.msk [vmem:[#allocation2 + $0xf0] sm:$0xff] %vm284, %v279
      %319 = vst.msk [vmem:[#allocation2 + $0xf8] sm:$0xff] %vm284, %v280
      %320 = vst.msk [vmem:[#allocation2 + $0x100] sm:$0xff] %vm284, %v281
      %321 = vst.msk [vmem:[#allocation2 + $0x108] sm:$0xff] %vm284, %v282
      %322 = vst.msk [vmem:[#allocation2 + $0x110] sm:$0xff] %vm284, %v283
      %v323 = vlaneseq
      %v324 = vshrl.u32 %v323, 7
      %v325 = vadd.s32 %v324, 8
      %v326 = vadd.s32 %v324, 16
      %v327 = vadd.s32 %v324, 24
      %v328 = vadd.s32 %v324, 32
      %v329 = vadd.s32 %v324, 40
      %v330 = vadd.s32 %v324, 48
      %v331 = vadd.s32 %v324, 56
      %v332 = vadd.s32 %v324, 64
      %v333 = vadd.s32 %v324, 72
      %v334 = vadd.s32 %v324, 80
      %v335 = vadd.s32 %v324, 88
      %v336 = vadd.s32 %v324, 96
      %v337 = vadd.s32 %v324, 104
      %v338 = vadd.s32 %v324, 112
      %v339 = vadd.s32 %v324, 120
      %v340 = vadd.s32 %v324, 128
      %v341 = vadd.s32 %v324, 136
      %v342 = vadd.s32 %v324, 144
      %v343 = vadd.s32 %v324, 152
      %v344 = vadd.s32 %v324, 160
      %v345 = vadd.s32 %v324, 168
      %v346 = vadd.s32 %v324, 176
      %v347 = vadd.s32 %v324, 184
      %v348 = vadd.s32 %v324, 192
      %v349 = vadd.s32 %v324, 200
      %v350 = vadd.s32 %v324, 208
      %v351 = vadd.s32 %v324, 216
      %v352 = vadd.s32 %v324, 224
      %v353 = vadd.s32 %v324, 232
      %v354 = vadd.s32 %v324, 240
      %v355 = vadd.s32 %v324, 248
      %vm356 = vcmp.lt.s32.totalorder %v324, 0
      %v357 = vsub.s32 0, %v324
      %v358 = vsel %vm356, %v357, %v324
      %v359 = vshrl.u32 %v358, 4
      %v360 = vand.u32 %v358, 15
      %v361 = vsub.s32 0, %v360
      %v362 = vsel %vm356, %v361, %v360
      %vm363 = vcmp.lt.s32.totalorder %v325, 0
      %v364 = vsub.s32 0, %v325
      %v365 = vsel %vm363, %v364, %v325
      %v366 = vshrl.u32 %v365, 4
      %v367 = vand.u32 %v365, 15
      %v368 = vsub.s32 0, %v367
      %v369 = vsel %vm363, %v368, %v367
      %vm370 = vcmp.lt.s32.totalorder %v326, 0
      %v371 = vsub.s32 0, %v326
      %v372 = vsel %vm370, %v371, %v326
      %v373 = vshrl.u32 %v372, 4
      %v374 = vand.u32 %v372, 15
      %v375 = vsub.s32 0, %v374
      %v376 = vsel %vm370, %v375, %v374
      %vm377 = vcmp.lt.s32.totalorder %v327, 0
      %v378 = vsub.s32 0, %v327
      %v379 = vsel %vm377, %v378, %v327
      %v380 = vshrl.u32 %v379, 4
      %v381 = vand.u32 %v379, 15
      %v382 = vsub.s32 0, %v381
      %v383 = vsel %vm377, %v382, %v381
      %vm384 = vcmp.lt.s32.totalorder %v328, 0
      %v385 = vsub.s32 0, %v328
      %v386 = vsel %vm384, %v385, %v328
      %v387 = vshrl.u32 %v386, 4
      %v388 = vand.u32 %v386, 15
      %v389 = vsub.s32 0, %v388
      %v390 = vsel %vm384, %v389, %v388
      %vm391 = vcmp.lt.s32.totalorder %v329, 0
      %v392 = vsub.s32 0, %v329
      %v393 = vsel %vm391, %v392, %v329
      %v394 = vshrl.u32 %v393, 4
      %v395 = vand.u32 %v393, 15
      %v396 = vsub.s32 0, %v395
      %v397 = vsel %vm391, %v396, %v395
      %vm398 = vcmp.lt.s32.totalorder %v330, 0
      %v399 = vsub.s32 0, %v330
      %v400 = vsel %vm398, %v399, %v330
      %v401 = vshrl.u32 %v400, 4
      %v402 = vand.u32 %v400, 15
      %v403 = vsub.s32 0, %v402
      %v404 = vsel %vm398, %v403, %v402
      %vm405 = vcmp.lt.s32.totalorder %v331, 0
      %v406 = vsub.s32 0, %v331
      %v407 = vsel %vm405, %v406, %v331
      %v408 = vshrl.u32 %v407, 4
      %v409 = vand.u32 %v407, 15
      %v410 = vsub.s32 0, %v409
      %v411 = vsel %vm405, %v410, %v409
      %vm412 = vcmp.lt.s32.totalorder %v332, 0
      %v413 = vsub.s32 0, %v332
      %v414 = vsel %vm412, %v413, %v332
      %v415 = vshrl.u32 %v414, 4
      %v416 = vand.u32 %v414, 15
      %v417 = vsub.s32 0, %v416
      %v418 = vsel %vm412, %v417, %v416
      %vm419 = vcmp.lt.s32.totalorder %v333, 0
      %v420 = vsub.s32 0, %v333
      %v421 = vsel %vm419, %v420, %v333
      %v422 = vshrl.u32 %v421, 4
      %v423 = vand.u32 %v421, 15
      %v424 = vsub.s32 0, %v423
      %v425 = vsel %vm419, %v424, %v423
      %vm426 = vcmp.lt.s32.totalorder %v334, 0
      %v427 = vsub.s32 0, %v334
      %v428 = vsel %vm426, %v427, %v334
      %v429 = vshrl.u32 %v428, 4
      %v430 = vand.u32 %v428, 15
      %v431 = vsub.s32 0, %v430
      %v432 = vsel %vm426, %v431, %v430
      %vm433 = vcmp.lt.s32.totalorder %v335, 0
      %v434 = vsub.s32 0, %v335
      %v435 = vsel %vm433, %v434, %v335
      %v436 = vshrl.u32 %v435, 4
      %v437 = vand.u32 %v435, 15
      %v438 = vsub.s32 0, %v437
      %v439 = vsel %vm433, %v438, %v437
      %vm440 = vcmp.lt.s32.totalorder %v336, 0
      %v441 = vsub.s32 0, %v336
      %v442 = vsel %vm440, %v441, %v336
      %v443 = vshrl.u32 %v442, 4
      %v444 = vand.u32 %v442, 15
      %v445 = vsub.s32 0, %v444
      %v446 = vsel %vm440, %v445, %v444
      %vm447 = vcmp.lt.s32.totalorder %v337, 0
      %v448 = vsub.s32 0, %v337
      %v449 = vsel %vm447, %v448, %v337
      %v450 = vshrl.u32 %v449, 4
      %v451 = vand.u32 %v449, 15
      %v452 = vsub.s32 0, %v451
      %v453 = vsel %vm447, %v452, %v451
      %vm454 = vcmp.lt.s32.totalorder %v338, 0
      %v455 = vsub.s32 0, %v338
      %v456 = vsel %vm454, %v455, %v338
      %v457 = vshrl.u32 %v456, 4
      %v458 = vand.u32 %v456, 15
      %v459 = vsub.s32 0, %v458
      %v460 = vsel %vm454, %v459, %v458
      %vm461 = vcmp.lt.s32.totalorder %v339, 0
      %v462 = vsub.s32 0, %v339
      %v463 = vsel %vm461, %v462, %v339
      %v464 = vshrl.u32 %v463, 4
      %v465 = vand.u32 %v463, 15
      %v466 = vsub.s32 0, %v465
      %v467 = vsel %vm461, %v466, %v465
      %vm468 = vcmp.lt.s32.totalorder %v340, 0
      %v469 = vsub.s32 0, %v340
      %v470 = vsel %vm468, %v469, %v340
      %v471 = vshrl.u32 %v470, 4
      %v472 = vand.u32 %v470, 15
      %v473 = vsub.s32 0, %v472
      %v474 = vsel %vm468, %v473, %v472
      %vm475 = vcmp.lt.s32.totalorder %v341, 0
      %v476 = vsub.s32 0, %v341
      %v477 = vsel %vm475, %v476, %v341
      %v478 = vshrl.u32 %v477, 4
      %v479 = vand.u32 %v477, 15
      %v480 = vsub.s32 0, %v479
      %v481 = vsel %vm475, %v480, %v479
      %vm482 = vcmp.lt.s32.totalorder %v342, 0
      %v483 = vsub.s32 0, %v342
      %v484 = vsel %vm482, %v483, %v342
      %v485 = vshrl.u32 %v484, 4
      %v486 = vand.u32 %v484, 15
      %v487 = vsub.s32 0, %v486
      %v488 = vsel %vm482, %v487, %v486
      %vm489 = vcmp.lt.s32.totalorder %v343, 0
      %v490 = vsub.s32 0, %v343
      %v491 = vsel %vm489, %v490, %v343
      %v492 = vshrl.u32 %v491, 4
      %v493 = vand.u32 %v491, 15
      %v494 = vsub.s32 0, %v493
      %v495 = vsel %vm489, %v494, %v493
      %vm496 = vcmp.lt.s32.totalorder %v344, 0
      %v497 = vsub.s32 0, %v344
      %v498 = vsel %vm496, %v497, %v344
      %v499 = vshrl.u32 %v498, 4
      %v500 = vand.u32 %v498, 15
      %v501 = vsub.s32 0, %v500
      %v502 = vsel %vm496, %v501, %v500
      %vm503 = vcmp.lt.s32.totalorder %v345, 0
      %v504 = vsub.s32 0, %v345
      %v505 = vsel %vm503, %v504, %v345
      %v506 = vshrl.u32 %v505, 4
      %v507 = vand.u32 %v505, 15
      %v508 = vsub.s32 0, %v507
      %v509 = vsel %vm503, %v508, %v507
      %vm510 = vcmp.lt.s32.totalorder %v346, 0
      %v511 = vsub.s32 0, %v346
      %v512 = vsel %vm510, %v511, %v346
      %v513 = vshrl.u32 %v512, 4
      %v514 = vand.u32 %v512, 15
      %v515 = vsub.s32 0, %v514
      %v516 = vsel %vm510, %v515, %v514
      %vm517 = vcmp.lt.s32.totalorder %v347, 0
      %v518 = vsub.s32 0, %v347
      %v519 = vsel %vm517, %v518, %v347
      %v520 = vshrl.u32 %v519, 4
      %v521 = vand.u32 %v519, 15
      %v522 = vsub.s32 0, %v521
      %v523 = vsel %vm517, %v522, %v521
      %vm524 = vcmp.lt.s32.totalorder %v348, 0
      %v525 = vsub.s32 0, %v348
      %v526 = vsel %vm524, %v525, %v348
      %v527 = vshrl.u32 %v526, 4
      %v528 = vand.u32 %v526, 15
      %v529 = vsub.s32 0, %v528
      %v530 = vsel %vm524, %v529, %v528
      %vm531 = vcmp.lt.s32.totalorder %v349, 0
      %v532 = vsub.s32 0, %v349
      %v533 = vsel %vm531, %v532, %v349
      %v534 = vshrl.u32 %v533, 4
      %v535 = vand.u32 %v533, 15
      %v536 = vsub.s32 0, %v535
      %v537 = vsel %vm531, %v536, %v535
      %vm538 = vcmp.lt.s32.totalorder %v350, 0
      %v539 = vsub.s32 0, %v350
      %v540 = vsel %vm538, %v539, %v350
      %v541 = vshrl.u32 %v540, 4
      %v542 = vand.u32 %v540, 15
      %v543 = vsub.s32 0, %v542
      %v544 = vsel %vm538, %v543, %v542
      %vm545 = vcmp.lt.s32.totalorder %v351, 0
      %v546 = vsub.s32 0, %v351
      %v547 = vsel %vm545, %v546, %v351
      %v548 = vshrl.u32 %v547, 4
      %v549 = vand.u32 %v547, 15
      %v550 = vsub.s32 0, %v549
      %v551 = vsel %vm545, %v550, %v549
      %vm552 = vcmp.lt.s32.totalorder %v352, 0
      %v553 = vsub.s32 0, %v352
      %v554 = vsel %vm552, %v553, %v352
      %v555 = vshrl.u32 %v554, 4
      %v556 = vand.u32 %v554, 15
      %v557 = vsub.s32 0, %v556
      %v558 = vsel %vm552, %v557, %v556
      %vm559 = vcmp.lt.s32.totalorder %v353, 0
      %v560 = vsub.s32 0, %v353
      %v561 = vsel %vm559, %v560, %v353
      %v562 = vshrl.u32 %v561, 4
      %v563 = vand.u32 %v561, 15
      %v564 = vsub.s32 0, %v563
      %v565 = vsel %vm559, %v564, %v563
      %vm566 = vcmp.lt.s32.totalorder %v354, 0
      %v567 = vsub.s32 0, %v354
      %v568 = vsel %vm566, %v567, %v354
      %v569 = vshrl.u32 %v568, 4
      %v570 = vand.u32 %v568, 15
      %v571 = vsub.s32 0, %v570
      %v572 = vsel %vm566, %v571, %v570
      %vm573 = vcmp.lt.s32.totalorder %v355, 0
      %v574 = vsub.s32 0, %v355
      %v575 = vsel %vm573, %v574, %v355
      %v576 = vshrl.u32 %v575, 4
      %v577 = vand.u32 %v575, 15
      %v578 = vsub.s32 0, %v577
      %v579 = vsel %vm573, %v578, %v577
      %vm580 = vcmp.ne.s32.totalorder %v362, 0
      %vm581 = vcmp.ne.s32.totalorder %v369, 0
      %vm582 = vcmp.ne.s32.totalorder %v376, 0
      %vm583 = vcmp.ne.s32.totalorder %v383, 0
      %vm584 = vcmp.ne.s32.totalorder %v390, 0
      %vm585 = vcmp.ne.s32.totalorder %v397, 0
      %vm586 = vcmp.ne.s32.totalorder %v404, 0
      %vm587 = vcmp.ne.s32.totalorder %v411, 0
      %vm588 = vcmp.ne.s32.totalorder %v418, 0
      %vm589 = vcmp.ne.s32.totalorder %v425, 0
      %vm590 = vcmp.ne.s32.totalorder %v432, 0
      %vm591 = vcmp.ne.s32.totalorder %v439, 0
      %vm592 = vcmp.ne.s32.totalorder %v446, 0
      %vm593 = vcmp.ne.s32.totalorder %v453, 0
      %vm594 = vcmp.ne.s32.totalorder %v460, 0
      %vm595 = vcmp.ne.s32.totalorder %v467, 0
      %vm596 = vcmp.ne.s32.totalorder %v474, 0
      %vm597 = vcmp.ne.s32.totalorder %v481, 0
      %vm598 = vcmp.ne.s32.totalorder %v488, 0
      %vm599 = vcmp.ne.s32.totalorder %v495, 0
      %vm600 = vcmp.ne.s32.totalorder %v502, 0
      %vm601 = vcmp.ne.s32.totalorder %v509, 0
      %vm602 = vcmp.ne.s32.totalorder %v516, 0
      %vm603 = vcmp.ne.s32.totalorder %v523, 0
      %vm604 = vcmp.ne.s32.totalorder %v530, 0
      %vm605 = vcmp.ne.s32.totalorder %v537, 0
      %vm606 = vcmp.ne.s32.totalorder %v544, 0
      %vm607 = vcmp.ne.s32.totalorder %v551, 0
      %vm608 = vcmp.ne.s32.totalorder %v558, 0
      %vm609 = vcmp.ne.s32.totalorder %v565, 0
      %vm610 = vcmp.ne.s32.totalorder %v572, 0
      %vm611 = vcmp.ne.s32.totalorder %v579, 0
      %vm612 = vcmp.lt.s32.totalorder %v362, 0
      %vm613 = vcmp.lt.s32.totalorder %v369, 0
      %vm614 = vcmp.lt.s32.totalorder %v376, 0
      %vm615 = vcmp.lt.s32.totalorder %v383, 0
      %vm616 = vcmp.lt.s32.totalorder %v390, 0
      %vm617 = vcmp.lt.s32.totalorder %v397, 0
      %vm618 = vcmp.lt.s32.totalorder %v404, 0
      %vm619 = vcmp.lt.s32.totalorder %v411, 0
      %vm620 = vcmp.lt.s32.totalorder %v418, 0
      %vm621 = vcmp.lt.s32.totalorder %v425, 0
      %vm622 = vcmp.lt.s32.totalorder %v432, 0
      %vm623 = vcmp.lt.s32.totalorder %v439, 0
      %vm624 = vcmp.lt.s32.totalorder %v446, 0
      %vm625 = vcmp.lt.s32.totalorder %v453, 0
      %vm626 = vcmp.lt.s32.totalorder %v460, 0
      %vm627 = vcmp.lt.s32.totalorder %v467, 0
      %vm628 = vcmp.lt.s32.totalorder %v474, 0
      %vm629 = vcmp.lt.s32.totalorder %v481, 0
      %vm630 = vcmp.lt.s32.totalorder %v488, 0
      %vm631 = vcmp.lt.s32.totalorder %v495, 0
      %vm632 = vcmp.lt.s32.totalorder %v502, 0
      %vm633 = vcmp.lt.s32.totalorder %v509, 0
      %vm634 = vcmp.lt.s32.totalorder %v516, 0
      %vm635 = vcmp.lt.s32.totalorder %v523, 0
      %vm636 = vcmp.lt.s32.totalorder %v530, 0
      %vm637 = vcmp.lt.s32.totalorder %v537, 0
      %vm638 = vcmp.lt.s32.totalorder %v544, 0
      %vm639 = vcmp.lt.s32.totalorder %v551, 0
      %vm640 = vcmp.lt.s32.totalorder %v558, 0
      %vm641 = vcmp.lt.s32.totalorder %v565, 0
      %vm642 = vcmp.lt.s32.totalorder %v572, 0
      %vm643 = vcmp.lt.s32.totalorder %v579, 0
      %vm644 = vmand %vm612, %vm580
      %vm645 = vmand %vm613, %vm581
      %vm646 = vmand %vm614, %vm582
      %vm647 = vmand %vm615, %vm583
      %vm648 = vmand %vm616, %vm584
      %vm649 = vmand %vm617, %vm585
      %vm650 = vmand %vm618, %vm586
      %vm651 = vmand %vm619, %vm587
      %vm652 = vmand %vm620, %vm588
      %vm653 = vmand %vm621, %vm589
      %vm654 = vmand %vm622, %vm590
      %vm655 = vmand %vm623, %vm591
      %vm656 = vmand %vm624, %vm592
      %vm657 = vmand %vm625, %vm593
      %vm658 = vmand %vm626, %vm594
      %vm659 = vmand %vm627, %vm595
      %vm660 = vmand %vm628, %vm596
      %vm661 = vmand %vm629, %vm597
      %vm662 = vmand %vm630, %vm598
      %vm663 = vmand %vm631, %vm599
      %vm664 = vmand %vm632, %vm600
      %vm665 = vmand %vm633, %vm601
      %vm666 = vmand %vm634, %vm602
      %vm667 = vmand %vm635, %vm603
      %vm668 = vmand %vm636, %vm604
      %vm669 = vmand %vm637, %vm605
      %vm670 = vmand %vm638, %vm606
      %vm671 = vmand %vm639, %vm607
      %vm672 = vmand %vm640, %vm608
      %vm673 = vmand %vm641, %vm609
      %vm674 = vmand %vm642, %vm610
      %vm675 = vmand %vm643, %vm611
      %v676 = vadd.s32 %v362, 16
      %v677 = vadd.s32 %v369, 16
      %v678 = vadd.s32 %v376, 16
      %v679 = vadd.s32 %v383, 16
      %v680 = vadd.s32 %v390, 16
      %v681 = vadd.s32 %v397, 16
      %v682 = vadd.s32 %v404, 16
      %v683 = vadd.s32 %v411, 16
      %v684 = vadd.s32 %v418, 16
      %v685 = vadd.s32 %v425, 16
      %v686 = vadd.s32 %v432, 16
      %v687 = vadd.s32 %v439, 16
      %v688 = vadd.s32 %v446, 16
      %v689 = vadd.s32 %v453, 16
      %v690 = vadd.s32 %v460, 16
      %v691 = vadd.s32 %v467, 16
      %v692 = vadd.s32 %v474, 16
      %v693 = vadd.s32 %v481, 16
      %v694 = vadd.s32 %v488, 16
      %v695 = vadd.s32 %v495, 16
      %v696 = vadd.s32 %v502, 16
      %v697 = vadd.s32 %v509, 16
      %v698 = vadd.s32 %v516, 16
      %v699 = vadd.s32 %v523, 16
      %v700 = vadd.s32 %v530, 16
      %v701 = vadd.s32 %v537, 16
      %v702 = vadd.s32 %v544, 16
      %v703 = vadd.s32 %v551, 16
      %v704 = vadd.s32 %v558, 16
      %v705 = vadd.s32 %v565, 16
      %v706 = vadd.s32 %v572, 16
      %v707 = vadd.s32 %v579, 16
      %v708 = vsel %vm644, %v676, %v362
      %v709 = vsel %vm645, %v677, %v369
      %v710 = vsel %vm646, %v678, %v376
      %v711 = vsel %vm647, %v679, %v383
      %v712 = vsel %vm648, %v680, %v390
      %v713 = vsel %vm649, %v681, %v397
      %v714 = vsel %vm650, %v682, %v404
      %v715 = vsel %vm651, %v683, %v411
      %v716 = vsel %vm652, %v684, %v418
      %v717 = vsel %vm653, %v685, %v425
      %v718 = vsel %vm654, %v686, %v432
      %v719 = vsel %vm655, %v687, %v439
      %v720 = vsel %vm656, %v688, %v446
      %v721 = vsel %vm657, %v689, %v453
      %v722 = vsel %vm658, %v690, %v460
      %v723 = vsel %vm659, %v691, %v467
      %v724 = vsel %vm660, %v692, %v474
      %v725 = vsel %vm661, %v693, %v481
      %v726 = vsel %vm662, %v694, %v488
      %v727 = vsel %vm663, %v695, %v495
      %v728 = vsel %vm664, %v696, %v502
      %v729 = vsel %vm665, %v697, %v509
      %v730 = vsel %vm666, %v698, %v516
      %v731 = vsel %vm667, %v699, %v523
      %v732 = vsel %vm668, %v700, %v530
      %v733 = vsel %vm669, %v701, %v537
      %v734 = vsel %vm670, %v702, %v544
      %v735 = vsel %vm671, %v703, %v551
      %v736 = vsel %vm672, %v704, %v558
      %v737 = vsel %vm673, %v705, %v565
      %v738 = vsel %vm674, %v706, %v572
      %v739 = vsel %vm675, %v707, %v579
      %vm740 = vcmp.ne.s32.totalorder %v708, 0
      %vm741 = vcmp.ne.s32.totalorder %v709, 0
      %vm742 = vcmp.ne.s32.totalorder %v710, 0
      %vm743 = vcmp.ne.s32.totalorder %v711, 0
      %vm744 = vcmp.ne.s32.totalorder %v712, 0
      %vm745 = vcmp.ne.s32.totalorder %v713, 0
      %vm746 = vcmp.ne.s32.totalorder %v714, 0
      %vm747 = vcmp.ne.s32.totalorder %v715, 0
      %vm748 = vcmp.ne.s32.totalorder %v716, 0
      %vm749 = vcmp.ne.s32.totalorder %v717, 0
      %vm750 = vcmp.ne.s32.totalorder %v718, 0
      %vm751 = vcmp.ne.s32.totalorder %v719, 0
      %vm752 = vcmp.ne.s32.totalorder %v720, 0
      %vm753 = vcmp.ne.s32.totalorder %v721, 0
      %vm754 = vcmp.ne.s32.totalorder %v722, 0
      %vm755 = vcmp.ne.s32.totalorder %v723, 0
      %vm756 = vcmp.ne.s32.totalorder %v724, 0
      %vm757 = vcmp.ne.s32.totalorder %v725, 0
      %vm758 = vcmp.ne.s32.totalorder %v726, 0
      %vm759 = vcmp.ne.s32.totalorder %v727, 0
      %vm760 = vcmp.ne.s32.totalorder %v728, 0
      %vm761 = vcmp.ne.s32.totalorder %v729, 0
      %vm762 = vcmp.ne.s32.totalorder %v730, 0
      %vm763 = vcmp.ne.s32.totalorder %v731, 0
      %vm764 = vcmp.ne.s32.totalorder %v732, 0
      %vm765 = vcmp.ne.s32.totalorder %v733, 0
      %vm766 = vcmp.ne.s32.totalorder %v734, 0
      %vm767 = vcmp.ne.s32.totalorder %v735, 0
      %vm768 = vcmp.ne.s32.totalorder %v736, 0
      %vm769 = vcmp.ne.s32.totalorder %v737, 0
      %vm770 = vcmp.ne.s32.totalorder %v738, 0
      %vm771 = vcmp.ne.s32.totalorder %v739, 0
      %vm772 = vcmp.ne.s32.totalorder %v708, 15
      %vm773 = vcmp.ne.s32.totalorder %v709, 15
      %vm774 = vcmp.ne.s32.totalorder %v710, 15
      %vm775 = vcmp.ne.s32.totalorder %v711, 15
      %vm776 = vcmp.ne.s32.totalorder %v712, 15
      %vm777 = vcmp.ne.s32.totalorder %v713, 15
      %vm778 = vcmp.ne.s32.totalorder %v714, 15
      %vm779 = vcmp.ne.s32.totalorder %v715, 15
      %vm780 = vcmp.ne.s32.totalorder %v716, 15
      %vm781 = vcmp.ne.s32.totalorder %v717, 15
      %vm782 = vcmp.ne.s32.totalorder %v718, 15
      %vm783 = vcmp.ne.s32.totalorder %v719, 15
      %vm784 = vcmp.ne.s32.totalorder %v720, 15
      %vm785 = vcmp.ne.s32.totalorder %v721, 15
      %vm786 = vcmp.ne.s32.totalorder %v722, 15
      %vm787 = vcmp.ne.s32.totalorder %v723, 15
      %vm788 = vcmp.ne.s32.totalorder %v724, 15
      %vm789 = vcmp.ne.s32.totalorder %v725, 15
      %vm790 = vcmp.ne.s32.totalorder %v726, 15
      %vm791 = vcmp.ne.s32.totalorder %v727, 15
      %vm792 = vcmp.ne.s32.totalorder %v728, 15
      %vm793 = vcmp.ne.s32.totalorder %v729, 15
      %vm794 = vcmp.ne.s32.totalorder %v730, 15
      %vm795 = vcmp.ne.s32.totalorder %v731, 15
      %vm796 = vcmp.ne.s32.totalorder %v732, 15
      %vm797 = vcmp.ne.s32.totalorder %v733, 15
      %vm798 = vcmp.ne.s32.totalorder %v734, 15
      %vm799 = vcmp.ne.s32.totalorder %v735, 15
      %vm800 = vcmp.ne.s32.totalorder %v736, 15
      %vm801 = vcmp.ne.s32.totalorder %v737, 15
      %vm802 = vcmp.ne.s32.totalorder %v738, 15
      %vm803 = vcmp.ne.s32.totalorder %v739, 15
      %v804 = vld [vmem:[#allocation2 + $0x7] sm:$0xff]
      %v805 = vld [vmem:[#allocation2 + $0xf] sm:$0xff]
      %v806 = vld [vmem:[#allocation2 + $0x17] sm:$0xff]
      %v807 = vld [vmem:[#allocation2 + $0x1f] sm:$0xff]
      %v808 = vld [vmem:[#allocation2 + $0x27] sm:$0xff]
      %v809 = vld [vmem:[#allocation2 + $0x2f] sm:$0xff]
      %v810 = vld [vmem:[#allocation2 + $0x37] sm:$0xff]
      %v811 = vld [vmem:[#allocation2 + $0x3f] sm:$0xff]
      %v812 = vld [vmem:[#allocation2 + $0x47] sm:$0xff]
      %v813 = vld [vmem:[#allocation2 + $0x4f] sm:$0xff]
      %v814 = vld [vmem:[#allocation2 + $0x57] sm:$0xff]
      %v815 = vld [vmem:[#allocation2 + $0x5f] sm:$0xff]
      %v816 = vld [vmem:[#allocation2 + $0x67] sm:$0xff]
      %v817 = vld [vmem:[#allocation2 + $0x6f] sm:$0xff]
      %v818 = vld [vmem:[#allocation2 + $0x77] sm:$0xff]
      %v819 = vld [vmem:[#allocation2 + $0x7f] sm:$0xff]
      %v820 = vld [vmem:[#allocation2 + $0x87] sm:$0xff]
      %v821 = vld [vmem:[#allocation2 + $0x8f] sm:$0xff]
      %v822 = vld [vmem:[#allocation2 + $0x97] sm:$0xff]
      %v823 = vld [vmem:[#allocation2 + $0x9f] sm:$0xff]
      %v824 = vld [vmem:[#allocation2 + $0xa7] sm:$0xff]
      %v825 = vld [vmem:[#allocation2 + $0xaf] sm:$0xff]
      %v826 = vld [vmem:[#allocation2 + $0xb7] sm:$0xff]
      %v827 = vld [vmem:[#allocation2 + $0xbf] sm:$0xff]
      %v828 = vld [vmem:[#allocation2 + $0xc7] sm:$0xff]
      %v829 = vld [vmem:[#allocation2 + $0xcf] sm:$0xff]
      %v830 = vld [vmem:[#allocation2 + $0xd7] sm:$0xff]
      %v831 = vld [vmem:[#allocation2 + $0xdf] sm:$0xff]
      %v832 = vld [vmem:[#allocation2 + $0xe7] sm:$0xff]
      %v833 = vld [vmem:[#allocation2 + $0xef] sm:$0xff]
      %v834 = vld [vmem:[#allocation2 + $0xf7] sm:$0xff]
      %v835 = vld [vmem:[#allocation2 + $0xff] sm:$0xff]
      %v836 = vsel %vm740, %v804, 0.0
      %v837 = vsel %vm741, %v805, 0.0
      %v838 = vsel %vm742, %v806, 0.0
      %v839 = vsel %vm743, %v807, 0.0
      %v840 = vsel %vm744, %v808, 0.0
      %v841 = vsel %vm745, %v809, 0.0
      %v842 = vsel %vm746, %v810, 0.0
      %v843 = vsel %vm747, %v811, 0.0
      %v844 = vsel %vm748, %v812, 0.0
      %v845 = vsel %vm749, %v813, 0.0
      %v846 = vsel %vm750, %v814, 0.0
      %v847 = vsel %vm751, %v815, 0.0
      %v848 = vsel %vm752, %v816, 0.0
      %v849 = vsel %vm753, %v817, 0.0
      %v850 = vsel %vm754, %v818, 0.0
      %v851 = vsel %vm755, %v819, 0.0
      %v852 = vsel %vm756, %v820, 0.0
      %v853 = vsel %vm757, %v821, 0.0
      %v854 = vsel %vm758, %v822, 0.0
      %v855 = vsel %vm759, %v823, 0.0
      %v856 = vsel %vm760, %v824, 0.0
      %v857 = vsel %vm761, %v825, 0.0
      %v858 = vsel %vm762, %v826, 0.0
      %v859 = vsel %vm763, %v827, 0.0
      %v860 = vsel %vm764, %v828, 0.0
      %v861 = vsel %vm765, %v829, 0.0
      %v862 = vsel %vm766, %v830, 0.0
      %v863 = vsel %vm767, %v831, 0.0
      %v864 = vsel %vm768, %v832, 0.0
      %v865 = vsel %vm769, %v833, 0.0
      %v866 = vsel %vm770, %v834, 0.0
      %v867 = vsel %vm771, %v835, 0.0
      %v868 = vld [vmem:[%s1] sm:$0xf]
      %v869 = vld [vmem:[#allocation2 + $0x8] sm:$0xff]
      %v870 = vld [vmem:[#allocation2 + $0x10] sm:$0xff]
      %v871 = vld [vmem:[#allocation2 + $0x18] sm:$0xff]
      %v872 = vld [vmem:[#allocation2 + $0x20] sm:$0xff]
      %v873 = vld [vmem:[#allocation2 + $0x28] sm:$0xff]
      %v874 = vld [vmem:[#allocation2 + $0x30] sm:$0xff]
      %v875 = vld [vmem:[#allocation2 + $0x38] sm:$0xff]
      %v876 = vld [vmem:[#allocation2 + $0x40] sm:$0xff]
      %v877 = vld [vmem:[#allocation2 + $0x48] sm:$0xff]
      %v878 = vld [vmem:[#allocation2 + $0x50] sm:$0xff]
      %v879 = vld [vmem:[#allocation2 + $0x58] sm:$0xff]
      %v880 = vld [vmem:[#allocation2 + $0x60] sm:$0xff]
      %v881 = vld [vmem:[#allocation2 + $0x68] sm:$0xff]
      %v882 = vld [vmem:[#allocation2 + $0x70] sm:$0xff]
      %v883 = vld [vmem:[#allocation2 + $0x78] sm:$0xff]
      %v884 = vld [vmem:[#allocation2 + $0x80] sm:$0xff]
      %v885 = vld [vmem:[#allocation2 + $0x88] sm:$0xff]
      %v886 = vld [vmem:[#allocation2 + $0x90] sm:$0xff]
      %v887 = vld [vmem:[#allocation2 + $0x98] sm:$0xff]
      %v888 = vld [vmem:[#allocation2 + $0xa0] sm:$0xff]
      %v889 = vld [vmem:[#allocation2 + $0xa8] sm:$0xff]
      %v890 = vld [vmem:[#allocation2 + $0xb0] sm:$0xff]
      %v891 = vld [vmem:[#allocation2 + $0xb8] sm:$0xff]
      %v892 = vld [vmem:[#allocation2 + $0xc0] sm:$0xff]
      %v893 = vld [vmem:[#allocation2 + $0xc8] sm:$0xff]
      %v894 = vld [vmem:[#allocation2 + $0xd0] sm:$0xff]
      %v895 = vld [vmem:[#allocation2 + $0xd8] sm:$0xff]
      %v896 = vld [vmem:[#allocation2 + $0xe0] sm:$0xff]
      %v897 = vld [vmem:[#allocation2 + $0xe8] sm:$0xff]
      %v898 = vld [vmem:[#allocation2 + $0xf0] sm:$0xff]
      %v899 = vld [vmem:[#allocation2 + $0xf8] sm:$0xff]
      %v900 = vld [vmem:[#allocation2 + $0x100] sm:$0xff]
      %s901 = scalar_lea.vmem %s1, 4
      %v902 = vld [vmem:[%s901] sm:$0xf]
      %v904 = vsel %vm284, %v869, 0
      %v907 = vsel %vm284, %v870, 0
      %v910 = vsel %vm284, %v871, 0
      %v913 = vsel %vm284, %v872, 0
      %v916 = vsel %vm284, %v873, 0
      %v919 = vsel %vm284, %v874, 0
      %v922 = vsel %vm284, %v875, 0
      %v925 = vsel %vm284, %v876, 0
      %v928 = vsel %vm284, %v877, 0
      %v931 = vsel %vm284, %v878, 0
      %v934 = vsel %vm284, %v879, 0
      %v937 = vsel %vm284, %v880, 0
      %v940 = vsel %vm284, %v881, 0
      %v943 = vsel %vm284, %v882, 0
      %v946 = vsel %vm284, %v883, 0
      %v949 = vsel %vm284, %v884, 0
      %v952 = vsel %vm284, %v885, 0
      %v955 = vsel %vm284, %v886, 0
      %v958 = vsel %vm284, %v887, 0
      %v961 = vsel %vm284, %v888, 0
      %v964 = vsel %vm284, %v889, 0
      %v967 = vsel %vm284, %v890, 0
      %v970 = vsel %vm284, %v891, 0
      %v973 = vsel %vm284, %v892, 0
      %v976 = vsel %vm284, %v893, 0
      %v979 = vsel %vm284, %v894, 0
      %v982 = vsel %vm284, %v895, 0
      %v985 = vsel %vm284, %v896, 0
      %v988 = vsel %vm284, %v897, 0
      %v991 = vsel %vm284, %v898, 0
      %v994 = vsel %vm284, %v899, 0
      %v997 = vsel %vm284, %v900, 0
      %vm999 = vcmask 1043456
      %v1001 = vsel %vm999, %v902, 0
      %1003 = vmatprep.subr.mxu0 0.0
      %1004 = vmatpush1.msra.mxu0 0.0
      %1005 = vmatprep.subr.mxu0 0.0
      %1006 = vmatpush1.msra.mxu0 0.0
      %1007 = vmatprep.subr.mxu0 0.0
      %1008 = vmatpush1.msra.mxu0 0.0
      %1009 = vmatprep.subr.mxu0 0.0
      %1010 = vmatpush1.msra.mxu0 0.0
      %1011 = vmatprep.subr.mxu0 0.0
      %1012 = vmatpush1.msra.mxu0 0.0
      %1013 = vmatprep.subr.mxu0 0.0
      %1014 = vmatpush1.msra.mxu0 0.0
      %1015 = vmatprep.subr.mxu0 0.0
      %1016 = vmatpush1.msra.mxu0 0.0
      %1017 = vmatprep.subr.mxu0 0.0
      %1018 = vmatpush1.msra.mxu0 0.0
      %1019 = vmatprep.subr.mxu0 0.0
      %1020 = vmatpush1.msra.mxu0 0.0
      %1021 = vmatprep.subr.mxu0 0.0
      %1022 = vmatpush1.msra.mxu0 0.0
      %1023 = vmatprep.subr.mxu0 0.0
      %1024 = vmatpush1.msra.mxu0 0.0
      %1025 = vmatprep.subr.mxu0 0.0
      %1026 = vmatpush1.msra.mxu0 0.0
      %1027 = vmatprep.subr.mxu0 0.0
      %1028 = vmatpush1.msra.mxu0 0.0
      %1029 = vmatprep.subr.mxu0 0.0
      %1030 = vmatpush1.msra.mxu0 0.0
      %1031 = vmatprep.subr.mxu0 0.0
      %1032 = vmatpush1.msra.mxu0 0.0
      %1033 = vmatprep.subr.mxu0 0.0
      %1034 = vmatpush1.msra.mxu0 %v1001
      %1035 = vmatprep.subr.mxu0 0.0
      %1036 = vmatpush2.msra.mxu0 0.0
      %1037 = vmatprep.subr.mxu0 0.0
      %1038 = vmatpush2.msra.mxu0 0.0
      %1039 = vmatprep.subr.mxu0 0.0
      %1040 = vmatpush2.msra.mxu0 0.0
      %1041 = vmatprep.subr.mxu0 0.0
      %1042 = vmatpush2.msra.mxu0 0.0
      %1043 = vmatprep.subr.mxu0 0.0
      %1044 = vmatpush2.msra.mxu0 0.0
      %1045 = vmatprep.subr.mxu0 0.0
      %1046 = vmatpush2.msra.mxu0 0.0
      %1047 = vmatprep.subr.mxu0 0.0
      %1048 = vmatpush2.msra.mxu0 0.0
      %1049 = vmatprep.subr.mxu0 0.0
      %1050 = vmatpush2.msra.mxu0 0.0
      %1051 = vmatprep.subr.mxu0 0.0
      %1052 = vmatpush2.msra.mxu0 0.0
      %1053 = vmatprep.subr.mxu0 0.0
      %1054 = vmatpush2.msra.mxu0 0.0
      %1055 = vmatprep.subr.mxu0 0.0
      %1056 = vmatpush2.msra.mxu0 0.0
      %1057 = vmatprep.subr.mxu0 0.0
      %1058 = vmatpush2.msra.mxu0 0.0
      %1059 = vmatprep.subr.mxu0 0.0
      %1060 = vmatpush2.msra.mxu0 0.0
      %1061 = vmatprep.subr.mxu0 0.0
      %1062 = vmatpush2.msra.mxu0 0.0
      %1063 = vmatprep.subr.mxu0 0.0
      %1064 = vmatpush2.msra.mxu0 0.0
      %1065 = vmatprep.subr.mxu0 0.0
      %1066 = vmatpush2.msra.mxu0 0.0
      %1067 = vmatprep.mubr.f32.mxu0 0.0
      %1068 = vmatmul.mubr.f32.gmra.mxu0 %v904
      %v1069 = vpop.f32.mrf.mxu0
      %v1070 = vadd.f32 0.0, %v1069
      %v1071 = vpop.f32.mrf.mxu0
      %1072 = vmatprep.mubr.f32.mxu0 0.0
      %1073 = vmatmul.mubr.f32.gmra.mxu0 %v907
      %v1074 = vpop.f32.mrf.mxu0
      %v1075 = vadd.f32 0.0, %v1074
      %v1076 = vpop.f32.mrf.mxu0
      %1077 = vmatprep.mubr.f32.mxu0 0.0
      %1078 = vmatmul.mubr.f32.gmra.mxu0 %v910
      %v1079 = vpop.f32.mrf.mxu0
      %v1080 = vadd.f32 0.0, %v1079
      %v1081 = vpop.f32.mrf.mxu0
      %1082 = vmatprep.mubr.f32.mxu0 0.0
      %1083 = vmatmul.mubr.f32.gmra.mxu0 %v913
      %v1084 = vpop.f32.mrf.mxu0
      %v1085 = vadd.f32 0.0, %v1084
      %v1086 = vpop.f32.mrf.mxu0
      %1087 = vmatprep.mubr.f32.mxu0 0.0
      %1088 = vmatmul.mubr.f32.gmra.mxu0 %v916
      %v1089 = vpop.f32.mrf.mxu0
      %v1090 = vadd.f32 0.0, %v1089
      %v1091 = vpop.f32.mrf.mxu0
      %1092 = vmatprep.mubr.f32.mxu0 0.0
      %1093 = vmatmul.mubr.f32.gmra.mxu0 %v919
      %v1094 = vpop.f32.mrf.mxu0
      %v1095 = vadd.f32 0.0, %v1094
      %v1096 = vpop.f32.mrf.mxu0
      %1097 = vmatprep.mubr.f32.mxu0 0.0
      %1098 = vmatmul.mubr.f32.gmra.mxu0 %v922
      %v1099 = vpop.f32.mrf.mxu0
      %v1100 = vadd.f32 0.0, %v1099
      %v1101 = vpop.f32.mrf.mxu0
      %1102 = vmatprep.mubr.f32.mxu0 0.0
      %1103 = vmatmul.mubr.f32.gmra.mxu0 %v925
      %v1104 = vpop.f32.mrf.mxu0
      %v1105 = vadd.f32 0.0, %v1104
      %v1106 = vpop.f32.mrf.mxu0
      %1107 = vmatprep.mubr.f32.mxu0 0.0
      %1108 = vmatmul.mubr.f32.gmra.mxu0 %v928
      %v1109 = vpop.f32.mrf.mxu0
      %v1110 = vadd.f32 0.0, %v1109
      %v1111 = vpop.f32.mrf.mxu0
      %1112 = vmatprep.mubr.f32.mxu0 0.0
      %1113 = vmatmul.mubr.f32.gmra.mxu0 %v931
      %v1114 = vpop.f32.mrf.mxu0
      %v1115 = vadd.f32 0.0, %v1114
      %v1116 = vpop.f32.mrf.mxu0
      %1117 = vmatprep.mubr.f32.mxu0 0.0
      %1118 = vmatmul.mubr.f32.gmra.mxu0 %v934
      %v1119 = vpop.f32.mrf.mxu0
      %v1120 = vadd.f32 0.0, %v1119
      %v1121 = vpop.f32.mrf.mxu0
      %1122 = vmatprep.mubr.f32.mxu0 0.0
      %1123 = vmatmul.mubr.f32.gmra.mxu0 %v937
      %v1124 = vpop.f32.mrf.mxu0
      %v1125 = vadd.f32 0.0, %v1124
      %v1126 = vpop.f32.mrf.mxu0
      %1127 = vmatprep.mubr.f32.mxu0 0.0
      %1128 = vmatmul.mubr.f32.gmra.mxu0 %v940
      %v1129 = vpop.f32.mrf.mxu0
      %v1130 = vadd.f32 0.0, %v1129
      %v1131 = vpop.f32.mrf.mxu0
      %1132 = vmatprep.mubr.f32.mxu0 0.0
      %1133 = vmatmul.mubr.f32.gmra.mxu0 %v943
      %v1134 = vpop.f32.mrf.mxu0
      %v1135 = vadd.f32 0.0, %v1134
      %v1136 = vpop.f32.mrf.mxu0
      %1137 = vmatprep.mubr.f32.mxu0 0.0
      %1138 = vmatmul.mubr.f32.gmra.mxu0 %v946
      %v1139 = vpop.f32.mrf.mxu0
      %v1140 = vadd.f32 0.0, %v1139
      %v1141 = vpop.f32.mrf.mxu0
      %1142 = vmatprep.mubr.f32.mxu0 0.0
      %1143 = vmatmul.mubr.f32.gmra.mxu0 %v949
      %v1144 = vpop.f32.mrf.mxu0
      %v1145 = vadd.f32 0.0, %v1144
      %v1146 = vpop.f32.mrf.mxu0
      %1147 = vmatprep.mubr.f32.mxu0 0.0
      %1148 = vmatmul.mubr.f32.gmra.mxu0 %v952
      %v1149 = vpop.f32.mrf.mxu0
      %v1150 = vadd.f32 0.0, %v1149
      %v1151 = vpop.f32.mrf.mxu0
      %1152 = vmatprep.mubr.f32.mxu0 0.0
      %1153 = vmatmul.mubr.f32.gmra.mxu0 %v955
      %v1154 = vpop.f32.mrf.mxu0
      %v1155 = vadd.f32 0.0, %v1154
      %v1156 = vpop.f32.mrf.mxu0
      %1157 = vmatprep.mubr.f32.mxu0 0.0
      %1158 = vmatmul.mubr.f32.gmra.mxu0 %v958
      %v1159 = vpop.f32.mrf.mxu0
      %v1160 = vadd.f32 0.0, %v1159
      %v1161 = vpop.f32.mrf.mxu0
      %1162 = vmatprep.mubr.f32.mxu0 0.0
      %1163 = vmatmul.mubr.f32.gmra.mxu0 %v961
      %v1164 = vpop.f32.mrf.mxu0
      %v1165 = vadd.f32 0.0, %v1164
      %v1166 = vpop.f32.mrf.mxu0
      %1167 = vmatprep.mubr.f32.mxu0 0.0
      %1168 = vmatmul.mubr.f32.gmra.mxu0 %v964
      %v1169 = vpop.f32.mrf.mxu0
      %v1170 = vadd.f32 0.0, %v1169
      %v1171 = vpop.f32.mrf.mxu0
      %1172 = vmatprep.mubr.f32.mxu0 0.0
      %1173 = vmatmul.mubr.f32.gmra.mxu0 %v967
      %v1174 = vpop.f32.mrf.mxu0
      %v1175 = vadd.f32 0.0, %v1174
      %v1176 = vpop.f32.mrf.mxu0
      %1177 = vmatprep.mubr.f32.mxu0 0.0
      %1178 = vmatmul.mubr.f32.gmra.mxu0 %v970
      %v1179 = vpop.f32.mrf.mxu0
      %v1180 = vadd.f32 0.0, %v1179
      %v1181 = vpop.f32.mrf.mxu0
      %1182 = vmatprep.mubr.f32.mxu0 0.0
      %1183 = vmatmul.mubr.f32.gmra.mxu0 %v973
      %v1184 = vpop.f32.mrf.mxu0
      %v1185 = vadd.f32 0.0, %v1184
      %v1186 = vpop.f32.mrf.mxu0
      %1187 = vmatprep.mubr.f32.mxu0 0.0
      %1188 = vmatmul.mubr.f32.gmra.mxu0 %v976
      %v1189 = vpop.f32.mrf.mxu0
      %v1190 = vadd.f32 0.0, %v1189
      %v1191 = vpop.f32.mrf.mxu0
      %1192 = vmatprep.mubr.f32.mxu0 0.0
      %1193 = vmatmul.mubr.f32.gmra.mxu0 %v979
      %v1194 = vpop.f32.mrf.mxu0
      %v1195 = vadd.f32 0.0, %v1194
      %v1196 = vpop.f32.mrf.mxu0
      %1197 = vmatprep.mubr.f32.mxu0 0.0
      %1198 = vmatmul.mubr.f32.gmra.mxu0 %v982
      %v1199 = vpop.f32.mrf.mxu0
      %v1200 = vadd.f32 0.0, %v1199
      %v1201 = vpop.f32.mrf.mxu0
      %1202 = vmatprep.mubr.f32.mxu0 0.0
      %1203 = vmatmul.mubr.f32.gmra.mxu0 %v985
      %v1204 = vpop.f32.mrf.mxu0
      %v1205 = vadd.f32 0.0, %v1204
      %v1206 = vpop.f32.mrf.mxu0
      %1207 = vmatprep.mubr.f32.mxu0 0.0
      %1208 = vmatmul.mubr.f32.gmra.mxu0 %v988
      %v1209 = vpop.f32.mrf.mxu0
      %v1210 = vadd.f32 0.0, %v1209
      %v1211 = vpop.f32.mrf.mxu0
      %1212 = vmatprep.mubr.f32.mxu0 0.0
      %1213 = vmatmul.mubr.f32.gmra.mxu0 %v991
      %v1214 = vpop.f32.mrf.mxu0
      %v1215 = vadd.f32 0.0, %v1214
      %v1216 = vpop.f32.mrf.mxu0
      %1217 = vmatprep.mubr.f32.mxu0 0.0
      %1218 = vmatmul.mubr.f32.gmra.mxu0 %v994
      %v1219 = vpop.f32.mrf.mxu0
      %v1220 = vadd.f32 0.0, %v1219
      %v1221 = vpop.f32.mrf.mxu0
      %1222 = vmatprep.mubr.f32.mxu0 0.0
      %1223 = vmatmul.mubr.f32.gmra.mxu0 %v997
      %v1224 = vpop.f32.mrf.mxu0
      %v1225 = vadd.f32 0.0, %v1224
      %v1226 = vpop.f32.mrf.mxu0
      %1227 = vdwg.mxu0
      %v1229 = vsel %vm284, %v836, 0
      %v1232 = vsel %vm284, %v837, 0
      %v1235 = vsel %vm284, %v838, 0
      %v1238 = vsel %vm284, %v839, 0
      %v1241 = vsel %vm284, %v840, 0
      %v1244 = vsel %vm284, %v841, 0
      %v1247 = vsel %vm284, %v842, 0
      %v1250 = vsel %vm284, %v843, 0
      %v1253 = vsel %vm284, %v844, 0
      %v1256 = vsel %vm284, %v845, 0
      %v1259 = vsel %vm284, %v846, 0
      %v1262 = vsel %vm284, %v847, 0
      %v1265 = vsel %vm284, %v848, 0
      %v1268 = vsel %vm284, %v849, 0
      %v1271 = vsel %vm284, %v850, 0
      %v1274 = vsel %vm284, %v851, 0
      %v1277 = vsel %vm284, %v852, 0
      %v1280 = vsel %vm284, %v853, 0
      %v1283 = vsel %vm284, %v854, 0
      %v1286 = vsel %vm284, %v855, 0
      %v1289 = vsel %vm284, %v856, 0
      %v1292 = vsel %vm284, %v857, 0
      %v1295 = vsel %vm284, %v858, 0
      %v1298 = vsel %vm284, %v859, 0
      %v1301 = vsel %vm284, %v860, 0
      %v1304 = vsel %vm284, %v861, 0
      %v1307 = vsel %vm284, %v862, 0
      %v1310 = vsel %vm284, %v863, 0
      %v1313 = vsel %vm284, %v864, 0
      %v1316 = vsel %vm284, %v865, 0
      %v1319 = vsel %vm284, %v866, 0
      %v1322 = vsel %vm284, %v867, 0
      %v1325 = vsel %vm999, %v868, 0
      %1327 = vmatprep.subr.mxu0 0.0
      %1328 = vmatpush1.msra.mxu0 0.0
      %1329 = vmatprep.subr.mxu0 0.0
      %1330 = vmatpush1.msra.mxu0 0.0
      %1331 = vmatprep.subr.mxu0 0.0
      %1332 = vmatpush1.msra.mxu0 0.0
      %1333 = vmatprep.subr.mxu0 0.0
      %1334 = vmatpush1.msra.mxu0 0.0
      %1335 = vmatprep.subr.mxu0 0.0
      %1336 = vmatpush1.msra.mxu0 0.0
      %1337 = vmatprep.subr.mxu0 0.0
      %1338 = vmatpush1.msra.mxu0 0.0
      %1339 = vmatprep.subr.mxu0 0.0
      %1340 = vmatpush1.msra.mxu0 0.0
      %1341 = vmatprep.subr.mxu0 0.0
      %1342 = vmatpush1.msra.mxu0 0.0
      %1343 = vmatprep.subr.mxu0 0.0
      %1344 = vmatpush1.msra.mxu0 0.0
      %1345 = vmatprep.subr.mxu0 0.0
      %1346 = vmatpush1.msra.mxu0 0.0
      %1347 = vmatprep.subr.mxu0 0.0
      %1348 = vmatpush1.msra.mxu0 0.0
      %1349 = vmatprep.subr.mxu0 0.0
      %1350 = vmatpush1.msra.mxu0 0.0
      %1351 = vmatprep.subr.mxu0 0.0
      %1352 = vmatpush1.msra.mxu0 0.0
      %1353 = vmatprep.subr.mxu0 0.0
      %1354 = vmatpush1.msra.mxu0 0.0
      %1355 = vmatprep.subr.mxu0 0.0
      %1356 = vmatpush1.msra.mxu0 0.0
      %1357 = vmatprep.subr.mxu0 0.0
      %1358 = vmatpush1.msra.mxu0 %v1325
      %1359 = vmatprep.subr.mxu0 0.0
      %1360 = vmatpush2.msra.mxu0 0.0
      %1361 = vmatprep.subr.mxu0 0.0
      %1362 = vmatpush2.msra.mxu0 0.0
      %1363 = vmatprep.subr.mxu0 0.0
      %1364 = vmatpush2.msra.mxu0 0.0
      %1365 = vmatprep.subr.mxu0 0.0
      %1366 = vmatpush2.msra.mxu0 0.0
      %1367 = vmatprep.subr.mxu0 0.0
      %1368 = vmatpush2.msra.mxu0 0.0
      %1369 = vmatprep.subr.mxu0 0.0
      %1370 = vmatpush2.msra.mxu0 0.0
      %1371 = vmatprep.subr.mxu0 0.0
      %1372 = vmatpush2.msra.mxu0 0.0
      %1373 = vmatprep.subr.mxu0 0.0
      %1374 = vmatpush2.msra.mxu0 0.0
      %1375 = vmatprep.subr.mxu0 0.0
      %1376 = vmatpush2.msra.mxu0 0.0
      %1377 = vmatprep.subr.mxu0 0.0
      %1378 = vmatpush2.msra.mxu0 0.0
      %1379 = vmatprep.subr.mxu0 0.0
      %1380 = vmatpush2.msra.mxu0 0.0
      %1381 = vmatprep.subr.mxu0 0.0
      %1382 = vmatpush2.msra.mxu0 0.0
      %1383 = vmatprep.subr.mxu0 0.0
      %1384 = vmatpush2.msra.mxu0 0.0
      %1385 = vmatprep.subr.mxu0 0.0
      %1386 = vmatpush2.msra.mxu0 0.0
      %1387 = vmatprep.subr.mxu0 0.0
      %1388 = vmatpush2.msra.mxu0 0.0
      %1389 = vmatprep.subr.mxu0 0.0
      %1390 = vmatpush2.msra.mxu0 0.0
      %1391 = vmatprep.mubr.f32.mxu0 0.0
      %1392 = vmatmul.mubr.f32.gmra.mxu0 %v1229
      %v1393 = vpop.f32.mrf.mxu0
      %v1394 = vadd.f32 %v1070, %v1393
      %v1395 = vpop.f32.mrf.mxu0
      %1396 = vmatprep.mubr.f32.mxu0 0.0
      %1397 = vmatmul.mubr.f32.gmra.mxu0 %v1232
      %v1398 = vpop.f32.mrf.mxu0
      %v1399 = vadd.f32 %v1075, %v1398
      %v1400 = vpop.f32.mrf.mxu0
      %1401 = vmatprep.mubr.f32.mxu0 0.0
      %1402 = vmatmul.mubr.f32.gmra.mxu0 %v1235
      %v1403 = vpop.f32.mrf.mxu0
      %v1404 = vadd.f32 %v1080, %v1403
      %v1405 = vpop.f32.mrf.mxu0
      %1406 = vmatprep.mubr.f32.mxu0 0.0
      %1407 = vmatmul.mubr.f32.gmra.mxu0 %v1238
      %v1408 = vpop.f32.mrf.mxu0
      %v1409 = vadd.f32 %v1085, %v1408
      %v1410 = vpop.f32.mrf.mxu0
      %1411 = vmatprep.mubr.f32.mxu0 0.0
      %1412 = vmatmul.mubr.f32.gmra.mxu0 %v1241
      %v1413 = vpop.f32.mrf.mxu0
      %v1414 = vadd.f32 %v1090, %v1413
      %v1415 = vpop.f32.mrf.mxu0
      %1416 = vmatprep.mubr.f32.mxu0 0.0
      %1417 = vmatmul.mubr.f32.gmra.mxu0 %v1244
      %v1418 = vpop.f32.mrf.mxu0
      %v1419 = vadd.f32 %v1095, %v1418
      %v1420 = vpop.f32.mrf.mxu0
      %1421 = vmatprep.mubr.f32.mxu0 0.0
      %1422 = vmatmul.mubr.f32.gmra.mxu0 %v1247
      %v1423 = vpop.f32.mrf.mxu0
      %v1424 = vadd.f32 %v1100, %v1423
      %v1425 = vpop.f32.mrf.mxu0
      %1426 = vmatprep.mubr.f32.mxu0 0.0
      %1427 = vmatmul.mubr.f32.gmra.mxu0 %v1250
      %v1428 = vpop.f32.mrf.mxu0
      %v1429 = vadd.f32 %v1105, %v1428
      %v1430 = vpop.f32.mrf.mxu0
      %1431 = vmatprep.mubr.f32.mxu0 0.0
      %1432 = vmatmul.mubr.f32.gmra.mxu0 %v1253
      %v1433 = vpop.f32.mrf.mxu0
      %v1434 = vadd.f32 %v1110, %v1433
      %v1435 = vpop.f32.mrf.mxu0
      %1436 = vmatprep.mubr.f32.mxu0 0.0
      %1437 = vmatmul.mubr.f32.gmra.mxu0 %v1256
      %v1438 = vpop.f32.mrf.mxu0
      %v1439 = vadd.f32 %v1115, %v1438
      %v1440 = vpop.f32.mrf.mxu0
      %1441 = vmatprep.mubr.f32.mxu0 0.0
      %1442 = vmatmul.mubr.f32.gmra.mxu0 %v1259
      %v1443 = vpop.f32.mrf.mxu0
      %v1444 = vadd.f32 %v1120, %v1443
      %v1445 = vpop.f32.mrf.mxu0
      %1446 = vmatprep.mubr.f32.mxu0 0.0
      %1447 = vmatmul.mubr.f32.gmra.mxu0 %v1262
      %v1448 = vpop.f32.mrf.mxu0
      %v1449 = vadd.f32 %v1125, %v1448
      %v1450 = vpop.f32.mrf.mxu0
      %1451 = vmatprep.mubr.f32.mxu0 0.0
      %1452 = vmatmul.mubr.f32.gmra.mxu0 %v1265
      %v1453 = vpop.f32.mrf.mxu0
      %v1454 = vadd.f32 %v1130, %v1453
      %v1455 = vpop.f32.mrf.mxu0
      %1456 = vmatprep.mubr.f32.mxu0 0.0
      %1457 = vmatmul.mubr.f32.gmra.mxu0 %v1268
      %v1458 = vpop.f32.mrf.mxu0
      %v1459 = vadd.f32 %v1135, %v1458
      %v1460 = vpop.f32.mrf.mxu0
      %1461 = vmatprep.mubr.f32.mxu0 0.0
      %1462 = vmatmul.mubr.f32.gmra.mxu0 %v1271
      %v1463 = vpop.f32.mrf.mxu0
      %v1464 = vadd.f32 %v1140, %v1463
      %v1465 = vpop.f32.mrf.mxu0
      %1466 = vmatprep.mubr.f32.mxu0 0.0
      %1467 = vmatmul.mubr.f32.gmra.mxu0 %v1274
      %v1468 = vpop.f32.mrf.mxu0
      %v1469 = vadd.f32 %v1145, %v1468
      %v1470 = vpop.f32.mrf.mxu0
      %1471 = vmatprep.mubr.f32.mxu0 0.0
      %1472 = vmatmul.mubr.f32.gmra.mxu0 %v1277
      %v1473 = vpop.f32.mrf.mxu0
      %v1474 = vadd.f32 %v1150, %v1473
      %v1475 = vpop.f32.mrf.mxu0
      %1476 = vmatprep.mubr.f32.mxu0 0.0
      %1477 = vmatmul.mubr.f32.gmra.mxu0 %v1280
      %v1478 = vpop.f32.mrf.mxu0
      %v1479 = vadd.f32 %v1155, %v1478
      %v1480 = vpop.f32.mrf.mxu0
      %1481 = vmatprep.mubr.f32.mxu0 0.0
      %1482 = vmatmul.mubr.f32.gmra.mxu0 %v1283
      %v1483 = vpop.f32.mrf.mxu0
      %v1484 = vadd.f32 %v1160, %v1483
      %v1485 = vpop.f32.mrf.mxu0
      %1486 = vmatprep.mubr.f32.mxu0 0.0
      %1487 = vmatmul.mubr.f32.gmra.mxu0 %v1286
      %v1488 = vpop.f32.mrf.mxu0
      %v1489 = vadd.f32 %v1165, %v1488
      %v1490 = vpop.f32.mrf.mxu0
      %1491 = vmatprep.mubr.f32.mxu0 0.0
      %1492 = vmatmul.mubr.f32.gmra.mxu0 %v1289
      %v1493 = vpop.f32.mrf.mxu0
      %v1494 = vadd.f32 %v1170, %v1493
      %v1495 = vpop.f32.mrf.mxu0
      %1496 = vmatprep.mubr.f32.mxu0 0.0
      %1497 = vmatmul.mubr.f32.gmra.mxu0 %v1292
      %v1498 = vpop.f32.mrf.mxu0
      %v1499 = vadd.f32 %v1175, %v1498
      %v1500 = vpop.f32.mrf.mxu0
      %1501 = vmatprep.mubr.f32.mxu0 0.0
      %1502 = vmatmul.mubr.f32.gmra.mxu0 %v1295
      %v1503 = vpop.f32.mrf.mxu0
      %v1504 = vadd.f32 %v1180, %v1503
      %v1505 = vpop.f32.mrf.mxu0
      %1506 = vmatprep.mubr.f32.mxu0 0.0
      %1507 = vmatmul.mubr.f32.gmra.mxu0 %v1298
      %v1508 = vpop.f32.mrf.mxu0
      %v1509 = vadd.f32 %v1185, %v1508
      %v1510 = vpop.f32.mrf.mxu0
      %1511 = vmatprep.mubr.f32.mxu0 0.0
      %1512 = vmatmul.mubr.f32.gmra.mxu0 %v1301
      %v1513 = vpop.f32.mrf.mxu0
      %v1514 = vadd.f32 %v1190, %v1513
      %v1515 = vpop.f32.mrf.mxu0
      %1516 = vmatprep.mubr.f32.mxu0 0.0
      %1517 = vmatmul.mubr.f32.gmra.mxu0 %v1304
      %v1518 = vpop.f32.mrf.mxu0
      %v1519 = vadd.f32 %v1195, %v1518
      %v1520 = vpop.f32.mrf.mxu0
      %1521 = vmatprep.mubr.f32.mxu0 0.0
      %1522 = vmatmul.mubr.f32.gmra.mxu0 %v1307
      %v1523 = vpop.f32.mrf.mxu0
      %v1524 = vadd.f32 %v1200, %v1523
      %v1525 = vpop.f32.mrf.mxu0
      %1526 = vmatprep.mubr.f32.mxu0 0.0
      %1527 = vmatmul.mubr.f32.gmra.mxu0 %v1310
      %v1528 = vpop.f32.mrf.mxu0
      %v1529 = vadd.f32 %v1205, %v1528
      %v1530 = vpop.f32.mrf.mxu0
      %1531 = vmatprep.mubr.f32.mxu0 0.0
      %1532 = vmatmul.mubr.f32.gmra.mxu0 %v1313
      %v1533 = vpop.f32.mrf.mxu0
      %v1534 = vadd.f32 %v1210, %v1533
      %v1535 = vpop.f32.mrf.mxu0
      %1536 = vmatprep.mubr.f32.mxu0 0.0
      %1537 = vmatmul.mubr.f32.gmra.mxu0 %v1316
      %v1538 = vpop.f32.mrf.mxu0
      %v1539 = vadd.f32 %v1215, %v1538
      %v1540 = vpop.f32.mrf.mxu0
      %1541 = vmatprep.mubr.f32.mxu0 0.0
      %1542 = vmatmul.mubr.f32.gmra.mxu0 %v1319
      %v1543 = vpop.f32.mrf.mxu0
      %v1544 = vadd.f32 %v1220, %v1543
      %v1545 = vpop.f32.mrf.mxu0
      %1546 = vmatprep.mubr.f32.mxu0 0.0
      %1547 = vmatmul.mubr.f32.gmra.mxu0 %v1322
      %v1548 = vpop.f32.mrf.mxu0
      %v1549 = vadd.f32 %v1225, %v1548
      %v1550 = vpop.f32.mrf.mxu0
      %1551 = vdwg.mxu0
      %v1552 = vld [vmem:[#allocation2 + $0x9] sm:$0xff]
      %v1553 = vld [vmem:[#allocation2 + $0x11] sm:$0xff]
      %v1554 = vld [vmem:[#allocation2 + $0x19] sm:$0xff]
      %v1555 = vld [vmem:[#allocation2 + $0x21] sm:$0xff]
      %v1556 = vld [vmem:[#allocation2 + $0x29] sm:$0xff]
      %v1557 = vld [vmem:[#allocation2 + $0x31] sm:$0xff]
      %v1558 = vld [vmem:[#allocation2 + $0x39] sm:$0xff]
      %v1559 = vld [vmem:[#allocation2 + $0x41] sm:$0xff]
      %v1560 = vld [vmem:[#allocation2 + $0x49] sm:$0xff]
      %v1561 = vld [vmem:[#allocation2 + $0x51] sm:$0xff]
      %v1562 = vld [vmem:[#allocation2 + $0x59] sm:$0xff]
      %v1563 = vld [vmem:[#allocation2 + $0x61] sm:$0xff]
      %v1564 = vld [vmem:[#allocation2 + $0x69] sm:$0xff]
      %v1565 = vld [vmem:[#allocation2 + $0x71] sm:$0xff]
      %v1566 = vld [vmem:[#allocation2 + $0x79] sm:$0xff]
      %v1567 = vld [vmem:[#allocation2 + $0x81] sm:$0xff]
      %v1568 = vld [vmem:[#allocation2 + $0x89] sm:$0xff]
      %v1569 = vld [vmem:[#allocation2 + $0x91] sm:$0xff]
      %v1570 = vld [vmem:[#allocation2 + $0x99] sm:$0xff]
      %v1571 = vld [vmem:[#allocation2 + $0xa1] sm:$0xff]
      %v1572 = vld [vmem:[#allocation2 + $0xa9] sm:$0xff]
      %v1573 = vld [vmem:[#allocation2 + $0xb1] sm:$0xff]
      %v1574 = vld [vmem:[#allocation2 + $0xb9] sm:$0xff]
      %v1575 = vld [vmem:[#allocation2 + $0xc1] sm:$0xff]
      %v1576 = vld [vmem:[#allocation2 + $0xc9] sm:$0xff]
      %v1577 = vld [vmem:[#allocation2 + $0xd1] sm:$0xff]
      %v1578 = vld [vmem:[#allocation2 + $0xd9] sm:$0xff]
      %v1579 = vld [vmem:[#allocation2 + $0xe1] sm:$0xff]
      %v1580 = vld [vmem:[#allocation2 + $0xe9] sm:$0xff]
      %v1581 = vld [vmem:[#allocation2 + $0xf1] sm:$0xff]
      %v1582 = vld [vmem:[#allocation2 + $0xf9] sm:$0xff]
      %v1583 = vld [vmem:[#allocation2 + $0x101] sm:$0xff]
      %v1584 = vsel %vm772, %v1552, 0.0
      %v1585 = vsel %vm773, %v1553, 0.0
      %v1586 = vsel %vm774, %v1554, 0.0
      %v1587 = vsel %vm775, %v1555, 0.0
      %v1588 = vsel %vm776, %v1556, 0.0
      %v1589 = vsel %vm777, %v1557, 0.0
      %v1590 = vsel %vm778, %v1558, 0.0
      %v1591 = vsel %vm779, %v1559, 0.0
      %v1592 = vsel %vm780, %v1560, 0.0
      %v1593 = vsel %vm781, %v1561, 0.0
      %v1594 = vsel %vm782, %v1562, 0.0
      %v1595 = vsel %vm783, %v1563, 0.0
      %v1596 = vsel %vm784, %v1564, 0.0
      %v1597 = vsel %vm785, %v1565, 0.0
      %v1598 = vsel %vm786, %v1566, 0.0
      %v1599 = vsel %vm787, %v1567, 0.0
      %v1600 = vsel %vm788, %v1568, 0.0
      %v1601 = vsel %vm789, %v1569, 0.0
      %v1602 = vsel %vm790, %v1570, 0.0
      %v1603 = vsel %vm791, %v1571, 0.0
      %v1604 = vsel %vm792, %v1572, 0.0
      %v1605 = vsel %vm793, %v1573, 0.0
      %v1606 = vsel %vm794, %v1574, 0.0
      %v1607 = vsel %vm795, %v1575, 0.0
      %v1608 = vsel %vm796, %v1576, 0.0
      %v1609 = vsel %vm797, %v1577, 0.0
      %v1610 = vsel %vm798, %v1578, 0.0
      %v1611 = vsel %vm799, %v1579, 0.0
      %v1612 = vsel %vm800, %v1580, 0.0
      %v1613 = vsel %vm801, %v1581, 0.0
      %v1614 = vsel %vm802, %v1582, 0.0
      %v1615 = vsel %vm803, %v1583, 0.0
      %s1616 = scalar_lea.vmem %s1, 8
      %v1617 = vld [vmem:[%s1616] sm:$0xf]
      %v1619 = vsel %vm284, %v1584, 0
      %v1622 = vsel %vm284, %v1585, 0
      %v1625 = vsel %vm284, %v1586, 0
      %v1628 = vsel %vm284, %v1587, 0
      %v1631 = vsel %vm284, %v1588, 0
      %v1634 = vsel %vm284, %v1589, 0
      %v1637 = vsel %vm284, %v1590, 0
      %v1640 = vsel %vm284, %v1591, 0
      %v1643 = vsel %vm284, %v1592, 0
      %v1646 = vsel %vm284, %v1593, 0
      %v1649 = vsel %vm284, %v1594, 0
      %v1652 = vsel %vm284, %v1595, 0
      %v1655 = vsel %vm284, %v1596, 0
      %v1658 = vsel %vm284, %v1597, 0
      %v1661 = vsel %vm284, %v1598, 0
      %v1664 = vsel %vm284, %v1599, 0
      %v1667 = vsel %vm284, %v1600, 0
      %v1670 = vsel %vm284, %v1601, 0
      %v1673 = vsel %vm284, %v1602, 0
      %v1676 = vsel %vm284, %v1603, 0
      %v1679 = vsel %vm284, %v1604, 0
      %v1682 = vsel %vm284, %v1605, 0
      %v1685 = vsel %vm284, %v1606, 0
      %v1688 = vsel %vm284, %v1607, 0
      %v1691 = vsel %vm284, %v1608, 0
      %v1694 = vsel %vm284, %v1609, 0
      %v1697 = vsel %vm284, %v1610, 0
      %v1700 = vsel %vm284, %v1611, 0
      %v1703 = vsel %vm284, %v1612, 0
      %v1706 = vsel %vm284, %v1613, 0
      %v1709 = vsel %vm284, %v1614, 0
      %v1712 = vsel %vm284, %v1615, 0
      %v1715 = vsel %vm999, %v1617, 0
      %1717 = vmatprep.subr.mxu0 0.0
      %1718 = vmatpush1.msra.mxu0 0.0
      %1719 = vmatprep.subr.mxu0 0.0
      %1720 = vmatpush1.msra.mxu0 0.0
      %1721 = vmatprep.subr.mxu0 0.0
      %1722 = vmatpush1.msra.mxu0 0.0
      %1723 = vmatprep.subr.mxu0 0.0
      %1724 = vmatpush1.msra.mxu0 0.0
      %1725 = vmatprep.subr.mxu0 0.0
      %1726 = vmatpush1.msra.mxu0 0.0
      %1727 = vmatprep.subr.mxu0 0.0
      %1728 = vmatpush1.msra.mxu0 0.0
      %1729 = vmatprep.subr.mxu0 0.0
      %1730 = vmatpush1.msra.mxu0 0.0
      %1731 = vmatprep.subr.mxu0 0.0
      %1732 = vmatpush1.msra.mxu0 0.0
      %1733 = vmatprep.subr.mxu0 0.0
      %1734 = vmatpush1.msra.mxu0 0.0
      %1735 = vmatprep.subr.mxu0 0.0
      %1736 = vmatpush1.msra.mxu0 0.0
      %1737 = vmatprep.subr.mxu0 0.0
      %1738 = vmatpush1.msra.mxu0 0.0
      %1739 = vmatprep.subr.mxu0 0.0
      %1740 = vmatpush1.msra.mxu0 0.0
      %1741 = vmatprep.subr.mxu0 0.0
      %1742 = vmatpush1.msra.mxu0 0.0
      %1743 = vmatprep.subr.mxu0 0.0
      %1744 = vmatpush1.msra.mxu0 0.0
      %1745 = vmatprep.subr.mxu0 0.0
      %1746 = vmatpush1.msra.mxu0 0.0
      %1747 = vmatprep.subr.mxu0 0.0
      %1748 = vmatpush1.msra.mxu0 %v1715
      %1749 = vmatprep.subr.mxu0 0.0
      %1750 = vmatpush2.msra.mxu0 0.0
      %1751 = vmatprep.subr.mxu0 0.0
      %1752 = vmatpush2.msra.mxu0 0.0
      %1753 = vmatprep.subr.mxu0 0.0
      %1754 = vmatpush2.msra.mxu0 0.0
      %1755 = vmatprep.subr.mxu0 0.0
      %1756 = vmatpush2.msra.mxu0 0.0
      %1757 = vmatprep.subr.mxu0 0.0
      %1758 = vmatpush2.msra.mxu0 0.0
      %1759 = vmatprep.subr.mxu0 0.0
      %1760 = vmatpush2.msra.mxu0 0.0
      %1761 = vmatprep.subr.mxu0 0.0
      %1762 = vmatpush2.msra.mxu0 0.0
      %1763 = vmatprep.subr.mxu0 0.0
      %1764 = vmatpush2.msra.mxu0 0.0
      %1765 = vmatprep.subr.mxu0 0.0
      %1766 = vmatpush2.msra.mxu0 0.0
      %1767 = vmatprep.subr.mxu0 0.0
      %1768 = vmatpush2.msra.mxu0 0.0
      %1769 = vmatprep.subr.mxu0 0.0
      %1770 = vmatpush2.msra.mxu0 0.0
      %1771 = vmatprep.subr.mxu0 0.0
      %1772 = vmatpush2.msra.mxu0 0.0
      %1773 = vmatprep.subr.mxu0 0.0
      %1774 = vmatpush2.msra.mxu0 0.0
      %1775 = vmatprep.subr.mxu0 0.0
      %1776 = vmatpush2.msra.mxu0 0.0
      %1777 = vmatprep.subr.mxu0 0.0
      %1778 = vmatpush2.msra.mxu0 0.0
      %1779 = vmatprep.subr.mxu0 0.0
      %1780 = vmatpush2.msra.mxu0 0.0
      %1781 = vmatprep.mubr.f32.mxu0 0.0
      %1782 = vmatmul.mubr.f32.gmra.mxu0 %v1619
      %v1783 = vpop.f32.mrf.mxu0
      %v1784 = vadd.f32 0.0, %v1783
      %v1785 = vpop.f32.mrf.mxu0
      %1786 = vmatprep.mubr.f32.mxu0 0.0
      %1787 = vmatmul.mubr.f32.gmra.mxu0 %v1622
      %v1788 = vpop.f32.mrf.mxu0
      %v1789 = vadd.f32 0.0, %v1788
      %v1790 = vpop.f32.mrf.mxu0
      %1791 = vmatprep.mubr.f32.mxu0 0.0
      %1792 = vmatmul.mubr.f32.gmra.mxu0 %v1625
      %v1793 = vpop.f32.mrf.mxu0
      %v1794 = vadd.f32 0.0, %v1793
      %v1795 = vpop.f32.mrf.mxu0
      %1796 = vmatprep.mubr.f32.mxu0 0.0
      %1797 = vmatmul.mubr.f32.gmra.mxu0 %v1628
      %v1798 = vpop.f32.mrf.mxu0
      %v1799 = vadd.f32 0.0, %v1798
      %v1800 = vpop.f32.mrf.mxu0
      %1801 = vmatprep.mubr.f32.mxu0 0.0
      %1802 = vmatmul.mubr.f32.gmra.mxu0 %v1631
      %v1803 = vpop.f32.mrf.mxu0
      %v1804 = vadd.f32 0.0, %v1803
      %v1805 = vpop.f32.mrf.mxu0
      %1806 = vmatprep.mubr.f32.mxu0 0.0
      %1807 = vmatmul.mubr.f32.gmra.mxu0 %v1634
      %v1808 = vpop.f32.mrf.mxu0
      %v1809 = vadd.f32 0.0, %v1808
      %v1810 = vpop.f32.mrf.mxu0
      %1811 = vmatprep.mubr.f32.mxu0 0.0
      %1812 = vmatmul.mubr.f32.gmra.mxu0 %v1637
      %v1813 = vpop.f32.mrf.mxu0
      %v1814 = vadd.f32 0.0, %v1813
      %v1815 = vpop.f32.mrf.mxu0
      %1816 = vmatprep.mubr.f32.mxu0 0.0
      %1817 = vmatmul.mubr.f32.gmra.mxu0 %v1640
      %v1818 = vpop.f32.mrf.mxu0
      %v1819 = vadd.f32 0.0, %v1818
      %v1820 = vpop.f32.mrf.mxu0
      %1821 = vmatprep.mubr.f32.mxu0 0.0
      %1822 = vmatmul.mubr.f32.gmra.mxu0 %v1643
      %v1823 = vpop.f32.mrf.mxu0
      %v1824 = vadd.f32 0.0, %v1823
      %v1825 = vpop.f32.mrf.mxu0
      %1826 = vmatprep.mubr.f32.mxu0 0.0
      %1827 = vmatmul.mubr.f32.gmra.mxu0 %v1646
      %v1828 = vpop.f32.mrf.mxu0
      %v1829 = vadd.f32 0.0, %v1828
      %v1830 = vpop.f32.mrf.mxu0
      %1831 = vmatprep.mubr.f32.mxu0 0.0
      %1832 = vmatmul.mubr.f32.gmra.mxu0 %v1649
      %v1833 = vpop.f32.mrf.mxu0
      %v1834 = vadd.f32 0.0, %v1833
      %v1835 = vpop.f32.mrf.mxu0
      %1836 = vmatprep.mubr.f32.mxu0 0.0
      %1837 = vmatmul.mubr.f32.gmra.mxu0 %v1652
      %v1838 = vpop.f32.mrf.mxu0
      %v1839 = vadd.f32 0.0, %v1838
      %v1840 = vpop.f32.mrf.mxu0
      %1841 = vmatprep.mubr.f32.mxu0 0.0
      %1842 = vmatmul.mubr.f32.gmra.mxu0 %v1655
      %v1843 = vpop.f32.mrf.mxu0
      %v1844 = vadd.f32 0.0, %v1843
      %v1845 = vpop.f32.mrf.mxu0
      %1846 = vmatprep.mubr.f32.mxu0 0.0
      %1847 = vmatmul.mubr.f32.gmra.mxu0 %v1658
      %v1848 = vpop.f32.mrf.mxu0
      %v1849 = vadd.f32 0.0, %v1848
      %v1850 = vpop.f32.mrf.mxu0
      %1851 = vmatprep.mubr.f32.mxu0 0.0
      %1852 = vmatmul.mubr.f32.gmra.mxu0 %v1661
      %v1853 = vpop.f32.mrf.mxu0
      %v1854 = vadd.f32 0.0, %v1853
      %v1855 = vpop.f32.mrf.mxu0
      %1856 = vmatprep.mubr.f32.mxu0 0.0
      %1857 = vmatmul.mubr.f32.gmra.mxu0 %v1664
      %v1858 = vpop.f32.mrf.mxu0
      %v1859 = vadd.f32 0.0, %v1858
      %v1860 = vpop.f32.mrf.mxu0
      %1861 = vmatprep.mubr.f32.mxu0 0.0
      %1862 = vmatmul.mubr.f32.gmra.mxu0 %v1667
      %v1863 = vpop.f32.mrf.mxu0
      %v1864 = vadd.f32 0.0, %v1863
      %v1865 = vpop.f32.mrf.mxu0
      %1866 = vmatprep.mubr.f32.mxu0 0.0
      %1867 = vmatmul.mubr.f32.gmra.mxu0 %v1670
      %v1868 = vpop.f32.mrf.mxu0
      %v1869 = vadd.f32 0.0, %v1868
      %v1870 = vpop.f32.mrf.mxu0
      %1871 = vmatprep.mubr.f32.mxu0 0.0
      %1872 = vmatmul.mubr.f32.gmra.mxu0 %v1673
      %v1873 = vpop.f32.mrf.mxu0
      %v1874 = vadd.f32 0.0, %v1873
      %v1875 = vpop.f32.mrf.mxu0
      %1876 = vmatprep.mubr.f32.mxu0 0.0
      %1877 = vmatmul.mubr.f32.gmra.mxu0 %v1676
      %v1878 = vpop.f32.mrf.mxu0
      %v1879 = vadd.f32 0.0, %v1878
      %v1880 = vpop.f32.mrf.mxu0
      %1881 = vmatprep.mubr.f32.mxu0 0.0
      %1882 = vmatmul.mubr.f32.gmra.mxu0 %v1679
      %v1883 = vpop.f32.mrf.mxu0
      %v1884 = vadd.f32 0.0, %v1883
      %v1885 = vpop.f32.mrf.mxu0
      %1886 = vmatprep.mubr.f32.mxu0 0.0
      %1887 = vmatmul.mubr.f32.gmra.mxu0 %v1682
      %v1888 = vpop.f32.mrf.mxu0
      %v1889 = vadd.f32 0.0, %v1888
      %v1890 = vpop.f32.mrf.mxu0
      %1891 = vmatprep.mubr.f32.mxu0 0.0
      %1892 = vmatmul.mubr.f32.gmra.mxu0 %v1685
      %v1893 = vpop.f32.mrf.mxu0
      %v1894 = vadd.f32 0.0, %v1893
      %v1895 = vpop.f32.mrf.mxu0
      %1896 = vmatprep.mubr.f32.mxu0 0.0
      %1897 = vmatmul.mubr.f32.gmra.mxu0 %v1688
      %v1898 = vpop.f32.mrf.mxu0
      %v1899 = vadd.f32 0.0, %v1898
      %v1900 = vpop.f32.mrf.mxu0
      %1901 = vmatprep.mubr.f32.mxu0 0.0
      %1902 = vmatmul.mubr.f32.gmra.mxu0 %v1691
      %v1903 = vpop.f32.mrf.mxu0
      %v1904 = vadd.f32 0.0, %v1903
      %v1905 = vpop.f32.mrf.mxu0
      %1906 = vmatprep.mubr.f32.mxu0 0.0
      %1907 = vmatmul.mubr.f32.gmra.mxu0 %v1694
      %v1908 = vpop.f32.mrf.mxu0
      %v1909 = vadd.f32 0.0, %v1908
      %v1910 = vpop.f32.mrf.mxu0
      %1911 = vmatprep.mubr.f32.mxu0 0.0
      %1912 = vmatmul.mubr.f32.gmra.mxu0 %v1697
      %v1913 = vpop.f32.mrf.mxu0
      %v1914 = vadd.f32 0.0, %v1913
      %v1915 = vpop.f32.mrf.mxu0
      %1916 = vmatprep.mubr.f32.mxu0 0.0
      %1917 = vmatmul.mubr.f32.gmra.mxu0 %v1700
      %v1918 = vpop.f32.mrf.mxu0
      %v1919 = vadd.f32 0.0, %v1918
      %v1920 = vpop.f32.mrf.mxu0
      %1921 = vmatprep.mubr.f32.mxu0 0.0
      %1922 = vmatmul.mubr.f32.gmra.mxu0 %v1703
      %v1923 = vpop.f32.mrf.mxu0
      %v1924 = vadd.f32 0.0, %v1923
      %v1925 = vpop.f32.mrf.mxu0
      %1926 = vmatprep.mubr.f32.mxu0 0.0
      %1927 = vmatmul.mubr.f32.gmra.mxu0 %v1706
      %v1928 = vpop.f32.mrf.mxu0
      %v1929 = vadd.f32 0.0, %v1928
      %v1930 = vpop.f32.mrf.mxu0
      %1931 = vmatprep.mubr.f32.mxu0 0.0
      %1932 = vmatmul.mubr.f32.gmra.mxu0 %v1709
      %v1933 = vpop.f32.mrf.mxu0
      %v1934 = vadd.f32 0.0, %v1933
      %v1935 = vpop.f32.mrf.mxu0
      %1936 = vmatprep.mubr.f32.mxu0 0.0
      %1937 = vmatmul.mubr.f32.gmra.mxu0 %v1712
      %v1938 = vpop.f32.mrf.mxu0
      %v1939 = vadd.f32 0.0, %v1938
      %v1940 = vpop.f32.mrf.mxu0
      %1941 = vdwg.mxu0
      %v1942 = vadd.f32 %v1394, %v1784
      %v1943 = vadd.f32 %v1399, %v1789
      %v1944 = vadd.f32 %v1404, %v1794
      %v1945 = vadd.f32 %v1409, %v1799
      %v1946 = vadd.f32 %v1414, %v1804
      %v1947 = vadd.f32 %v1419, %v1809
      %v1948 = vadd.f32 %v1424, %v1814
      %v1949 = vadd.f32 %v1429, %v1819
      %v1950 = vadd.f32 %v1434, %v1824
      %v1951 = vadd.f32 %v1439, %v1829
      %v1952 = vadd.f32 %v1444, %v1834
      %v1953 = vadd.f32 %v1449, %v1839
      %v1954 = vadd.f32 %v1454, %v1844
      %v1955 = vadd.f32 %v1459, %v1849
      %v1956 = vadd.f32 %v1464, %v1854
      %v1957 = vadd.f32 %v1469, %v1859
      %v1958 = vadd.f32 %v1474, %v1864
      %v1959 = vadd.f32 %v1479, %v1869
      %v1960 = vadd.f32 %v1484, %v1874
      %v1961 = vadd.f32 %v1489, %v1879
      %v1962 = vadd.f32 %v1494, %v1884
      %v1963 = vadd.f32 %v1499, %v1889
      %v1964 = vadd.f32 %v1504, %v1894
      %v1965 = vadd.f32 %v1509, %v1899
      %v1966 = vadd.f32 %v1514, %v1904
      %v1967 = vadd.f32 %v1519, %v1909
      %v1968 = vadd.f32 %v1524, %v1914
      %v1969 = vadd.f32 %v1529, %v1919
      %v1970 = vadd.f32 %v1534, %v1924
      %v1971 = vadd.f32 %v1539, %v1929
      %v1972 = vadd.f32 %v1544, %v1934
      %v1973 = vadd.f32 %v1549, %v1939
      %v1974 = vld [vmem:[#allocation2 + $0x17] sm:$0xff]
      %v1975 = vld [vmem:[#allocation2 + $0x1f] sm:$0xff]
      %v1976 = vld [vmem:[#allocation2 + $0x27] sm:$0xff]
      %v1977 = vld [vmem:[#allocation2 + $0x2f] sm:$0xff]
      %v1978 = vld [vmem:[#allocation2 + $0x37] sm:$0xff]
      %v1979 = vld [vmem:[#allocation2 + $0x3f] sm:$0xff]
      %v1980 = vld [vmem:[#allocation2 + $0x47] sm:$0xff]
      %v1981 = vld [vmem:[#allocation2 + $0x4f] sm:$0xff]
      %v1982 = vld [vmem:[#allocation2 + $0x57] sm:$0xff]
      %v1983 = vld [vmem:[#allocation2 + $0x5f] sm:$0xff]
      %v1984 = vld [vmem:[#allocation2 + $0x67] sm:$0xff]
      %v1985 = vld [vmem:[#allocation2 + $0x6f] sm:$0xff]
      %v1986 = vld [vmem:[#allocation2 + $0x77] sm:$0xff]
      %v1987 = vld [vmem:[#allocation2 + $0x7f] sm:$0xff]
      %v1988 = vld [vmem:[#allocation2 + $0x87] sm:$0xff]
      %v1989 = vld [vmem:[#allocation2 + $0x8f] sm:$0xff]
      %v1990 = vld [vmem:[#allocation2 + $0x97] sm:$0xff]
      %v1991 = vld [vmem:[#allocation2 + $0x9f] sm:$0xff]
      %v1992 = vld [vmem:[#allocation2 + $0xa7] sm:$0xff]
      %v1993 = vld [vmem:[#allocation2 + $0xaf] sm:$0xff]
      %v1994 = vld [vmem:[#allocation2 + $0xb7] sm:$0xff]
      %v1995 = vld [vmem:[#allocation2 + $0xbf] sm:$0xff]
      %v1996 = vld [vmem:[#allocation2 + $0xc7] sm:$0xff]
      %v1997 = vld [vmem:[#allocation2 + $0xcf] sm:$0xff]
      %v1998 = vld [vmem:[#allocation2 + $0xd7] sm:$0xff]
      %v1999 = vld [vmem:[#allocation2 + $0xdf] sm:$0xff]
      %v2000 = vld [vmem:[#allocation2 + $0xe7] sm:$0xff]
      %v2001 = vld [vmem:[#allocation2 + $0xef] sm:$0xff]
      %v2002 = vld [vmem:[#allocation2 + $0xf7] sm:$0xff]
      %v2003 = vld [vmem:[#allocation2 + $0xff] sm:$0xff]
      %v2004 = vld [vmem:[#allocation2 + $0x107] sm:$0xff]
      %v2005 = vld [vmem:[#allocation2 + $0x10f] sm:$0xff]
      %v2006 = vsel %vm740, %v1974, 0.0
      %v2007 = vsel %vm741, %v1975, 0.0
      %v2008 = vsel %vm742, %v1976, 0.0
      %v2009 = vsel %vm743, %v1977, 0.0
      %v2010 = vsel %vm744, %v1978, 0.0
      %v2011 = vsel %vm745, %v1979, 0.0
      %v2012 = vsel %vm746, %v1980, 0.0
      %v2013 = vsel %vm747, %v1981, 0.0
      %v2014 = vsel %vm748, %v1982, 0.0
      %v2015 = vsel %vm749, %v1983, 0.0
      %v2016 = vsel %vm750, %v1984, 0.0
      %v2017 = vsel %vm751, %v1985, 0.0
      %v2018 = vsel %vm752, %v1986, 0.0
      %v2019 = vsel %vm753, %v1987, 0.0
      %v2020 = vsel %vm754, %v1988, 0.0
      %v2021 = vsel %vm755, %v1989, 0.0
      %v2022 = vsel %vm756, %v1990, 0.0
      %v2023 = vsel %vm757, %v1991, 0.0
      %v2024 = vsel %vm758, %v1992, 0.0
      %v2025 = vsel %vm759, %v1993, 0.0
      %v2026 = vsel %vm760, %v1994, 0.0
      %v2027 = vsel %vm761, %v1995, 0.0
      %v2028 = vsel %vm762, %v1996, 0.0
      %v2029 = vsel %vm763, %v1997, 0.0
      %v2030 = vsel %vm764, %v1998, 0.0
      %v2031 = vsel %vm765, %v1999, 0.0
      %v2032 = vsel %vm766, %v2000, 0.0
      %v2033 = vsel %vm767, %v2001, 0.0
      %v2034 = vsel %vm768, %v2002, 0.0
      %v2035 = vsel %vm769, %v2003, 0.0
      %v2036 = vsel %vm770, %v2004, 0.0
      %v2037 = vsel %vm771, %v2005, 0.0
      %s2038 = scalar_lea.vmem %s1, 12
      %v2039 = vld [vmem:[%s2038] sm:$0xf]
      %v2041 = vsel %vm284, %v2006, 0
      %v2044 = vsel %vm284, %v2007, 0
      %v2047 = vsel %vm284, %v2008, 0
      %v2050 = vsel %vm284, %v2009, 0
      %v2053 = vsel %vm284, %v2010, 0
      %v2056 = vsel %vm284, %v2011, 0
      %v2059 = vsel %vm284, %v2012, 0
      %v2062 = vsel %vm284, %v2013, 0
      %v2065 = vsel %vm284, %v2014, 0
      %v2068 = vsel %vm284, %v2015, 0
      %v2071 = vsel %vm284, %v2016, 0
      %v2074 = vsel %vm284, %v2017, 0
      %v2077 = vsel %vm284, %v2018, 0
      %v2080 = vsel %vm284, %v2019, 0
      %v2083 = vsel %vm284, %v2020, 0
      %v2086 = vsel %vm284, %v2021, 0
      %v2089 = vsel %vm284, %v2022, 0
      %v2092 = vsel %vm284, %v2023, 0
      %v2095 = vsel %vm284, %v2024, 0
      %v2098 = vsel %vm284, %v2025, 0
      %v2101 = vsel %vm284, %v2026, 0
      %v2104 = vsel %vm284, %v2027, 0
      %v2107 = vsel %vm284, %v2028, 0
      %v2110 = vsel %vm284, %v2029, 0
      %v2113 = vsel %vm284, %v2030, 0
      %v2116 = vsel %vm284, %v2031, 0
      %v2119 = vsel %vm284, %v2032, 0
      %v2122 = vsel %vm284, %v2033, 0
      %v2125 = vsel %vm284, %v2034, 0
      %v2128 = vsel %vm284, %v2035, 0
      %v2131 = vsel %vm284, %v2036, 0
      %v2134 = vsel %vm284, %v2037, 0
      %v2137 = vsel %vm999, %v2039, 0
      %2139 = vmatprep.subr.mxu0 0.0
      %2140 = vmatpush1.msra.mxu0 0.0
      %2141 = vmatprep.subr.mxu0 0.0
      %2142 = vmatpush1.msra.mxu0 0.0
      %2143 = vmatprep.subr.mxu0 0.0
      %2144 = vmatpush1.msra.mxu0 0.0
      %2145 = vmatprep.subr.mxu0 0.0
      %2146 = vmatpush1.msra.mxu0 0.0
      %2147 = vmatprep.subr.mxu0 0.0
      %2148 = vmatpush1.msra.mxu0 0.0
      %2149 = vmatprep.subr.mxu0 0.0
      %2150 = vmatpush1.msra.mxu0 0.0
      %2151 = vmatprep.subr.mxu0 0.0
      %2152 = vmatpush1.msra.mxu0 0.0
      %2153 = vmatprep.subr.mxu0 0.0
      %2154 = vmatpush1.msra.mxu0 0.0
      %2155 = vmatprep.subr.mxu0 0.0
      %2156 = vmatpush1.msra.mxu0 0.0
      %2157 = vmatprep.subr.mxu0 0.0
      %2158 = vmatpush1.msra.mxu0 0.0
      %2159 = vmatprep.subr.mxu0 0.0
      %2160 = vmatpush1.msra.mxu0 0.0
      %2161 = vmatprep.subr.mxu0 0.0
      %2162 = vmatpush1.msra.mxu0 0.0
      %2163 = vmatprep.subr.mxu0 0.0
      %2164 = vmatpush1.msra.mxu0 0.0
      %2165 = vmatprep.subr.mxu0 0.0
      %2166 = vmatpush1.msra.mxu0 0.0
      %2167 = vmatprep.subr.mxu0 0.0
      %2168 = vmatpush1.msra.mxu0 0.0
      %2169 = vmatprep.subr.mxu0 0.0
      %2170 = vmatpush1.msra.mxu0 %v2137
      %2171 = vmatprep.subr.mxu0 0.0
      %2172 = vmatpush2.msra.mxu0 0.0
      %2173 = vmatprep.subr.mxu0 0.0
      %2174 = vmatpush2.msra.mxu0 0.0
      %2175 = vmatprep.subr.mxu0 0.0
      %2176 = vmatpush2.msra.mxu0 0.0
      %2177 = vmatprep.subr.mxu0 0.0
      %2178 = vmatpush2.msra.mxu0 0.0
      %2179 = vmatprep.subr.mxu0 0.0
      %2180 = vmatpush2.msra.mxu0 0.0
      %2181 = vmatprep.subr.mxu0 0.0
      %2182 = vmatpush2.msra.mxu0 0.0
      %2183 = vmatprep.subr.mxu0 0.0
      %2184 = vmatpush2.msra.mxu0 0.0
      %2185 = vmatprep.subr.mxu0 0.0
      %2186 = vmatpush2.msra.mxu0 0.0
      %2187 = vmatprep.subr.mxu0 0.0
      %2188 = vmatpush2.msra.mxu0 0.0
      %2189 = vmatprep.subr.mxu0 0.0
      %2190 = vmatpush2.msra.mxu0 0.0
      %2191 = vmatprep.subr.mxu0 0.0
      %2192 = vmatpush2.msra.mxu0 0.0
      %2193 = vmatprep.subr.mxu0 0.0
      %2194 = vmatpush2.msra.mxu0 0.0
      %2195 = vmatprep.subr.mxu0 0.0
      %2196 = vmatpush2.msra.mxu0 0.0
      %2197 = vmatprep.subr.mxu0 0.0
      %2198 = vmatpush2.msra.mxu0 0.0
      %2199 = vmatprep.subr.mxu0 0.0
      %2200 = vmatpush2.msra.mxu0 0.0
      %2201 = vmatprep.subr.mxu0 0.0
      %2202 = vmatpush2.msra.mxu0 0.0
      %2203 = vmatprep.mubr.f32.mxu0 0.0
      %2204 = vmatmul.mubr.f32.gmra.mxu0 %v2041
      %v2205 = vpop.f32.mrf.mxu0
      %v2206 = vadd.f32 0.0, %v2205
      %v2207 = vpop.f32.mrf.mxu0
      %2208 = vmatprep.mubr.f32.mxu0 0.0
      %2209 = vmatmul.mubr.f32.gmra.mxu0 %v2044
      %v2210 = vpop.f32.mrf.mxu0
      %v2211 = vadd.f32 0.0, %v2210
      %v2212 = vpop.f32.mrf.mxu0
      %2213 = vmatprep.mubr.f32.mxu0 0.0
      %2214 = vmatmul.mubr.f32.gmra.mxu0 %v2047
      %v2215 = vpop.f32.mrf.mxu0
      %v2216 = vadd.f32 0.0, %v2215
      %v2217 = vpop.f32.mrf.mxu0
      %2218 = vmatprep.mubr.f32.mxu0 0.0
      %2219 = vmatmul.mubr.f32.gmra.mxu0 %v2050
      %v2220 = vpop.f32.mrf.mxu0
      %v2221 = vadd.f32 0.0, %v2220
      %v2222 = vpop.f32.mrf.mxu0
      %2223 = vmatprep.mubr.f32.mxu0 0.0
      %2224 = vmatmul.mubr.f32.gmra.mxu0 %v2053
      %v2225 = vpop.f32.mrf.mxu0
      %v2226 = vadd.f32 0.0, %v2225
      %v2227 = vpop.f32.mrf.mxu0
      %2228 = vmatprep.mubr.f32.mxu0 0.0
      %2229 = vmatmul.mubr.f32.gmra.mxu0 %v2056
      %v2230 = vpop.f32.mrf.mxu0
      %v2231 = vadd.f32 0.0, %v2230
      %v2232 = vpop.f32.mrf.mxu0
      %2233 = vmatprep.mubr.f32.mxu0 0.0
      %2234 = vmatmul.mubr.f32.gmra.mxu0 %v2059
      %v2235 = vpop.f32.mrf.mxu0
      %v2236 = vadd.f32 0.0, %v2235
      %v2237 = vpop.f32.mrf.mxu0
      %2238 = vmatprep.mubr.f32.mxu0 0.0
      %2239 = vmatmul.mubr.f32.gmra.mxu0 %v2062
      %v2240 = vpop.f32.mrf.mxu0
      %v2241 = vadd.f32 0.0, %v2240
      %v2242 = vpop.f32.mrf.mxu0
      %2243 = vmatprep.mubr.f32.mxu0 0.0
      %2244 = vmatmul.mubr.f32.gmra.mxu0 %v2065
      %v2245 = vpop.f32.mrf.mxu0
      %v2246 = vadd.f32 0.0, %v2245
      %v2247 = vpop.f32.mrf.mxu0
      %2248 = vmatprep.mubr.f32.mxu0 0.0
      %2249 = vmatmul.mubr.f32.gmra.mxu0 %v2068
      %v2250 = vpop.f32.mrf.mxu0
      %v2251 = vadd.f32 0.0, %v2250
      %v2252 = vpop.f32.mrf.mxu0
      %2253 = vmatprep.mubr.f32.mxu0 0.0
      %2254 = vmatmul.mubr.f32.gmra.mxu0 %v2071
      %v2255 = vpop.f32.mrf.mxu0
      %v2256 = vadd.f32 0.0, %v2255
      %v2257 = vpop.f32.mrf.mxu0
      %2258 = vmatprep.mubr.f32.mxu0 0.0
      %2259 = vmatmul.mubr.f32.gmra.mxu0 %v2074
      %v2260 = vpop.f32.mrf.mxu0
      %v2261 = vadd.f32 0.0, %v2260
      %v2262 = vpop.f32.mrf.mxu0
      %2263 = vmatprep.mubr.f32.mxu0 0.0
      %2264 = vmatmul.mubr.f32.gmra.mxu0 %v2077
      %v2265 = vpop.f32.mrf.mxu0
      %v2266 = vadd.f32 0.0, %v2265
      %v2267 = vpop.f32.mrf.mxu0
      %2268 = vmatprep.mubr.f32.mxu0 0.0
      %2269 = vmatmul.mubr.f32.gmra.mxu0 %v2080
      %v2270 = vpop.f32.mrf.mxu0
      %v2271 = vadd.f32 0.0, %v2270
      %v2272 = vpop.f32.mrf.mxu0
      %2273 = vmatprep.mubr.f32.mxu0 0.0
      %2274 = vmatmul.mubr.f32.gmra.mxu0 %v2083
      %v2275 = vpop.f32.mrf.mxu0
      %v2276 = vadd.f32 0.0, %v2275
      %v2277 = vpop.f32.mrf.mxu0
      %2278 = vmatprep.mubr.f32.mxu0 0.0
      %2279 = vmatmul.mubr.f32.gmra.mxu0 %v2086
      %v2280 = vpop.f32.mrf.mxu0
      %v2281 = vadd.f32 0.0, %v2280
      %v2282 = vpop.f32.mrf.mxu0
      %2283 = vmatprep.mubr.f32.mxu0 0.0
      %2284 = vmatmul.mubr.f32.gmra.mxu0 %v2089
      %v2285 = vpop.f32.mrf.mxu0
      %v2286 = vadd.f32 0.0, %v2285
      %v2287 = vpop.f32.mrf.mxu0
      %2288 = vmatprep.mubr.f32.mxu0 0.0
      %2289 = vmatmul.mubr.f32.gmra.mxu0 %v2092
      %v2290 = vpop.f32.mrf.mxu0
      %v2291 = vadd.f32 0.0, %v2290
      %v2292 = vpop.f32.mrf.mxu0
      %2293 = vmatprep.mubr.f32.mxu0 0.0
      %2294 = vmatmul.mubr.f32.gmra.mxu0 %v2095
      %v2295 = vpop.f32.mrf.mxu0
      %v2296 = vadd.f32 0.0, %v2295
      %v2297 = vpop.f32.mrf.mxu0
      %2298 = vmatprep.mubr.f32.mxu0 0.0
      %2299 = vmatmul.mubr.f32.gmra.mxu0 %v2098
      %v2300 = vpop.f32.mrf.mxu0
      %v2301 = vadd.f32 0.0, %v2300
      %v2302 = vpop.f32.mrf.mxu0
      %2303 = vmatprep.mubr.f32.mxu0 0.0
      %2304 = vmatmul.mubr.f32.gmra.mxu0 %v2101
      %v2305 = vpop.f32.mrf.mxu0
      %v2306 = vadd.f32 0.0, %v2305
      %v2307 = vpop.f32.mrf.mxu0
      %2308 = vmatprep.mubr.f32.mxu0 0.0
      %2309 = vmatmul.mubr.f32.gmra.mxu0 %v2104
      %v2310 = vpop.f32.mrf.mxu0
      %v2311 = vadd.f32 0.0, %v2310
      %v2312 = vpop.f32.mrf.mxu0
      %2313 = vmatprep.mubr.f32.mxu0 0.0
      %2314 = vmatmul.mubr.f32.gmra.mxu0 %v2107
      %v2315 = vpop.f32.mrf.mxu0
      %v2316 = vadd.f32 0.0, %v2315
      %v2317 = vpop.f32.mrf.mxu0
      %2318 = vmatprep.mubr.f32.mxu0 0.0
      %2319 = vmatmul.mubr.f32.gmra.mxu0 %v2110
      %v2320 = vpop.f32.mrf.mxu0
      %v2321 = vadd.f32 0.0, %v2320
      %v2322 = vpop.f32.mrf.mxu0
      %2323 = vmatprep.mubr.f32.mxu0 0.0
      %2324 = vmatmul.mubr.f32.gmra.mxu0 %v2113
      %v2325 = vpop.f32.mrf.mxu0
      %v2326 = vadd.f32 0.0, %v2325
      %v2327 = vpop.f32.mrf.mxu0
      %2328 = vmatprep.mubr.f32.mxu0 0.0
      %2329 = vmatmul.mubr.f32.gmra.mxu0 %v2116
      %v2330 = vpop.f32.mrf.mxu0
      %v2331 = vadd.f32 0.0, %v2330
      %v2332 = vpop.f32.mrf.mxu0
      %2333 = vmatprep.mubr.f32.mxu0 0.0
      %2334 = vmatmul.mubr.f32.gmra.mxu0 %v2119
      %v2335 = vpop.f32.mrf.mxu0
      %v2336 = vadd.f32 0.0, %v2335
      %v2337 = vpop.f32.mrf.mxu0
      %2338 = vmatprep.mubr.f32.mxu0 0.0
      %2339 = vmatmul.mubr.f32.gmra.mxu0 %v2122
      %v2340 = vpop.f32.mrf.mxu0
      %v2341 = vadd.f32 0.0, %v2340
      %v2342 = vpop.f32.mrf.mxu0
      %2343 = vmatprep.mubr.f32.mxu0 0.0
      %2344 = vmatmul.mubr.f32.gmra.mxu0 %v2125
      %v2345 = vpop.f32.mrf.mxu0
      %v2346 = vadd.f32 0.0, %v2345
      %v2347 = vpop.f32.mrf.mxu0
      %2348 = vmatprep.mubr.f32.mxu0 0.0
      %2349 = vmatmul.mubr.f32.gmra.mxu0 %v2128
      %v2350 = vpop.f32.mrf.mxu0
      %v2351 = vadd.f32 0.0, %v2350
      %v2352 = vpop.f32.mrf.mxu0
      %2353 = vmatprep.mubr.f32.mxu0 0.0
      %2354 = vmatmul.mubr.f32.gmra.mxu0 %v2131
      %v2355 = vpop.f32.mrf.mxu0
      %v2356 = vadd.f32 0.0, %v2355
      %v2357 = vpop.f32.mrf.mxu0
      %2358 = vmatprep.mubr.f32.mxu0 0.0
      %2359 = vmatmul.mubr.f32.gmra.mxu0 %v2134
      %v2360 = vpop.f32.mrf.mxu0
      %v2361 = vadd.f32 0.0, %v2360
      %v2362 = vpop.f32.mrf.mxu0
      %2363 = vdwg.mxu0
      %v2364 = vadd.f32 %v1942, %v2206
      %v2365 = vadd.f32 %v1943, %v2211
      %v2366 = vadd.f32 %v1944, %v2216
      %v2367 = vadd.f32 %v1945, %v2221
      %v2368 = vadd.f32 %v1946, %v2226
      %v2369 = vadd.f32 %v1947, %v2231
      %v2370 = vadd.f32 %v1948, %v2236
      %v2371 = vadd.f32 %v1949, %v2241
      %v2372 = vadd.f32 %v1950, %v2246
      %v2373 = vadd.f32 %v1951, %v2251
      %v2374 = vadd.f32 %v1952, %v2256
      %v2375 = vadd.f32 %v1953, %v2261
      %v2376 = vadd.f32 %v1954, %v2266
      %v2377 = vadd.f32 %v1955, %v2271
      %v2378 = vadd.f32 %v1956, %v2276
      %v2379 = vadd.f32 %v1957, %v2281
      %v2380 = vadd.f32 %v1958, %v2286
      %v2381 = vadd.f32 %v1959, %v2291
      %v2382 = vadd.f32 %v1960, %v2296
      %v2383 = vadd.f32 %v1961, %v2301
      %v2384 = vadd.f32 %v1962, %v2306
      %v2385 = vadd.f32 %v1963, %v2311
      %v2386 = vadd.f32 %v1964, %v2316
      %v2387 = vadd.f32 %v1965, %v2321
      %v2388 = vadd.f32 %v1966, %v2326
      %v2389 = vadd.f32 %v1967, %v2331
      %v2390 = vadd.f32 %v1968, %v2336
      %v2391 = vadd.f32 %v1969, %v2341
      %v2392 = vadd.f32 %v1970, %v2346
      %v2393 = vadd.f32 %v1971, %v2351
      %v2394 = vadd.f32 %v1972, %v2356
      %v2395 = vadd.f32 %v1973, %v2361
      %v2396 = vld [vmem:[#allocation2 + $0x18] sm:$0xff]
      %v2397 = vld [vmem:[#allocation2 + $0x20] sm:$0xff]
      %v2398 = vld [vmem:[#allocation2 + $0x28] sm:$0xff]
      %v2399 = vld [vmem:[#allocation2 + $0x30] sm:$0xff]
      %v2400 = vld [vmem:[#allocation2 + $0x38] sm:$0xff]
      %v2401 = vld [vmem:[#allocation2 + $0x40] sm:$0xff]
      %v2402 = vld [vmem:[#allocation2 + $0x48] sm:$0xff]
      %v2403 = vld [vmem:[#allocation2 + $0x50] sm:$0xff]
      %v2404 = vld [vmem:[#allocation2 + $0x58] sm:$0xff]
      %v2405 = vld [vmem:[#allocation2 + $0x60] sm:$0xff]
      %v2406 = vld [vmem:[#allocation2 + $0x68] sm:$0xff]
      %v2407 = vld [vmem:[#allocation2 + $0x70] sm:$0xff]
      %v2408 = vld [vmem:[#allocation2 + $0x78] sm:$0xff]
      %v2409 = vld [vmem:[#allocation2 + $0x80] sm:$0xff]
      %v2410 = vld [vmem:[#allocation2 + $0x88] sm:$0xff]
      %v2411 = vld [vmem:[#allocation2 + $0x90] sm:$0xff]
      %v2412 = vld [vmem:[#allocation2 + $0x98] sm:$0xff]
      %v2413 = vld [vmem:[#allocation2 + $0xa0] sm:$0xff]
      %v2414 = vld [vmem:[#allocation2 + $0xa8] sm:$0xff]
      %v2415 = vld [vmem:[#allocation2 + $0xb0] sm:$0xff]
      %v2416 = vld [vmem:[#allocation2 + $0xb8] sm:$0xff]
      %v2417 = vld [vmem:[#allocation2 + $0xc0] sm:$0xff]
      %v2418 = vld [vmem:[#allocation2 + $0xc8] sm:$0xff]
      %v2419 = vld [vmem:[#allocation2 + $0xd0] sm:$0xff]
      %v2420 = vld [vmem:[#allocation2 + $0xd8] sm:$0xff]
      %v2421 = vld [vmem:[#allocation2 + $0xe0] sm:$0xff]
      %v2422 = vld [vmem:[#allocation2 + $0xe8] sm:$0xff]
      %v2423 = vld [vmem:[#allocation2 + $0xf0] sm:$0xff]
      %v2424 = vld [vmem:[#allocation2 + $0xf8] sm:$0xff]
      %v2425 = vld [vmem:[#allocation2 + $0x100] sm:$0xff]
      %v2426 = vld [vmem:[#allocation2 + $0x108] sm:$0xff]
      %v2427 = vld [vmem:[#allocation2 + $0x110] sm:$0xff]
      %s2428 = scalar_lea.vmem %s1, 16
      %v2429 = vld [vmem:[%s2428] sm:$0xf]
      %v2431 = vsel %vm284, %v2396, 0
      %v2434 = vsel %vm284, %v2397, 0
      %v2437 = vsel %vm284, %v2398, 0
      %v2440 = vsel %vm284, %v2399, 0
      %v2443 = vsel %vm284, %v2400, 0
      %v2446 = vsel %vm284, %v2401, 0
      %v2449 = vsel %vm284, %v2402, 0
      %v2452 = vsel %vm284, %v2403, 0
      %v2455 = vsel %vm284, %v2404, 0
      %v2458 = vsel %vm284, %v2405, 0
      %v2461 = vsel %vm284, %v2406, 0
      %v2464 = vsel %vm284, %v2407, 0
      %v2467 = vsel %vm284, %v2408, 0
      %v2470 = vsel %vm284, %v2409, 0
      %v2473 = vsel %vm284, %v2410, 0
      %v2476 = vsel %vm284, %v2411, 0
      %v2479 = vsel %vm284, %v2412, 0
      %v2482 = vsel %vm284, %v2413, 0
      %v2485 = vsel %vm284, %v2414, 0
      %v2488 = vsel %vm284, %v2415, 0
      %v2491 = vsel %vm284, %v2416, 0
      %v2494 = vsel %vm284, %v2417, 0
      %v2497 = vsel %vm284, %v2418, 0
      %v2500 = vsel %vm284, %v2419, 0
      %v2503 = vsel %vm284, %v2420, 0
      %v2506 = vsel %vm284, %v2421, 0
      %v2509 = vsel %vm284, %v2422, 0
      %v2512 = vsel %vm284, %v2423, 0
      %v2515 = vsel %vm284, %v2424, 0
      %v2518 = vsel %vm284, %v2425, 0
      %v2521 = vsel %vm284, %v2426, 0
      %v2524 = vsel %vm284, %v2427, 0
      %v2527 = vsel %vm999, %v2429, 0
      %2529 = vmatprep.subr.mxu0 0.0
      %2530 = vmatpush1.msra.mxu0 0.0
      %2531 = vmatprep.subr.mxu0 0.0
      %2532 = vmatpush1.msra.mxu0 0.0
      %2533 = vmatprep.subr.mxu0 0.0
      %2534 = vmatpush1.msra.mxu0 0.0
      %2535 = vmatprep.subr.mxu0 0.0
      %2536 = vmatpush1.msra.mxu0 0.0
      %2537 = vmatprep.subr.mxu0 0.0
      %2538 = vmatpush1.msra.mxu0 0.0
      %2539 = vmatprep.subr.mxu0 0.0
      %2540 = vmatpush1.msra.mxu0 0.0
      %2541 = vmatprep.subr.mxu0 0.0
      %2542 = vmatpush1.msra.mxu0 0.0
      %2543 = vmatprep.subr.mxu0 0.0
      %2544 = vmatpush1.msra.mxu0 0.0
      %2545 = vmatprep.subr.mxu0 0.0
      %2546 = vmatpush1.msra.mxu0 0.0
      %2547 = vmatprep.subr.mxu0 0.0
      %2548 = vmatpush1.msra.mxu0 0.0
      %2549 = vmatprep.subr.mxu0 0.0
      %2550 = vmatpush1.msra.mxu0 0.0
      %2551 = vmatprep.subr.mxu0 0.0
      %2552 = vmatpush1.msra.mxu0 0.0
      %2553 = vmatprep.subr.mxu0 0.0
      %2554 = vmatpush1.msra.mxu0 0.0
      %2555 = vmatprep.subr.mxu0 0.0
      %2556 = vmatpush1.msra.mxu0 0.0
      %2557 = vmatprep.subr.mxu0 0.0
      %2558 = vmatpush1.msra.mxu0 0.0
      %2559 = vmatprep.subr.mxu0 0.0
      %2560 = vmatpush1.msra.mxu0 %v2527
      %2561 = vmatprep.subr.mxu0 0.0
      %2562 = vmatpush2.msra.mxu0 0.0
      %2563 = vmatprep.subr.mxu0 0.0
      %2564 = vmatpush2.msra.mxu0 0.0
      %2565 = vmatprep.subr.mxu0 0.0
      %2566 = vmatpush2.msra.mxu0 0.0
      %2567 = vmatprep.subr.mxu0 0.0
      %2568 = vmatpush2.msra.mxu0 0.0
      %2569 = vmatprep.subr.mxu0 0.0
      %2570 = vmatpush2.msra.mxu0 0.0
      %2571 = vmatprep.subr.mxu0 0.0
      %2572 = vmatpush2.msra.mxu0 0.0
      %2573 = vmatprep.subr.mxu0 0.0
      %2574 = vmatpush2.msra.mxu0 0.0
      %2575 = vmatprep.subr.mxu0 0.0
      %2576 = vmatpush2.msra.mxu0 0.0
      %2577 = vmatprep.subr.mxu0 0.0
      %2578 = vmatpush2.msra.mxu0 0.0
      %2579 = vmatprep.subr.mxu0 0.0
      %2580 = vmatpush2.msra.mxu0 0.0
      %2581 = vmatprep.subr.mxu0 0.0
      %2582 = vmatpush2.msra.mxu0 0.0
      %2583 = vmatprep.subr.mxu0 0.0
      %2584 = vmatpush2.msra.mxu0 0.0
      %2585 = vmatprep.subr.mxu0 0.0
      %2586 = vmatpush2.msra.mxu0 0.0
      %2587 = vmatprep.subr.mxu0 0.0
      %2588 = vmatpush2.msra.mxu0 0.0
      %2589 = vmatprep.subr.mxu0 0.0
      %2590 = vmatpush2.msra.mxu0 0.0
      %2591 = vmatprep.subr.mxu0 0.0
      %2592 = vmatpush2.msra.mxu0 0.0
      %2593 = vmatprep.mubr.f32.mxu0 0.0
      %2594 = vmatmul.mubr.f32.gmra.mxu0 %v2431
      %v2595 = vpop.f32.mrf.mxu0
      %v2596 = vadd.f32 0.0, %v2595
      %v2597 = vpop.f32.mrf.mxu0
      %2598 = vmatprep.mubr.f32.mxu0 0.0
      %2599 = vmatmul.mubr.f32.gmra.mxu0 %v2434
      %v2600 = vpop.f32.mrf.mxu0
      %v2601 = vadd.f32 0.0, %v2600
      %v2602 = vpop.f32.mrf.mxu0
      %2603 = vmatprep.mubr.f32.mxu0 0.0
      %2604 = vmatmul.mubr.f32.gmra.mxu0 %v2437
      %v2605 = vpop.f32.mrf.mxu0
      %v2606 = vadd.f32 0.0, %v2605
      %v2607 = vpop.f32.mrf.mxu0
      %2608 = vmatprep.mubr.f32.mxu0 0.0
      %2609 = vmatmul.mubr.f32.gmra.mxu0 %v2440
      %v2610 = vpop.f32.mrf.mxu0
      %v2611 = vadd.f32 0.0, %v2610
      %v2612 = vpop.f32.mrf.mxu0
      %2613 = vmatprep.mubr.f32.mxu0 0.0
      %2614 = vmatmul.mubr.f32.gmra.mxu0 %v2443
      %v2615 = vpop.f32.mrf.mxu0
      %v2616 = vadd.f32 0.0, %v2615
      %v2617 = vpop.f32.mrf.mxu0
      %2618 = vmatprep.mubr.f32.mxu0 0.0
      %2619 = vmatmul.mubr.f32.gmra.mxu0 %v2446
      %v2620 = vpop.f32.mrf.mxu0
      %v2621 = vadd.f32 0.0, %v2620
      %v2622 = vpop.f32.mrf.mxu0
      %2623 = vmatprep.mubr.f32.mxu0 0.0
      %2624 = vmatmul.mubr.f32.gmra.mxu0 %v2449
      %v2625 = vpop.f32.mrf.mxu0
      %v2626 = vadd.f32 0.0, %v2625
      %v2627 = vpop.f32.mrf.mxu0
      %2628 = vmatprep.mubr.f32.mxu0 0.0
      %2629 = vmatmul.mubr.f32.gmra.mxu0 %v2452
      %v2630 = vpop.f32.mrf.mxu0
      %v2631 = vadd.f32 0.0, %v2630
      %v2632 = vpop.f32.mrf.mxu0
      %2633 = vmatprep.mubr.f32.mxu0 0.0
      %2634 = vmatmul.mubr.f32.gmra.mxu0 %v2455
      %v2635 = vpop.f32.mrf.mxu0
      %v2636 = vadd.f32 0.0, %v2635
      %v2637 = vpop.f32.mrf.mxu0
      %2638 = vmatprep.mubr.f32.mxu0 0.0
      %2639 = vmatmul.mubr.f32.gmra.mxu0 %v2458
      %v2640 = vpop.f32.mrf.mxu0
      %v2641 = vadd.f32 0.0, %v2640
      %v2642 = vpop.f32.mrf.mxu0
      %2643 = vmatprep.mubr.f32.mxu0 0.0
      %2644 = vmatmul.mubr.f32.gmra.mxu0 %v2461
      %v2645 = vpop.f32.mrf.mxu0
      %v2646 = vadd.f32 0.0, %v2645
      %v2647 = vpop.f32.mrf.mxu0
      %2648 = vmatprep.mubr.f32.mxu0 0.0
      %2649 = vmatmul.mubr.f32.gmra.mxu0 %v2464
      %v2650 = vpop.f32.mrf.mxu0
      %v2651 = vadd.f32 0.0, %v2650
      %v2652 = vpop.f32.mrf.mxu0
      %2653 = vmatprep.mubr.f32.mxu0 0.0
      %2654 = vmatmul.mubr.f32.gmra.mxu0 %v2467
      %v2655 = vpop.f32.mrf.mxu0
      %v2656 = vadd.f32 0.0, %v2655
      %v2657 = vpop.f32.mrf.mxu0
      %2658 = vmatprep.mubr.f32.mxu0 0.0
      %2659 = vmatmul.mubr.f32.gmra.mxu0 %v2470
      %v2660 = vpop.f32.mrf.mxu0
      %v2661 = vadd.f32 0.0, %v2660
      %v2662 = vpop.f32.mrf.mxu0
      %2663 = vmatprep.mubr.f32.mxu0 0.0
      %2664 = vmatmul.mubr.f32.gmra.mxu0 %v2473
      %v2665 = vpop.f32.mrf.mxu0
      %v2666 = vadd.f32 0.0, %v2665
      %v2667 = vpop.f32.mrf.mxu0
      %2668 = vmatprep.mubr.f32.mxu0 0.0
      %2669 = vmatmul.mubr.f32.gmra.mxu0 %v2476
      %v2670 = vpop.f32.mrf.mxu0
      %v2671 = vadd.f32 0.0, %v2670
      %v2672 = vpop.f32.mrf.mxu0
      %2673 = vmatprep.mubr.f32.mxu0 0.0
      %2674 = vmatmul.mubr.f32.gmra.mxu0 %v2479
      %v2675 = vpop.f32.mrf.mxu0
      %v2676 = vadd.f32 0.0, %v2675
      %v2677 = vpop.f32.mrf.mxu0
      %2678 = vmatprep.mubr.f32.mxu0 0.0
      %2679 = vmatmul.mubr.f32.gmra.mxu0 %v2482
      %v2680 = vpop.f32.mrf.mxu0
      %v2681 = vadd.f32 0.0, %v2680
      %v2682 = vpop.f32.mrf.mxu0
      %2683 = vmatprep.mubr.f32.mxu0 0.0
      %2684 = vmatmul.mubr.f32.gmra.mxu0 %v2485
      %v2685 = vpop.f32.mrf.mxu0
      %v2686 = vadd.f32 0.0, %v2685
      %v2687 = vpop.f32.mrf.mxu0
      %2688 = vmatprep.mubr.f32.mxu0 0.0
      %2689 = vmatmul.mubr.f32.gmra.mxu0 %v2488
      %v2690 = vpop.f32.mrf.mxu0
      %v2691 = vadd.f32 0.0, %v2690
      %v2692 = vpop.f32.mrf.mxu0
      %2693 = vmatprep.mubr.f32.mxu0 0.0
      %2694 = vmatmul.mubr.f32.gmra.mxu0 %v2491
      %v2695 = vpop.f32.mrf.mxu0
      %v2696 = vadd.f32 0.0, %v2695
      %v2697 = vpop.f32.mrf.mxu0
      %2698 = vmatprep.mubr.f32.mxu0 0.0
      %2699 = vmatmul.mubr.f32.gmra.mxu0 %v2494
      %v2700 = vpop.f32.mrf.mxu0
      %v2701 = vadd.f32 0.0, %v2700
      %v2702 = vpop.f32.mrf.mxu0
      %2703 = vmatprep.mubr.f32.mxu0 0.0
      %2704 = vmatmul.mubr.f32.gmra.mxu0 %v2497
      %v2705 = vpop.f32.mrf.mxu0
      %v2706 = vadd.f32 0.0, %v2705
      %v2707 = vpop.f32.mrf.mxu0
      %2708 = vmatprep.mubr.f32.mxu0 0.0
      %2709 = vmatmul.mubr.f32.gmra.mxu0 %v2500
      %v2710 = vpop.f32.mrf.mxu0
      %v2711 = vadd.f32 0.0, %v2710
      %v2712 = vpop.f32.mrf.mxu0
      %2713 = vmatprep.mubr.f32.mxu0 0.0
      %2714 = vmatmul.mubr.f32.gmra.mxu0 %v2503
      %v2715 = vpop.f32.mrf.mxu0
      %v2716 = vadd.f32 0.0, %v2715
      %v2717 = vpop.f32.mrf.mxu0
      %2718 = vmatprep.mubr.f32.mxu0 0.0
      %2719 = vmatmul.mubr.f32.gmra.mxu0 %v2506
      %v2720 = vpop.f32.mrf.mxu0
      %v2721 = vadd.f32 0.0, %v2720
      %v2722 = vpop.f32.mrf.mxu0
      %2723 = vmatprep.mubr.f32.mxu0 0.0
      %2724 = vmatmul.mubr.f32.gmra.mxu0 %v2509
      %v2725 = vpop.f32.mrf.mxu0
      %v2726 = vadd.f32 0.0, %v2725
      %v2727 = vpop.f32.mrf.mxu0
      %2728 = vmatprep.mubr.f32.mxu0 0.0
      %2729 = vmatmul.mubr.f32.gmra.mxu0 %v2512
      %v2730 = vpop.f32.mrf.mxu0
      %v2731 = vadd.f32 0.0, %v2730
      %v2732 = vpop.f32.mrf.mxu0
      %2733 = vmatprep.mubr.f32.mxu0 0.0
      %2734 = vmatmul.mubr.f32.gmra.mxu0 %v2515
      %v2735 = vpop.f32.mrf.mxu0
      %v2736 = vadd.f32 0.0, %v2735
      %v2737 = vpop.f32.mrf.mxu0
      %2738 = vmatprep.mubr.f32.mxu0 0.0
      %2739 = vmatmul.mubr.f32.gmra.mxu0 %v2518
      %v2740 = vpop.f32.mrf.mxu0
      %v2741 = vadd.f32 0.0, %v2740
      %v2742 = vpop.f32.mrf.mxu0
      %2743 = vmatprep.mubr.f32.mxu0 0.0
      %2744 = vmatmul.mubr.f32.gmra.mxu0 %v2521
      %v2745 = vpop.f32.mrf.mxu0
      %v2746 = vadd.f32 0.0, %v2745
      %v2747 = vpop.f32.mrf.mxu0
      %2748 = vmatprep.mubr.f32.mxu0 0.0
      %2749 = vmatmul.mubr.f32.gmra.mxu0 %v2524
      %v2750 = vpop.f32.mrf.mxu0
      %v2751 = vadd.f32 0.0, %v2750
      %v2752 = vpop.f32.mrf.mxu0
      %2753 = vdwg.mxu0
      %v2754 = vadd.f32 %v2364, %v2596
      %v2755 = vadd.f32 %v2365, %v2601
      %v2756 = vadd.f32 %v2366, %v2606
      %v2757 = vadd.f32 %v2367, %v2611
      %v2758 = vadd.f32 %v2368, %v2616
      %v2759 = vadd.f32 %v2369, %v2621
      %v2760 = vadd.f32 %v2370, %v2626
      %v2761 = vadd.f32 %v2371, %v2631
      %v2762 = vadd.f32 %v2372, %v2636
      %v2763 = vadd.f32 %v2373, %v2641
      %v2764 = vadd.f32 %v2374, %v2646
      %v2765 = vadd.f32 %v2375, %v2651
      %v2766 = vadd.f32 %v2376, %v2656
      %v2767 = vadd.f32 %v2377, %v2661
      %v2768 = vadd.f32 %v2378, %v2666
      %v2769 = vadd.f32 %v2379, %v2671
      %v2770 = vadd.f32 %v2380, %v2676
      %v2771 = vadd.f32 %v2381, %v2681
      %v2772 = vadd.f32 %v2382, %v2686
      %v2773 = vadd.f32 %v2383, %v2691
      %v2774 = vadd.f32 %v2384, %v2696
      %v2775 = vadd.f32 %v2385, %v2701
      %v2776 = vadd.f32 %v2386, %v2706
      %v2777 = vadd.f32 %v2387, %v2711
      %v2778 = vadd.f32 %v2388, %v2716
      %v2779 = vadd.f32 %v2389, %v2721
      %v2780 = vadd.f32 %v2390, %v2726
      %v2781 = vadd.f32 %v2391, %v2731
      %v2782 = vadd.f32 %v2392, %v2736
      %v2783 = vadd.f32 %v2393, %v2741
      %v2784 = vadd.f32 %v2394, %v2746
      %v2785 = vadd.f32 %v2395, %v2751
      %v2786 = vld [vmem:[#allocation2 + $0x19] sm:$0xff]
      %v2787 = vld [vmem:[#allocation2 + $0x21] sm:$0xff]
      %v2788 = vld [vmem:[#allocation2 + $0x29] sm:$0xff]
      %v2789 = vld [vmem:[#allocation2 + $0x31] sm:$0xff]
      %v2790 = vld [vmem:[#allocation2 + $0x39] sm:$0xff]
      %v2791 = vld [vmem:[#allocation2 + $0x41] sm:$0xff]
      %v2792 = vld [vmem:[#allocation2 + $0x49] sm:$0xff]
      %v2793 = vld [vmem:[#allocation2 + $0x51] sm:$0xff]
      %v2794 = vld [vmem:[#allocation2 + $0x59] sm:$0xff]
      %v2795 = vld [vmem:[#allocation2 + $0x61] sm:$0xff]
      %v2796 = vld [vmem:[#allocation2 + $0x69] sm:$0xff]
      %v2797 = vld [vmem:[#allocation2 + $0x71] sm:$0xff]
      %v2798 = vld [vmem:[#allocation2 + $0x79] sm:$0xff]
      %v2799 = vld [vmem:[#allocation2 + $0x81] sm:$0xff]
      %v2800 = vld [vmem:[#allocation2 + $0x89] sm:$0xff]
      %v2801 = vld [vmem:[#allocation2 + $0x91] sm:$0xff]
      %v2802 = vld [vmem:[#allocation2 + $0x99] sm:$0xff]
      %v2803 = vld [vmem:[#allocation2 + $0xa1] sm:$0xff]
      %v2804 = vld [vmem:[#allocation2 + $0xa9] sm:$0xff]
      %v2805 = vld [vmem:[#allocation2 + $0xb1] sm:$0xff]
      %v2806 = vld [vmem:[#allocation2 + $0xb9] sm:$0xff]
      %v2807 = vld [vmem:[#allocation2 + $0xc1] sm:$0xff]
      %v2808 = vld [vmem:[#allocation2 + $0xc9] sm:$0xff]
      %v2809 = vld [vmem:[#allocation2 + $0xd1] sm:$0xff]
      %v2810 = vld [vmem:[#allocation2 + $0xd9] sm:$0xff]
      %v2811 = vld [vmem:[#allocation2 + $0xe1] sm:$0xff]
      %v2812 = vld [vmem:[#allocation2 + $0xe9] sm:$0xff]
      %v2813 = vld [vmem:[#allocation2 + $0xf1] sm:$0xff]
      %v2814 = vld [vmem:[#allocation2 + $0xf9] sm:$0xff]
      %v2815 = vld [vmem:[#allocation2 + $0x101] sm:$0xff]
      %v2816 = vld [vmem:[#allocation2 + $0x109] sm:$0xff]
      %v2817 = vld [vmem:[#allocation2 + $0x111] sm:$0xff]
      %v2818 = vsel %vm772, %v2786, 0.0
      %v2819 = vsel %vm773, %v2787, 0.0
      %v2820 = vsel %vm774, %v2788, 0.0
      %v2821 = vsel %vm775, %v2789, 0.0
      %v2822 = vsel %vm776, %v2790, 0.0
      %v2823 = vsel %vm777, %v2791, 0.0
      %v2824 = vsel %vm778, %v2792, 0.0
      %v2825 = vsel %vm779, %v2793, 0.0
      %v2826 = vsel %vm780, %v2794, 0.0
      %v2827 = vsel %vm781, %v2795, 0.0
      %v2828 = vsel %vm782, %v2796, 0.0
      %v2829 = vsel %vm783, %v2797, 0.0
      %v2830 = vsel %vm784, %v2798, 0.0
      %v2831 = vsel %vm785, %v2799, 0.0
      %v2832 = vsel %vm786, %v2800, 0.0
      %v2833 = vsel %vm787, %v2801, 0.0
      %v2834 = vsel %vm788, %v2802, 0.0
      %v2835 = vsel %vm789, %v2803, 0.0
      %v2836 = vsel %vm790, %v2804, 0.0
      %v2837 = vsel %vm791, %v2805, 0.0
      %v2838 = vsel %vm792, %v2806, 0.0
      %v2839 = vsel %vm793, %v2807, 0.0
      %v2840 = vsel %vm794, %v2808, 0.0
      %v2841 = vsel %vm795, %v2809, 0.0
      %v2842 = vsel %vm796, %v2810, 0.0
      %v2843 = vsel %vm797, %v2811, 0.0
      %v2844 = vsel %vm798, %v2812, 0.0
      %v2845 = vsel %vm799, %v2813, 0.0
      %v2846 = vsel %vm800, %v2814, 0.0
      %v2847 = vsel %vm801, %v2815, 0.0
      %v2848 = vsel %vm802, %v2816, 0.0
      %v2849 = vsel %vm803, %v2817, 0.0
      %s2850 = scalar_lea.vmem %s1, 20
      %v2851 = vld [vmem:[%s2850] sm:$0xf]
      %v2853 = vsel %vm284, %v2818, 0
      %v2856 = vsel %vm284, %v2819, 0
      %v2859 = vsel %vm284, %v2820, 0
      %v2862 = vsel %vm284, %v2821, 0
      %v2865 = vsel %vm284, %v2822, 0
      %v2868 = vsel %vm284, %v2823, 0
      %v2871 = vsel %vm284, %v2824, 0
      %v2874 = vsel %vm284, %v2825, 0
      %v2877 = vsel %vm284, %v2826, 0
      %v2880 = vsel %vm284, %v2827, 0
      %v2883 = vsel %vm284, %v2828, 0
      %v2886 = vsel %vm284, %v2829, 0
      %v2889 = vsel %vm284, %v2830, 0
      %v2892 = vsel %vm284, %v2831, 0
      %v2895 = vsel %vm284, %v2832, 0
      %v2898 = vsel %vm284, %v2833, 0
      %v2901 = vsel %vm284, %v2834, 0
      %v2904 = vsel %vm284, %v2835, 0
      %v2907 = vsel %vm284, %v2836, 0
      %v2910 = vsel %vm284, %v2837, 0
      %v2913 = vsel %vm284, %v2838, 0
      %v2916 = vsel %vm284, %v2839, 0
      %v2919 = vsel %vm284, %v2840, 0
      %v2922 = vsel %vm284, %v2841, 0
      %v2925 = vsel %vm284, %v2842, 0
      %v2928 = vsel %vm284, %v2843, 0
      %v2931 = vsel %vm284, %v2844, 0
      %v2934 = vsel %vm284, %v2845, 0
      %v2937 = vsel %vm284, %v2846, 0
      %v2940 = vsel %vm284, %v2847, 0
      %v2943 = vsel %vm284, %v2848, 0
      %v2946 = vsel %vm284, %v2849, 0
      %v2949 = vsel %vm999, %v2851, 0
      %2951 = vmatprep.subr.mxu0 0.0
      %2952 = vmatpush1.msra.mxu0 0.0
      %2953 = vmatprep.subr.mxu0 0.0
      %2954 = vmatpush1.msra.mxu0 0.0
      %2955 = vmatprep.subr.mxu0 0.0
      %2956 = vmatpush1.msra.mxu0 0.0
      %2957 = vmatprep.subr.mxu0 0.0
      %2958 = vmatpush1.msra.mxu0 0.0
      %2959 = vmatprep.subr.mxu0 0.0
      %2960 = vmatpush1.msra.mxu0 0.0
      %2961 = vmatprep.subr.mxu0 0.0
      %2962 = vmatpush1.msra.mxu0 0.0
      %2963 = vmatprep.subr.mxu0 0.0
      %2964 = vmatpush1.msra.mxu0 0.0
      %2965 = vmatprep.subr.mxu0 0.0
      %2966 = vmatpush1.msra.mxu0 0.0
      %2967 = vmatprep.subr.mxu0 0.0
      %2968 = vmatpush1.msra.mxu0 0.0
      %2969 = vmatprep.subr.mxu0 0.0
      %2970 = vmatpush1.msra.mxu0 0.0
      %2971 = vmatprep.subr.mxu0 0.0
      %2972 = vmatpush1.msra.mxu0 0.0
      %2973 = vmatprep.subr.mxu0 0.0
      %2974 = vmatpush1.msra.mxu0 0.0
      %2975 = vmatprep.subr.mxu0 0.0
      %2976 = vmatpush1.msra.mxu0 0.0
      %2977 = vmatprep.subr.mxu0 0.0
      %2978 = vmatpush1.msra.mxu0 0.0
      %2979 = vmatprep.subr.mxu0 0.0
      %2980 = vmatpush1.msra.mxu0 0.0
      %2981 = vmatprep.subr.mxu0 0.0
      %2982 = vmatpush1.msra.mxu0 %v2949
      %2983 = vmatprep.subr.mxu0 0.0
      %2984 = vmatpush2.msra.mxu0 0.0
      %2985 = vmatprep.subr.mxu0 0.0
      %2986 = vmatpush2.msra.mxu0 0.0
      %2987 = vmatprep.subr.mxu0 0.0
      %2988 = vmatpush2.msra.mxu0 0.0
      %2989 = vmatprep.subr.mxu0 0.0
      %2990 = vmatpush2.msra.mxu0 0.0
      %2991 = vmatprep.subr.mxu0 0.0
      %2992 = vmatpush2.msra.mxu0 0.0
      %2993 = vmatprep.subr.mxu0 0.0
      %2994 = vmatpush2.msra.mxu0 0.0
      %2995 = vmatprep.subr.mxu0 0.0
      %2996 = vmatpush2.msra.mxu0 0.0
      %2997 = vmatprep.subr.mxu0 0.0
      %2998 = vmatpush2.msra.mxu0 0.0
      %2999 = vmatprep.subr.mxu0 0.0
      %3000 = vmatpush2.msra.mxu0 0.0
      %3001 = vmatprep.subr.mxu0 0.0
      %3002 = vmatpush2.msra.mxu0 0.0
      %3003 = vmatprep.subr.mxu0 0.0
      %3004 = vmatpush2.msra.mxu0 0.0
      %3005 = vmatprep.subr.mxu0 0.0
      %3006 = vmatpush2.msra.mxu0 0.0
      %3007 = vmatprep.subr.mxu0 0.0
      %3008 = vmatpush2.msra.mxu0 0.0
      %3009 = vmatprep.subr.mxu0 0.0
      %3010 = vmatpush2.msra.mxu0 0.0
      %3011 = vmatprep.subr.mxu0 0.0
      %3012 = vmatpush2.msra.mxu0 0.0
      %3013 = vmatprep.subr.mxu0 0.0
      %3014 = vmatpush2.msra.mxu0 0.0
      %3015 = vmatprep.mubr.f32.mxu0 0.0
      %3016 = vmatmul.mubr.f32.gmra.mxu0 %v2853
      %v3017 = vpop.f32.mrf.mxu0
      %v3018 = vadd.f32 0.0, %v3017
      %v3019 = vpop.f32.mrf.mxu0
      %3020 = vmatprep.mubr.f32.mxu0 0.0
      %3021 = vmatmul.mubr.f32.gmra.mxu0 %v2856
      %v3022 = vpop.f32.mrf.mxu0
      %v3023 = vadd.f32 0.0, %v3022
      %v3024 = vpop.f32.mrf.mxu0
      %3025 = vmatprep.mubr.f32.mxu0 0.0
      %3026 = vmatmul.mubr.f32.gmra.mxu0 %v2859
      %v3027 = vpop.f32.mrf.mxu0
      %v3028 = vadd.f32 0.0, %v3027
      %v3029 = vpop.f32.mrf.mxu0
      %3030 = vmatprep.mubr.f32.mxu0 0.0
      %3031 = vmatmul.mubr.f32.gmra.mxu0 %v2862
      %v3032 = vpop.f32.mrf.mxu0
      %v3033 = vadd.f32 0.0, %v3032
      %v3034 = vpop.f32.mrf.mxu0
      %3035 = vmatprep.mubr.f32.mxu0 0.0
      %3036 = vmatmul.mubr.f32.gmra.mxu0 %v2865
      %v3037 = vpop.f32.mrf.mxu0
      %v3038 = vadd.f32 0.0, %v3037
      %v3039 = vpop.f32.mrf.mxu0
      %3040 = vmatprep.mubr.f32.mxu0 0.0
      %3041 = vmatmul.mubr.f32.gmra.mxu0 %v2868
      %v3042 = vpop.f32.mrf.mxu0
      %v3043 = vadd.f32 0.0, %v3042
      %v3044 = vpop.f32.mrf.mxu0
      %3045 = vmatprep.mubr.f32.mxu0 0.0
      %3046 = vmatmul.mubr.f32.gmra.mxu0 %v2871
      %v3047 = vpop.f32.mrf.mxu0
      %v3048 = vadd.f32 0.0, %v3047
      %v3049 = vpop.f32.mrf.mxu0
      %3050 = vmatprep.mubr.f32.mxu0 0.0
      %3051 = vmatmul.mubr.f32.gmra.mxu0 %v2874
      %v3052 = vpop.f32.mrf.mxu0
      %v3053 = vadd.f32 0.0, %v3052
      %v3054 = vpop.f32.mrf.mxu0
      %3055 = vmatprep.mubr.f32.mxu0 0.0
      %3056 = vmatmul.mubr.f32.gmra.mxu0 %v2877
      %v3057 = vpop.f32.mrf.mxu0
      %v3058 = vadd.f32 0.0, %v3057
      %v3059 = vpop.f32.mrf.mxu0
      %3060 = vmatprep.mubr.f32.mxu0 0.0
      %3061 = vmatmul.mubr.f32.gmra.mxu0 %v2880
      %v3062 = vpop.f32.mrf.mxu0
      %v3063 = vadd.f32 0.0, %v3062
      %v3064 = vpop.f32.mrf.mxu0
      %3065 = vmatprep.mubr.f32.mxu0 0.0
      %3066 = vmatmul.mubr.f32.gmra.mxu0 %v2883
      %v3067 = vpop.f32.mrf.mxu0
      %v3068 = vadd.f32 0.0, %v3067
      %v3069 = vpop.f32.mrf.mxu0
      %3070 = vmatprep.mubr.f32.mxu0 0.0
      %3071 = vmatmul.mubr.f32.gmra.mxu0 %v2886
      %v3072 = vpop.f32.mrf.mxu0
      %v3073 = vadd.f32 0.0, %v3072
      %v3074 = vpop.f32.mrf.mxu0
      %3075 = vmatprep.mubr.f32.mxu0 0.0
      %3076 = vmatmul.mubr.f32.gmra.mxu0 %v2889
      %v3077 = vpop.f32.mrf.mxu0
      %v3078 = vadd.f32 0.0, %v3077
      %v3079 = vpop.f32.mrf.mxu0
      %3080 = vmatprep.mubr.f32.mxu0 0.0
      %3081 = vmatmul.mubr.f32.gmra.mxu0 %v2892
      %v3082 = vpop.f32.mrf.mxu0
      %v3083 = vadd.f32 0.0, %v3082
      %v3084 = vpop.f32.mrf.mxu0
      %3085 = vmatprep.mubr.f32.mxu0 0.0
      %3086 = vmatmul.mubr.f32.gmra.mxu0 %v2895
      %v3087 = vpop.f32.mrf.mxu0
      %v3088 = vadd.f32 0.0, %v3087
      %v3089 = vpop.f32.mrf.mxu0
      %3090 = vmatprep.mubr.f32.mxu0 0.0
      %3091 = vmatmul.mubr.f32.gmra.mxu0 %v2898
      %v3092 = vpop.f32.mrf.mxu0
      %v3093 = vadd.f32 0.0, %v3092
      %v3094 = vpop.f32.mrf.mxu0
      %3095 = vmatprep.mubr.f32.mxu0 0.0
      %3096 = vmatmul.mubr.f32.gmra.mxu0 %v2901
      %v3097 = vpop.f32.mrf.mxu0
      %v3098 = vadd.f32 0.0, %v3097
      %v3099 = vpop.f32.mrf.mxu0
      %3100 = vmatprep.mubr.f32.mxu0 0.0
      %3101 = vmatmul.mubr.f32.gmra.mxu0 %v2904
      %v3102 = vpop.f32.mrf.mxu0
      %v3103 = vadd.f32 0.0, %v3102
      %v3104 = vpop.f32.mrf.mxu0
      %3105 = vmatprep.mubr.f32.mxu0 0.0
      %3106 = vmatmul.mubr.f32.gmra.mxu0 %v2907
      %v3107 = vpop.f32.mrf.mxu0
      %v3108 = vadd.f32 0.0, %v3107
      %v3109 = vpop.f32.mrf.mxu0
      %3110 = vmatprep.mubr.f32.mxu0 0.0
      %3111 = vmatmul.mubr.f32.gmra.mxu0 %v2910
      %v3112 = vpop.f32.mrf.mxu0
      %v3113 = vadd.f32 0.0, %v3112
      %v3114 = vpop.f32.mrf.mxu0
      %3115 = vmatprep.mubr.f32.mxu0 0.0
      %3116 = vmatmul.mubr.f32.gmra.mxu0 %v2913
      %v3117 = vpop.f32.mrf.mxu0
      %v3118 = vadd.f32 0.0, %v3117
      %v3119 = vpop.f32.mrf.mxu0
      %3120 = vmatprep.mubr.f32.mxu0 0.0
      %3121 = vmatmul.mubr.f32.gmra.mxu0 %v2916
      %v3122 = vpop.f32.mrf.mxu0
      %v3123 = vadd.f32 0.0, %v3122
      %v3124 = vpop.f32.mrf.mxu0
      %3125 = vmatprep.mubr.f32.mxu0 0.0
      %3126 = vmatmul.mubr.f32.gmra.mxu0 %v2919
      %v3127 = vpop.f32.mrf.mxu0
      %v3128 = vadd.f32 0.0, %v3127
      %v3129 = vpop.f32.mrf.mxu0
      %3130 = vmatprep.mubr.f32.mxu0 0.0
      %3131 = vmatmul.mubr.f32.gmra.mxu0 %v2922
      %v3132 = vpop.f32.mrf.mxu0
      %v3133 = vadd.f32 0.0, %v3132
      %v3134 = vpop.f32.mrf.mxu0
      %3135 = vmatprep.mubr.f32.mxu0 0.0
      %3136 = vmatmul.mubr.f32.gmra.mxu0 %v2925
      %v3137 = vpop.f32.mrf.mxu0
      %v3138 = vadd.f32 0.0, %v3137
      %v3139 = vpop.f32.mrf.mxu0
      %3140 = vmatprep.mubr.f32.mxu0 0.0
      %3141 = vmatmul.mubr.f32.gmra.mxu0 %v2928
      %v3142 = vpop.f32.mrf.mxu0
      %v3143 = vadd.f32 0.0, %v3142
      %v3144 = vpop.f32.mrf.mxu0
      %3145 = vmatprep.mubr.f32.mxu0 0.0
      %3146 = vmatmul.mubr.f32.gmra.mxu0 %v2931
      %v3147 = vpop.f32.mrf.mxu0
      %v3148 = vadd.f32 0.0, %v3147
      %v3149 = vpop.f32.mrf.mxu0
      %3150 = vmatprep.mubr.f32.mxu0 0.0
      %3151 = vmatmul.mubr.f32.gmra.mxu0 %v2934
      %v3152 = vpop.f32.mrf.mxu0
      %v3153 = vadd.f32 0.0, %v3152
      %v3154 = vpop.f32.mrf.mxu0
      %3155 = vmatprep.mubr.f32.mxu0 0.0
      %3156 = vmatmul.mubr.f32.gmra.mxu0 %v2937
      %v3157 = vpop.f32.mrf.mxu0
      %v3158 = vadd.f32 0.0, %v3157
      %v3159 = vpop.f32.mrf.mxu0
      %3160 = vmatprep.mubr.f32.mxu0 0.0
      %3161 = vmatmul.mubr.f32.gmra.mxu0 %v2940
      %v3162 = vpop.f32.mrf.mxu0
      %v3163 = vadd.f32 0.0, %v3162
      %v3164 = vpop.f32.mrf.mxu0
      %3165 = vmatprep.mubr.f32.mxu0 0.0
      %3166 = vmatmul.mubr.f32.gmra.mxu0 %v2943
      %v3167 = vpop.f32.mrf.mxu0
      %v3168 = vadd.f32 0.0, %v3167
      %v3169 = vpop.f32.mrf.mxu0
      %3170 = vmatprep.mubr.f32.mxu0 0.0
      %3171 = vmatmul.mubr.f32.gmra.mxu0 %v2946
      %v3172 = vpop.f32.mrf.mxu0
      %v3173 = vadd.f32 0.0, %v3172
      %v3174 = vpop.f32.mrf.mxu0
      %3175 = vdwg.mxu0
      %v3176 = vadd.f32 %v2754, %v3018
      %v3177 = vadd.f32 %v2755, %v3023
      %v3178 = vadd.f32 %v2756, %v3028
      %v3179 = vadd.f32 %v2757, %v3033
      %v3180 = vadd.f32 %v2758, %v3038
      %v3181 = vadd.f32 %v2759, %v3043
      %v3182 = vadd.f32 %v2760, %v3048
      %v3183 = vadd.f32 %v2761, %v3053
      %v3184 = vadd.f32 %v2762, %v3058
      %v3185 = vadd.f32 %v2763, %v3063
      %v3186 = vadd.f32 %v2764, %v3068
      %v3187 = vadd.f32 %v2765, %v3073
      %v3188 = vadd.f32 %v2766, %v3078
      %v3189 = vadd.f32 %v2767, %v3083
      %v3190 = vadd.f32 %v2768, %v3088
      %v3191 = vadd.f32 %v2769, %v3093
      %v3192 = vadd.f32 %v2770, %v3098
      %v3193 = vadd.f32 %v2771, %v3103
      %v3194 = vadd.f32 %v2772, %v3108
      %v3195 = vadd.f32 %v2773, %v3113
      %v3196 = vadd.f32 %v2774, %v3118
      %v3197 = vadd.f32 %v2775, %v3123
      %v3198 = vadd.f32 %v2776, %v3128
      %v3199 = vadd.f32 %v2777, %v3133
      %v3200 = vadd.f32 %v2778, %v3138
      %v3201 = vadd.f32 %v2779, %v3143
      %v3202 = vadd.f32 %v2780, %v3148
      %v3203 = vadd.f32 %v2781, %v3153
      %v3204 = vadd.f32 %v2782, %v3158
      %v3205 = vadd.f32 %v2783, %v3163
      %v3206 = vadd.f32 %v2784, %v3168
      %v3207 = vadd.f32 %v2785, %v3173
      %v3208 = vld [vmem:[#allocation2 + $0x27] sm:$0xff]
      %v3209 = vld [vmem:[#allocation2 + $0x2f] sm:$0xff]
      %v3210 = vld [vmem:[#allocation2 + $0x37] sm:$0xff]
      %v3211 = vld [vmem:[#allocation2 + $0x3f] sm:$0xff]
      %v3212 = vld [vmem:[#allocation2 + $0x47] sm:$0xff]
      %v3213 = vld [vmem:[#allocation2 + $0x4f] sm:$0xff]
      %v3214 = vld [vmem:[#allocation2 + $0x57] sm:$0xff]
      %v3215 = vld [vmem:[#allocation2 + $0x5f] sm:$0xff]
      %v3216 = vld [vmem:[#allocation2 + $0x67] sm:$0xff]
      %v3217 = vld [vmem:[#allocation2 + $0x6f] sm:$0xff]
      %v3218 = vld [vmem:[#allocation2 + $0x77] sm:$0xff]
      %v3219 = vld [vmem:[#allocation2 + $0x7f] sm:$0xff]
      %v3220 = vld [vmem:[#allocation2 + $0x87] sm:$0xff]
      %v3221 = vld [vmem:[#allocation2 + $0x8f] sm:$0xff]
      %v3222 = vld [vmem:[#allocation2 + $0x97] sm:$0xff]
      %v3223 = vld [vmem:[#allocation2 + $0x9f] sm:$0xff]
      %v3224 = vld [vmem:[#allocation2 + $0xa7] sm:$0xff]
      %v3225 = vld [vmem:[#allocation2 + $0xaf] sm:$0xff]
      %v3226 = vld [vmem:[#allocation2 + $0xb7] sm:$0xff]
      %v3227 = vld [vmem:[#allocation2 + $0xbf] sm:$0xff]
      %v3228 = vld [vmem:[#allocation2 + $0xc7] sm:$0xff]
      %v3229 = vld [vmem:[#allocation2 + $0xcf] sm:$0xff]
      %v3230 = vld [vmem:[#allocation2 + $0xd7] sm:$0xff]
      %v3231 = vld [vmem:[#allocation2 + $0xdf] sm:$0xff]
      %v3232 = vld [vmem:[#allocation2 + $0xe7] sm:$0xff]
      %v3233 = vld [vmem:[#allocation2 + $0xef] sm:$0xff]
      %v3234 = vld [vmem:[#allocation2 + $0xf7] sm:$0xff]
      %v3235 = vld [vmem:[#allocation2 + $0xff] sm:$0xff]
      %v3236 = vld [vmem:[#allocation2 + $0x107] sm:$0xff]
      %v3237 = vld [vmem:[#allocation2 + $0x10f] sm:$0xff]
      %v3238 = vld [vmem:[#allocation2 + $0x117] sm:$0xff]
      %v3239 = vld [vmem:[#allocation2 + $0x11f] sm:$0xff]
      %v3240 = vsel %vm740, %v3208, 0.0
      %v3241 = vsel %vm741, %v3209, 0.0
      %v3242 = vsel %vm742, %v3210, 0.0
      %v3243 = vsel %vm743, %v3211, 0.0
      %v3244 = vsel %vm744, %v3212, 0.0
      %v3245 = vsel %vm745, %v3213, 0.0
      %v3246 = vsel %vm746, %v3214, 0.0
      %v3247 = vsel %vm747, %v3215, 0.0
      %v3248 = vsel %vm748, %v3216, 0.0
      %v3249 = vsel %vm749, %v3217, 0.0
      %v3250 = vsel %vm750, %v3218, 0.0
      %v3251 = vsel %vm751, %v3219, 0.0
      %v3252 = vsel %vm752, %v3220, 0.0
      %v3253 = vsel %vm753, %v3221, 0.0
      %v3254 = vsel %vm754, %v3222, 0.0
      %v3255 = vsel %vm755, %v3223, 0.0
      %v3256 = vsel %vm756, %v3224, 0.0
      %v3257 = vsel %vm757, %v3225, 0.0
      %v3258 = vsel %vm758, %v3226, 0.0
      %v3259 = vsel %vm759, %v3227, 0.0
      %v3260 = vsel %vm760, %v3228, 0.0
      %v3261 = vsel %vm761, %v3229, 0.0
      %v3262 = vsel %vm762, %v3230, 0.0
      %v3263 = vsel %vm763, %v3231, 0.0
      %v3264 = vsel %vm764, %v3232, 0.0
      %v3265 = vsel %vm765, %v3233, 0.0
      %v3266 = vsel %vm766, %v3234, 0.0
      %v3267 = vsel %vm767, %v3235, 0.0
      %v3268 = vsel %vm768, %v3236, 0.0
      %v3269 = vsel %vm769, %v3237, 0.0
      %v3270 = vsel %vm770, %v3238, 0.0
      %v3271 = vsel %vm771, %v3239, 0.0
      %s3272 = scalar_lea.vmem %s1, 24
      %v3273 = vld [vmem:[%s3272] sm:$0xf]
      %v3275 = vsel %vm284, %v3240, 0
      %v3278 = vsel %vm284, %v3241, 0
      %v3281 = vsel %vm284, %v3242, 0
      %v3284 = vsel %vm284, %v3243, 0
      %v3287 = vsel %vm284, %v3244, 0
      %v3290 = vsel %vm284, %v3245, 0
      %v3293 = vsel %vm284, %v3246, 0
      %v3296 = vsel %vm284, %v3247, 0
      %v3299 = vsel %vm284, %v3248, 0
      %v3302 = vsel %vm284, %v3249, 0
      %v3305 = vsel %vm284, %v3250, 0
      %v3308 = vsel %vm284, %v3251, 0
      %v3311 = vsel %vm284, %v3252, 0
      %v3314 = vsel %vm284, %v3253, 0
      %v3317 = vsel %vm284, %v3254, 0
      %v3320 = vsel %vm284, %v3255, 0
      %v3323 = vsel %vm284, %v3256, 0
      %v3326 = vsel %vm284, %v3257, 0
      %v3329 = vsel %vm284, %v3258, 0
      %v3332 = vsel %vm284, %v3259, 0
      %v3335 = vsel %vm284, %v3260, 0
      %v3338 = vsel %vm284, %v3261, 0
      %v3341 = vsel %vm284, %v3262, 0
      %v3344 = vsel %vm284, %v3263, 0
      %v3347 = vsel %vm284, %v3264, 0
      %v3350 = vsel %vm284, %v3265, 0
      %v3353 = vsel %vm284, %v3266, 0
      %v3356 = vsel %vm284, %v3267, 0
      %v3359 = vsel %vm284, %v3268, 0
      %v3362 = vsel %vm284, %v3269, 0
      %v3365 = vsel %vm284, %v3270, 0
      %v3368 = vsel %vm284, %v3271, 0
      %v3371 = vsel %vm999, %v3273, 0
      %3373 = vmatprep.subr.mxu0 0.0
      %3374 = vmatpush1.msra.mxu0 0.0
      %3375 = vmatprep.subr.mxu0 0.0
      %3376 = vmatpush1.msra.mxu0 0.0
      %3377 = vmatprep.subr.mxu0 0.0
      %3378 = vmatpush1.msra.mxu0 0.0
      %3379 = vmatprep.subr.mxu0 0.0
      %3380 = vmatpush1.msra.mxu0 0.0
      %3381 = vmatprep.subr.mxu0 0.0
      %3382 = vmatpush1.msra.mxu0 0.0
      %3383 = vmatprep.subr.mxu0 0.0
      %3384 = vmatpush1.msra.mxu0 0.0
      %3385 = vmatprep.subr.mxu0 0.0
      %3386 = vmatpush1.msra.mxu0 0.0
      %3387 = vmatprep.subr.mxu0 0.0
      %3388 = vmatpush1.msra.mxu0 0.0
      %3389 = vmatprep.subr.mxu0 0.0
      %3390 = vmatpush1.msra.mxu0 0.0
      %3391 = vmatprep.subr.mxu0 0.0
      %3392 = vmatpush1.msra.mxu0 0.0
      %3393 = vmatprep.subr.mxu0 0.0
      %3394 = vmatpush1.msra.mxu0 0.0
      %3395 = vmatprep.subr.mxu0 0.0
      %3396 = vmatpush1.msra.mxu0 0.0
      %3397 = vmatprep.subr.mxu0 0.0
      %3398 = vmatpush1.msra.mxu0 0.0
      %3399 = vmatprep.subr.mxu0 0.0
      %3400 = vmatpush1.msra.mxu0 0.0
      %3401 = vmatprep.subr.mxu0 0.0
      %3402 = vmatpush1.msra.mxu0 0.0
      %3403 = vmatprep.subr.mxu0 0.0
      %3404 = vmatpush1.msra.mxu0 %v3371
      %3405 = vmatprep.subr.mxu0 0.0
      %3406 = vmatpush2.msra.mxu0 0.0
      %3407 = vmatprep.subr.mxu0 0.0
      %3408 = vmatpush2.msra.mxu0 0.0
      %3409 = vmatprep.subr.mxu0 0.0
      %3410 = vmatpush2.msra.mxu0 0.0
      %3411 = vmatprep.subr.mxu0 0.0
      %3412 = vmatpush2.msra.mxu0 0.0
      %3413 = vmatprep.subr.mxu0 0.0
      %3414 = vmatpush2.msra.mxu0 0.0
      %3415 = vmatprep.subr.mxu0 0.0
      %3416 = vmatpush2.msra.mxu0 0.0
      %3417 = vmatprep.subr.mxu0 0.0
      %3418 = vmatpush2.msra.mxu0 0.0
      %3419 = vmatprep.subr.mxu0 0.0
      %3420 = vmatpush2.msra.mxu0 0.0
      %3421 = vmatprep.subr.mxu0 0.0
      %3422 = vmatpush2.msra.mxu0 0.0
      %3423 = vmatprep.subr.mxu0 0.0
      %3424 = vmatpush2.msra.mxu0 0.0
      %3425 = vmatprep.subr.mxu0 0.0
      %3426 = vmatpush2.msra.mxu0 0.0
      %3427 = vmatprep.subr.mxu0 0.0
      %3428 = vmatpush2.msra.mxu0 0.0
      %3429 = vmatprep.subr.mxu0 0.0
      %3430 = vmatpush2.msra.mxu0 0.0
      %3431 = vmatprep.subr.mxu0 0.0
      %3432 = vmatpush2.msra.mxu0 0.0
      %3433 = vmatprep.subr.mxu0 0.0
      %3434 = vmatpush2.msra.mxu0 0.0
      %3435 = vmatprep.subr.mxu0 0.0
      %3436 = vmatpush2.msra.mxu0 0.0
      %3437 = vmatprep.mubr.f32.mxu0 0.0
      %3438 = vmatmul.mubr.f32.gmra.mxu0 %v3275
      %v3439 = vpop.f32.mrf.mxu0
      %v3440 = vadd.f32 0.0, %v3439
      %v3441 = vpop.f32.mrf.mxu0
      %3442 = vmatprep.mubr.f32.mxu0 0.0
      %3443 = vmatmul.mubr.f32.gmra.mxu0 %v3278
      %v3444 = vpop.f32.mrf.mxu0
      %v3445 = vadd.f32 0.0, %v3444
      %v3446 = vpop.f32.mrf.mxu0
      %3447 = vmatprep.mubr.f32.mxu0 0.0
      %3448 = vmatmul.mubr.f32.gmra.mxu0 %v3281
      %v3449 = vpop.f32.mrf.mxu0
      %v3450 = vadd.f32 0.0, %v3449
      %v3451 = vpop.f32.mrf.mxu0
      %3452 = vmatprep.mubr.f32.mxu0 0.0
      %3453 = vmatmul.mubr.f32.gmra.mxu0 %v3284
      %v3454 = vpop.f32.mrf.mxu0
      %v3455 = vadd.f32 0.0, %v3454
      %v3456 = vpop.f32.mrf.mxu0
      %3457 = vmatprep.mubr.f32.mxu0 0.0
      %3458 = vmatmul.mubr.f32.gmra.mxu0 %v3287
      %v3459 = vpop.f32.mrf.mxu0
      %v3460 = vadd.f32 0.0, %v3459
      %v3461 = vpop.f32.mrf.mxu0
      %3462 = vmatprep.mubr.f32.mxu0 0.0
      %3463 = vmatmul.mubr.f32.gmra.mxu0 %v3290
      %v3464 = vpop.f32.mrf.mxu0
      %v3465 = vadd.f32 0.0, %v3464
      %v3466 = vpop.f32.mrf.mxu0
      %3467 = vmatprep.mubr.f32.mxu0 0.0
      %3468 = vmatmul.mubr.f32.gmra.mxu0 %v3293
      %v3469 = vpop.f32.mrf.mxu0
      %v3470 = vadd.f32 0.0, %v3469
      %v3471 = vpop.f32.mrf.mxu0
      %3472 = vmatprep.mubr.f32.mxu0 0.0
      %3473 = vmatmul.mubr.f32.gmra.mxu0 %v3296
      %v3474 = vpop.f32.mrf.mxu0
      %v3475 = vadd.f32 0.0, %v3474
      %v3476 = vpop.f32.mrf.mxu0
      %3477 = vmatprep.mubr.f32.mxu0 0.0
      %3478 = vmatmul.mubr.f32.gmra.mxu0 %v3299
      %v3479 = vpop.f32.mrf.mxu0
      %v3480 = vadd.f32 0.0, %v3479
      %v3481 = vpop.f32.mrf.mxu0
      %3482 = vmatprep.mubr.f32.mxu0 0.0
      %3483 = vmatmul.mubr.f32.gmra.mxu0 %v3302
      %v3484 = vpop.f32.mrf.mxu0
      %v3485 = vadd.f32 0.0, %v3484
      %v3486 = vpop.f32.mrf.mxu0
      %3487 = vmatprep.mubr.f32.mxu0 0.0
      %3488 = vmatmul.mubr.f32.gmra.mxu0 %v3305
      %v3489 = vpop.f32.mrf.mxu0
      %v3490 = vadd.f32 0.0, %v3489
      %v3491 = vpop.f32.mrf.mxu0
      %3492 = vmatprep.mubr.f32.mxu0 0.0
      %3493 = vmatmul.mubr.f32.gmra.mxu0 %v3308
      %v3494 = vpop.f32.mrf.mxu0
      %v3495 = vadd.f32 0.0, %v3494
      %v3496 = vpop.f32.mrf.mxu0
      %3497 = vmatprep.mubr.f32.mxu0 0.0
      %3498 = vmatmul.mubr.f32.gmra.mxu0 %v3311
      %v3499 = vpop.f32.mrf.mxu0
      %v3500 = vadd.f32 0.0, %v3499
      %v3501 = vpop.f32.mrf.mxu0
      %3502 = vmatprep.mubr.f32.mxu0 0.0
      %3503 = vmatmul.mubr.f32.gmra.mxu0 %v3314
      %v3504 = vpop.f32.mrf.mxu0
      %v3505 = vadd.f32 0.0, %v3504
      %v3506 = vpop.f32.mrf.mxu0
      %3507 = vmatprep.mubr.f32.mxu0 0.0
      %3508 = vmatmul.mubr.f32.gmra.mxu0 %v3317
      %v3509 = vpop.f32.mrf.mxu0
      %v3510 = vadd.f32 0.0, %v3509
      %v3511 = vpop.f32.mrf.mxu0
      %3512 = vmatprep.mubr.f32.mxu0 0.0
      %3513 = vmatmul.mubr.f32.gmra.mxu0 %v3320
      %v3514 = vpop.f32.mrf.mxu0
      %v3515 = vadd.f32 0.0, %v3514
      %v3516 = vpop.f32.mrf.mxu0
      %3517 = vmatprep.mubr.f32.mxu0 0.0
      %3518 = vmatmul.mubr.f32.gmra.mxu0 %v3323
      %v3519 = vpop.f32.mrf.mxu0
      %v3520 = vadd.f32 0.0, %v3519
      %v3521 = vpop.f32.mrf.mxu0
      %3522 = vmatprep.mubr.f32.mxu0 0.0
      %3523 = vmatmul.mubr.f32.gmra.mxu0 %v3326
      %v3524 = vpop.f32.mrf.mxu0
      %v3525 = vadd.f32 0.0, %v3524
      %v3526 = vpop.f32.mrf.mxu0
      %3527 = vmatprep.mubr.f32.mxu0 0.0
      %3528 = vmatmul.mubr.f32.gmra.mxu0 %v3329
      %v3529 = vpop.f32.mrf.mxu0
      %v3530 = vadd.f32 0.0, %v3529
      %v3531 = vpop.f32.mrf.mxu0
      %3532 = vmatprep.mubr.f32.mxu0 0.0
      %3533 = vmatmul.mubr.f32.gmra.mxu0 %v3332
      %v3534 = vpop.f32.mrf.mxu0
      %v3535 = vadd.f32 0.0, %v3534
      %v3536 = vpop.f32.mrf.mxu0
      %3537 = vmatprep.mubr.f32.mxu0 0.0
      %3538 = vmatmul.mubr.f32.gmra.mxu0 %v3335
      %v3539 = vpop.f32.mrf.mxu0
      %v3540 = vadd.f32 0.0, %v3539
      %v3541 = vpop.f32.mrf.mxu0
      %3542 = vmatprep.mubr.f32.mxu0 0.0
      %3543 = vmatmul.mubr.f32.gmra.mxu0 %v3338
      %v3544 = vpop.f32.mrf.mxu0
      %v3545 = vadd.f32 0.0, %v3544
      %v3546 = vpop.f32.mrf.mxu0
      %3547 = vmatprep.mubr.f32.mxu0 0.0
      %3548 = vmatmul.mubr.f32.gmra.mxu0 %v3341
      %v3549 = vpop.f32.mrf.mxu0
      %v3550 = vadd.f32 0.0, %v3549
      %v3551 = vpop.f32.mrf.mxu0
      %3552 = vmatprep.mubr.f32.mxu0 0.0
      %3553 = vmatmul.mubr.f32.gmra.mxu0 %v3344
      %v3554 = vpop.f32.mrf.mxu0
      %v3555 = vadd.f32 0.0, %v3554
      %v3556 = vpop.f32.mrf.mxu0
      %3557 = vmatprep.mubr.f32.mxu0 0.0
      %3558 = vmatmul.mubr.f32.gmra.mxu0 %v3347
      %v3559 = vpop.f32.mrf.mxu0
      %v3560 = vadd.f32 0.0, %v3559
      %v3561 = vpop.f32.mrf.mxu0
      %3562 = vmatprep.mubr.f32.mxu0 0.0
      %3563 = vmatmul.mubr.f32.gmra.mxu0 %v3350
      %v3564 = vpop.f32.mrf.mxu0
      %v3565 = vadd.f32 0.0, %v3564
      %v3566 = vpop.f32.mrf.mxu0
      %3567 = vmatprep.mubr.f32.mxu0 0.0
      %3568 = vmatmul.mubr.f32.gmra.mxu0 %v3353
      %v3569 = vpop.f32.mrf.mxu0
      %v3570 = vadd.f32 0.0, %v3569
      %v3571 = vpop.f32.mrf.mxu0
      %3572 = vmatprep.mubr.f32.mxu0 0.0
      %3573 = vmatmul.mubr.f32.gmra.mxu0 %v3356
      %v3574 = vpop.f32.mrf.mxu0
      %v3575 = vadd.f32 0.0, %v3574
      %v3576 = vpop.f32.mrf.mxu0
      %3577 = vmatprep.mubr.f32.mxu0 0.0
      %3578 = vmatmul.mubr.f32.gmra.mxu0 %v3359
      %v3579 = vpop.f32.mrf.mxu0
      %v3580 = vadd.f32 0.0, %v3579
      %v3581 = vpop.f32.mrf.mxu0
      %3582 = vmatprep.mubr.f32.mxu0 0.0
      %3583 = vmatmul.mubr.f32.gmra.mxu0 %v3362
      %v3584 = vpop.f32.mrf.mxu0
      %v3585 = vadd.f32 0.0, %v3584
      %v3586 = vpop.f32.mrf.mxu0
      %3587 = vmatprep.mubr.f32.mxu0 0.0
      %3588 = vmatmul.mubr.f32.gmra.mxu0 %v3365
      %v3589 = vpop.f32.mrf.mxu0
      %v3590 = vadd.f32 0.0, %v3589
      %v3591 = vpop.f32.mrf.mxu0
      %3592 = vmatprep.mubr.f32.mxu0 0.0
      %3593 = vmatmul.mubr.f32.gmra.mxu0 %v3368
      %v3594 = vpop.f32.mrf.mxu0
      %v3595 = vadd.f32 0.0, %v3594
      %v3596 = vpop.f32.mrf.mxu0
      %3597 = vdwg.mxu0
      %v3598 = vadd.f32 %v3176, %v3440
      %v3599 = vadd.f32 %v3177, %v3445
      %v3600 = vadd.f32 %v3178, %v3450
      %v3601 = vadd.f32 %v3179, %v3455
      %v3602 = vadd.f32 %v3180, %v3460
      %v3603 = vadd.f32 %v3181, %v3465
      %v3604 = vadd.f32 %v3182, %v3470
      %v3605 = vadd.f32 %v3183, %v3475
      %v3606 = vadd.f32 %v3184, %v3480
      %v3607 = vadd.f32 %v3185, %v3485
      %v3608 = vadd.f32 %v3186, %v3490
      %v3609 = vadd.f32 %v3187, %v3495
      %v3610 = vadd.f32 %v3188, %v3500
      %v3611 = vadd.f32 %v3189, %v3505
      %v3612 = vadd.f32 %v3190, %v3510
      %v3613 = vadd.f32 %v3191, %v3515
      %v3614 = vadd.f32 %v3192, %v3520
      %v3615 = vadd.f32 %v3193, %v3525
      %v3616 = vadd.f32 %v3194, %v3530
      %v3617 = vadd.f32 %v3195, %v3535
      %v3618 = vadd.f32 %v3196, %v3540
      %v3619 = vadd.f32 %v3197, %v3545
      %v3620 = vadd.f32 %v3198, %v3550
      %v3621 = vadd.f32 %v3199, %v3555
      %v3622 = vadd.f32 %v3200, %v3560
      %v3623 = vadd.f32 %v3201, %v3565
      %v3624 = vadd.f32 %v3202, %v3570
      %v3625 = vadd.f32 %v3203, %v3575
      %v3626 = vadd.f32 %v3204, %v3580
      %v3627 = vadd.f32 %v3205, %v3585
      %v3628 = vadd.f32 %v3206, %v3590
      %v3629 = vadd.f32 %v3207, %v3595
      %v3630 = vld [vmem:[#allocation2 + $0x28] sm:$0xff]
      %v3631 = vld [vmem:[#allocation2 + $0x30] sm:$0xff]
      %v3632 = vld [vmem:[#allocation2 + $0x38] sm:$0xff]
      %v3633 = vld [vmem:[#allocation2 + $0x40] sm:$0xff]
      %v3634 = vld [vmem:[#allocation2 + $0x48] sm:$0xff]
      %v3635 = vld [vmem:[#allocation2 + $0x50] sm:$0xff]
      %v3636 = vld [vmem:[#allocation2 + $0x58] sm:$0xff]
      %v3637 = vld [vmem:[#allocation2 + $0x60] sm:$0xff]
      %v3638 = vld [vmem:[#allocation2 + $0x68] sm:$0xff]
      %v3639 = vld [vmem:[#allocation2 + $0x70] sm:$0xff]
      %v3640 = vld [vmem:[#allocation2 + $0x78] sm:$0xff]
      %v3641 = vld [vmem:[#allocation2 + $0x80] sm:$0xff]
      %v3642 = vld [vmem:[#allocation2 + $0x88] sm:$0xff]
      %v3643 = vld [vmem:[#allocation2 + $0x90] sm:$0xff]
      %v3644 = vld [vmem:[#allocation2 + $0x98] sm:$0xff]
      %v3645 = vld [vmem:[#allocation2 + $0xa0] sm:$0xff]
      %v3646 = vld [vmem:[#allocation2 + $0xa8] sm:$0xff]
      %v3647 = vld [vmem:[#allocation2 + $0xb0] sm:$0xff]
      %v3648 = vld [vmem:[#allocation2 + $0xb8] sm:$0xff]
      %v3649 = vld [vmem:[#allocation2 + $0xc0] sm:$0xff]
      %v3650 = vld [vmem:[#allocation2 + $0xc8] sm:$0xff]
      %v3651 = vld [vmem:[#allocation2 + $0xd0] sm:$0xff]
      %v3652 = vld [vmem:[#allocation2 + $0xd8] sm:$0xff]
      %v3653 = vld [vmem:[#allocation2 + $0xe0] sm:$0xff]
      %v3654 = vld [vmem:[#allocation2 + $0xe8] sm:$0xff]
      %v3655 = vld [vmem:[#allocation2 + $0xf0] sm:$0xff]
      %v3656 = vld [vmem:[#allocation2 + $0xf8] sm:$0xff]
      %v3657 = vld [vmem:[#allocation2 + $0x100] sm:$0xff]
      %v3658 = vld [vmem:[#allocation2 + $0x108] sm:$0xff]
      %v3659 = vld [vmem:[#allocation2 + $0x110] sm:$0xff]
      %v3660 = vld [vmem:[#allocation2 + $0x118] sm:$0xff]
      %v3661 = vld [vmem:[#allocation2 + $0x120] sm:$0xff]
      %s3662 = scalar_lea.vmem %s1, 28
      %v3663 = vld [vmem:[%s3662] sm:$0xf]
      %v3665 = vsel %vm284, %v3630, 0
      %v3668 = vsel %vm284, %v3631, 0
      %v3671 = vsel %vm284, %v3632, 0
      %v3674 = vsel %vm284, %v3633, 0
      %v3677 = vsel %vm284, %v3634, 0
      %v3680 = vsel %vm284, %v3635, 0
      %v3683 = vsel %vm284, %v3636, 0
      %v3686 = vsel %vm284, %v3637, 0
      %v3689 = vsel %vm284, %v3638, 0
      %v3692 = vsel %vm284, %v3639, 0
      %v3695 = vsel %vm284, %v3640, 0
      %v3698 = vsel %vm284, %v3641, 0
      %v3701 = vsel %vm284, %v3642, 0
      %v3704 = vsel %vm284, %v3643, 0
      %v3707 = vsel %vm284, %v3644, 0
      %v3710 = vsel %vm284, %v3645, 0
      %v3713 = vsel %vm284, %v3646, 0
      %v3716 = vsel %vm284, %v3647, 0
      %v3719 = vsel %vm284, %v3648, 0
      %v3722 = vsel %vm284, %v3649, 0
      %v3725 = vsel %vm284, %v3650, 0
      %v3728 = vsel %vm284, %v3651, 0
      %v3731 = vsel %vm284, %v3652, 0
      %v3734 = vsel %vm284, %v3653, 0
      %v3737 = vsel %vm284, %v3654, 0
      %v3740 = vsel %vm284, %v3655, 0
      %v3743 = vsel %vm284, %v3656, 0
      %v3746 = vsel %vm284, %v3657, 0
      %v3749 = vsel %vm284, %v3658, 0
      %v3752 = vsel %vm284, %v3659, 0
      %v3755 = vsel %vm284, %v3660, 0
      %v3758 = vsel %vm284, %v3661, 0
      %v3761 = vsel %vm999, %v3663, 0
      %3763 = vmatprep.subr.mxu0 0.0
      %3764 = vmatpush1.msra.mxu0 0.0
      %3765 = vmatprep.subr.mxu0 0.0
      %3766 = vmatpush1.msra.mxu0 0.0
      %3767 = vmatprep.subr.mxu0 0.0
      %3768 = vmatpush1.msra.mxu0 0.0
      %3769 = vmatprep.subr.mxu0 0.0
      %3770 = vmatpush1.msra.mxu0 0.0
      %3771 = vmatprep.subr.mxu0 0.0
      %3772 = vmatpush1.msra.mxu0 0.0
      %3773 = vmatprep.subr.mxu0 0.0
      %3774 = vmatpush1.msra.mxu0 0.0
      %3775 = vmatprep.subr.mxu0 0.0
      %3776 = vmatpush1.msra.mxu0 0.0
      %3777 = vmatprep.subr.mxu0 0.0
      %3778 = vmatpush1.msra.mxu0 0.0
      %3779 = vmatprep.subr.mxu0 0.0
      %3780 = vmatpush1.msra.mxu0 0.0
      %3781 = vmatprep.subr.mxu0 0.0
      %3782 = vmatpush1.msra.mxu0 0.0
      %3783 = vmatprep.subr.mxu0 0.0
      %3784 = vmatpush1.msra.mxu0 0.0
      %3785 = vmatprep.subr.mxu0 0.0
      %3786 = vmatpush1.msra.mxu0 0.0
      %3787 = vmatprep.subr.mxu0 0.0
      %3788 = vmatpush1.msra.mxu0 0.0
      %3789 = vmatprep.subr.mxu0 0.0
      %3790 = vmatpush1.msra.mxu0 0.0
      %3791 = vmatprep.subr.mxu0 0.0
      %3792 = vmatpush1.msra.mxu0 0.0
      %3793 = vmatprep.subr.mxu0 0.0
      %3794 = vmatpush1.msra.mxu0 %v3761
      %3795 = vmatprep.subr.mxu0 0.0
      %3796 = vmatpush2.msra.mxu0 0.0
      %3797 = vmatprep.subr.mxu0 0.0
      %3798 = vmatpush2.msra.mxu0 0.0
      %3799 = vmatprep.subr.mxu0 0.0
      %3800 = vmatpush2.msra.mxu0 0.0
      %3801 = vmatprep.subr.mxu0 0.0
      %3802 = vmatpush2.msra.mxu0 0.0
      %3803 = vmatprep.subr.mxu0 0.0
      %3804 = vmatpush2.msra.mxu0 0.0
      %3805 = vmatprep.subr.mxu0 0.0
      %3806 = vmatpush2.msra.mxu0 0.0
      %3807 = vmatprep.subr.mxu0 0.0
      %3808 = vmatpush2.msra.mxu0 0.0
      %3809 = vmatprep.subr.mxu0 0.0
      %3810 = vmatpush2.msra.mxu0 0.0
      %3811 = vmatprep.subr.mxu0 0.0
      %3812 = vmatpush2.msra.mxu0 0.0
      %3813 = vmatprep.subr.mxu0 0.0
      %3814 = vmatpush2.msra.mxu0 0.0
      %3815 = vmatprep.subr.mxu0 0.0
      %3816 = vmatpush2.msra.mxu0 0.0
      %3817 = vmatprep.subr.mxu0 0.0
      %3818 = vmatpush2.msra.mxu0 0.0
      %3819 = vmatprep.subr.mxu0 0.0
      %3820 = vmatpush2.msra.mxu0 0.0
      %3821 = vmatprep.subr.mxu0 0.0
      %3822 = vmatpush2.msra.mxu0 0.0
      %3823 = vmatprep.subr.mxu0 0.0
      %3824 = vmatpush2.msra.mxu0 0.0
      %3825 = vmatprep.subr.mxu0 0.0
      %3826 = vmatpush2.msra.mxu0 0.0
      %3827 = vmatprep.mubr.f32.mxu0 0.0
      %3828 = vmatmul.mubr.f32.gmra.mxu0 %v3665
      %v3829 = vpop.f32.mrf.mxu0
      %v3830 = vadd.f32 0.0, %v3829
      %v3831 = vpop.f32.mrf.mxu0
      %3832 = vmatprep.mubr.f32.mxu0 0.0
      %3833 = vmatmul.mubr.f32.gmra.mxu0 %v3668
      %v3834 = vpop.f32.mrf.mxu0
      %v3835 = vadd.f32 0.0, %v3834
      %v3836 = vpop.f32.mrf.mxu0
      %3837 = vmatprep.mubr.f32.mxu0 0.0
      %3838 = vmatmul.mubr.f32.gmra.mxu0 %v3671
      %v3839 = vpop.f32.mrf.mxu0
      %v3840 = vadd.f32 0.0, %v3839
      %v3841 = vpop.f32.mrf.mxu0
      %3842 = vmatprep.mubr.f32.mxu0 0.0
      %3843 = vmatmul.mubr.f32.gmra.mxu0 %v3674
      %v3844 = vpop.f32.mrf.mxu0
      %v3845 = vadd.f32 0.0, %v3844
      %v3846 = vpop.f32.mrf.mxu0
      %3847 = vmatprep.mubr.f32.mxu0 0.0
      %3848 = vmatmul.mubr.f32.gmra.mxu0 %v3677
      %v3849 = vpop.f32.mrf.mxu0
      %v3850 = vadd.f32 0.0, %v3849
      %v3851 = vpop.f32.mrf.mxu0
      %3852 = vmatprep.mubr.f32.mxu0 0.0
      %3853 = vmatmul.mubr.f32.gmra.mxu0 %v3680
      %v3854 = vpop.f32.mrf.mxu0
      %v3855 = vadd.f32 0.0, %v3854
      %v3856 = vpop.f32.mrf.mxu0
      %3857 = vmatprep.mubr.f32.mxu0 0.0
      %3858 = vmatmul.mubr.f32.gmra.mxu0 %v3683
      %v3859 = vpop.f32.mrf.mxu0
      %v3860 = vadd.f32 0.0, %v3859
      %v3861 = vpop.f32.mrf.mxu0
      %3862 = vmatprep.mubr.f32.mxu0 0.0
      %3863 = vmatmul.mubr.f32.gmra.mxu0 %v3686
      %v3864 = vpop.f32.mrf.mxu0
      %v3865 = vadd.f32 0.0, %v3864
      %v3866 = vpop.f32.mrf.mxu0
      %3867 = vmatprep.mubr.f32.mxu0 0.0
      %3868 = vmatmul.mubr.f32.gmra.mxu0 %v3689
      %v3869 = vpop.f32.mrf.mxu0
      %v3870 = vadd.f32 0.0, %v3869
      %v3871 = vpop.f32.mrf.mxu0
      %3872 = vmatprep.mubr.f32.mxu0 0.0
      %3873 = vmatmul.mubr.f32.gmra.mxu0 %v3692
      %v3874 = vpop.f32.mrf.mxu0
      %v3875 = vadd.f32 0.0, %v3874
      %v3876 = vpop.f32.mrf.mxu0
      %3877 = vmatprep.mubr.f32.mxu0 0.0
      %3878 = vmatmul.mubr.f32.gmra.mxu0 %v3695
      %v3879 = vpop.f32.mrf.mxu0
      %v3880 = vadd.f32 0.0, %v3879
      %v3881 = vpop.f32.mrf.mxu0
      %3882 = vmatprep.mubr.f32.mxu0 0.0
      %3883 = vmatmul.mubr.f32.gmra.mxu0 %v3698
      %v3884 = vpop.f32.mrf.mxu0
      %v3885 = vadd.f32 0.0, %v3884
      %v3886 = vpop.f32.mrf.mxu0
      %3887 = vmatprep.mubr.f32.mxu0 0.0
      %3888 = vmatmul.mubr.f32.gmra.mxu0 %v3701
      %v3889 = vpop.f32.mrf.mxu0
      %v3890 = vadd.f32 0.0, %v3889
      %v3891 = vpop.f32.mrf.mxu0
      %3892 = vmatprep.mubr.f32.mxu0 0.0
      %3893 = vmatmul.mubr.f32.gmra.mxu0 %v3704
      %v3894 = vpop.f32.mrf.mxu0
      %v3895 = vadd.f32 0.0, %v3894
      %v3896 = vpop.f32.mrf.mxu0
      %3897 = vmatprep.mubr.f32.mxu0 0.0
      %3898 = vmatmul.mubr.f32.gmra.mxu0 %v3707
      %v3899 = vpop.f32.mrf.mxu0
      %v3900 = vadd.f32 0.0, %v3899
      %v3901 = vpop.f32.mrf.mxu0
      %3902 = vmatprep.mubr.f32.mxu0 0.0
      %3903 = vmatmul.mubr.f32.gmra.mxu0 %v3710
      %v3904 = vpop.f32.mrf.mxu0
      %v3905 = vadd.f32 0.0, %v3904
      %v3906 = vpop.f32.mrf.mxu0
      %3907 = vmatprep.mubr.f32.mxu0 0.0
      %3908 = vmatmul.mubr.f32.gmra.mxu0 %v3713
      %v3909 = vpop.f32.mrf.mxu0
      %v3910 = vadd.f32 0.0, %v3909
      %v3911 = vpop.f32.mrf.mxu0
      %3912 = vmatprep.mubr.f32.mxu0 0.0
      %3913 = vmatmul.mubr.f32.gmra.mxu0 %v3716
      %v3914 = vpop.f32.mrf.mxu0
      %v3915 = vadd.f32 0.0, %v3914
      %v3916 = vpop.f32.mrf.mxu0
      %3917 = vmatprep.mubr.f32.mxu0 0.0
      %3918 = vmatmul.mubr.f32.gmra.mxu0 %v3719
      %v3919 = vpop.f32.mrf.mxu0
      %v3920 = vadd.f32 0.0, %v3919
      %v3921 = vpop.f32.mrf.mxu0
      %3922 = vmatprep.mubr.f32.mxu0 0.0
      %3923 = vmatmul.mubr.f32.gmra.mxu0 %v3722
      %v3924 = vpop.f32.mrf.mxu0
      %v3925 = vadd.f32 0.0, %v3924
      %v3926 = vpop.f32.mrf.mxu0
      %3927 = vmatprep.mubr.f32.mxu0 0.0
      %3928 = vmatmul.mubr.f32.gmra.mxu0 %v3725
      %v3929 = vpop.f32.mrf.mxu0
      %v3930 = vadd.f32 0.0, %v3929
      %v3931 = vpop.f32.mrf.mxu0
      %3932 = vmatprep.mubr.f32.mxu0 0.0
      %3933 = vmatmul.mubr.f32.gmra.mxu0 %v3728
      %v3934 = vpop.f32.mrf.mxu0
      %v3935 = vadd.f32 0.0, %v3934
      %v3936 = vpop.f32.mrf.mxu0
      %3937 = vmatprep.mubr.f32.mxu0 0.0
      %3938 = vmatmul.mubr.f32.gmra.mxu0 %v3731
      %v3939 = vpop.f32.mrf.mxu0
      %v3940 = vadd.f32 0.0, %v3939
      %v3941 = vpop.f32.mrf.mxu0
      %3942 = vmatprep.mubr.f32.mxu0 0.0
      %3943 = vmatmul.mubr.f32.gmra.mxu0 %v3734
      %v3944 = vpop.f32.mrf.mxu0
      %v3945 = vadd.f32 0.0, %v3944
      %v3946 = vpop.f32.mrf.mxu0
      %3947 = vmatprep.mubr.f32.mxu0 0.0
      %3948 = vmatmul.mubr.f32.gmra.mxu0 %v3737
      %v3949 = vpop.f32.mrf.mxu0
      %v3950 = vadd.f32 0.0, %v3949
      %v3951 = vpop.f32.mrf.mxu0
      %3952 = vmatprep.mubr.f32.mxu0 0.0
      %3953 = vmatmul.mubr.f32.gmra.mxu0 %v3740
      %v3954 = vpop.f32.mrf.mxu0
      %v3955 = vadd.f32 0.0, %v3954
      %v3956 = vpop.f32.mrf.mxu0
      %3957 = vmatprep.mubr.f32.mxu0 0.0
      %3958 = vmatmul.mubr.f32.gmra.mxu0 %v3743
      %v3959 = vpop.f32.mrf.mxu0
      %v3960 = vadd.f32 0.0, %v3959
      %v3961 = vpop.f32.mrf.mxu0
      %3962 = vmatprep.mubr.f32.mxu0 0.0
      %3963 = vmatmul.mubr.f32.gmra.mxu0 %v3746
      %v3964 = vpop.f32.mrf.mxu0
      %v3965 = vadd.f32 0.0, %v3964
      %v3966 = vpop.f32.mrf.mxu0
      %3967 = vmatprep.mubr.f32.mxu0 0.0
      %3968 = vmatmul.mubr.f32.gmra.mxu0 %v3749
      %v3969 = vpop.f32.mrf.mxu0
      %v3970 = vadd.f32 0.0, %v3969
      %v3971 = vpop.f32.mrf.mxu0
      %3972 = vmatprep.mubr.f32.mxu0 0.0
      %3973 = vmatmul.mubr.f32.gmra.mxu0 %v3752
      %v3974 = vpop.f32.mrf.mxu0
      %v3975 = vadd.f32 0.0, %v3974
      %v3976 = vpop.f32.mrf.mxu0
      %3977 = vmatprep.mubr.f32.mxu0 0.0
      %3978 = vmatmul.mubr.f32.gmra.mxu0 %v3755
      %v3979 = vpop.f32.mrf.mxu0
      %v3980 = vadd.f32 0.0, %v3979
      %v3981 = vpop.f32.mrf.mxu0
      %3982 = vmatprep.mubr.f32.mxu0 0.0
      %3983 = vmatmul.mubr.f32.gmra.mxu0 %v3758
      %v3984 = vpop.f32.mrf.mxu0
      %v3985 = vadd.f32 0.0, %v3984
      %v3986 = vpop.f32.mrf.mxu0
      %3987 = vdwg.mxu0
      %v3988 = vadd.f32 %v3598, %v3830
      %v3989 = vadd.f32 %v3599, %v3835
      %v3990 = vadd.f32 %v3600, %v3840
      %v3991 = vadd.f32 %v3601, %v3845
      %v3992 = vadd.f32 %v3602, %v3850
      %v3993 = vadd.f32 %v3603, %v3855
      %v3994 = vadd.f32 %v3604, %v3860
      %v3995 = vadd.f32 %v3605, %v3865
      %v3996 = vadd.f32 %v3606, %v3870
      %v3997 = vadd.f32 %v3607, %v3875
      %v3998 = vadd.f32 %v3608, %v3880
      %v3999 = vadd.f32 %v3609, %v3885
      %v4000 = vadd.f32 %v3610, %v3890
      %v4001 = vadd.f32 %v3611, %v3895
      %v4002 = vadd.f32 %v3612, %v3900
      %v4003 = vadd.f32 %v3613, %v3905
      %v4004 = vadd.f32 %v3614, %v3910
      %v4005 = vadd.f32 %v3615, %v3915
      %v4006 = vadd.f32 %v3616, %v3920
      %v4007 = vadd.f32 %v3617, %v3925
      %v4008 = vadd.f32 %v3618, %v3930
      %v4009 = vadd.f32 %v3619, %v3935
      %v4010 = vadd.f32 %v3620, %v3940
      %v4011 = vadd.f32 %v3621, %v3945
      %v4012 = vadd.f32 %v3622, %v3950
      %v4013 = vadd.f32 %v3623, %v3955
      %v4014 = vadd.f32 %v3624, %v3960
      %v4015 = vadd.f32 %v3625, %v3965
      %v4016 = vadd.f32 %v3626, %v3970
      %v4017 = vadd.f32 %v3627, %v3975
      %v4018 = vadd.f32 %v3628, %v3980
      %v4019 = vadd.f32 %v3629, %v3985
      %v4020 = vld [vmem:[#allocation2 + $0x29] sm:$0xff]
      %v4021 = vld [vmem:[#allocation2 + $0x31] sm:$0xff]
      %v4022 = vld [vmem:[#allocation2 + $0x39] sm:$0xff]
      %v4023 = vld [vmem:[#allocation2 + $0x41] sm:$0xff]
      %v4024 = vld [vmem:[#allocation2 + $0x49] sm:$0xff]
      %v4025 = vld [vmem:[#allocation2 + $0x51] sm:$0xff]
      %v4026 = vld [vmem:[#allocation2 + $0x59] sm:$0xff]
      %v4027 = vld [vmem:[#allocation2 + $0x61] sm:$0xff]
      %v4028 = vld [vmem:[#allocation2 + $0x69] sm:$0xff]
      %v4029 = vld [vmem:[#allocation2 + $0x71] sm:$0xff]
      %v4030 = vld [vmem:[#allocation2 + $0x79] sm:$0xff]
      %v4031 = vld [vmem:[#allocation2 + $0x81] sm:$0xff]
      %v4032 = vld [vmem:[#allocation2 + $0x89] sm:$0xff]
      %v4033 = vld [vmem:[#allocation2 + $0x91] sm:$0xff]
      %v4034 = vld [vmem:[#allocation2 + $0x99] sm:$0xff]
      %v4035 = vld [vmem:[#allocation2 + $0xa1] sm:$0xff]
      %v4036 = vld [vmem:[#allocation2 + $0xa9] sm:$0xff]
      %v4037 = vld [vmem:[#allocation2 + $0xb1] sm:$0xff]
      %v4038 = vld [vmem:[#allocation2 + $0xb9] sm:$0xff]
      %v4039 = vld [vmem:[#allocation2 + $0xc1] sm:$0xff]
      %v4040 = vld [vmem:[#allocation2 + $0xc9] sm:$0xff]
      %v4041 = vld [vmem:[#allocation2 + $0xd1] sm:$0xff]
      %v4042 = vld [vmem:[#allocation2 + $0xd9] sm:$0xff]
      %v4043 = vld [vmem:[#allocation2 + $0xe1] sm:$0xff]
      %v4044 = vld [vmem:[#allocation2 + $0xe9] sm:$0xff]
      %v4045 = vld [vmem:[#allocation2 + $0xf1] sm:$0xff]
      %v4046 = vld [vmem:[#allocation2 + $0xf9] sm:$0xff]
      %v4047 = vld [vmem:[#allocation2 + $0x101] sm:$0xff]
      %v4048 = vld [vmem:[#allocation2 + $0x109] sm:$0xff]
      %v4049 = vld [vmem:[#allocation2 + $0x111] sm:$0xff]
      %v4050 = vld [vmem:[#allocation2 + $0x119] sm:$0xff]
      %v4051 = vld [vmem:[#allocation2 + $0x121] sm:$0xff]
      %v4052 = vsel %vm772, %v4020, 0.0
      %v4053 = vsel %vm773, %v4021, 0.0
      %v4054 = vsel %vm774, %v4022, 0.0
      %v4055 = vsel %vm775, %v4023, 0.0
      %v4056 = vsel %vm776, %v4024, 0.0
      %v4057 = vsel %vm777, %v4025, 0.0
      %v4058 = vsel %vm778, %v4026, 0.0
      %v4059 = vsel %vm779, %v4027, 0.0
      %v4060 = vsel %vm780, %v4028, 0.0
      %v4061 = vsel %vm781, %v4029, 0.0
      %v4062 = vsel %vm782, %v4030, 0.0
      %v4063 = vsel %vm783, %v4031, 0.0
      %v4064 = vsel %vm784, %v4032, 0.0
      %v4065 = vsel %vm785, %v4033, 0.0
      %v4066 = vsel %vm786, %v4034, 0.0
      %v4067 = vsel %vm787, %v4035, 0.0
      %v4068 = vsel %vm788, %v4036, 0.0
      %v4069 = vsel %vm789, %v4037, 0.0
      %v4070 = vsel %vm790, %v4038, 0.0
      %v4071 = vsel %vm791, %v4039, 0.0
      %v4072 = vsel %vm792, %v4040, 0.0
      %v4073 = vsel %vm793, %v4041, 0.0
      %v4074 = vsel %vm794, %v4042, 0.0
      %v4075 = vsel %vm795, %v4043, 0.0
      %v4076 = vsel %vm796, %v4044, 0.0
      %v4077 = vsel %vm797, %v4045, 0.0
      %v4078 = vsel %vm798, %v4046, 0.0
      %v4079 = vsel %vm799, %v4047, 0.0
      %v4080 = vsel %vm800, %v4048, 0.0
      %v4081 = vsel %vm801, %v4049, 0.0
      %v4082 = vsel %vm802, %v4050, 0.0
      %v4083 = vsel %vm803, %v4051, 0.0
      %s4084 = scalar_lea.vmem %s1, 32
      %v4085 = vld [vmem:[%s4084] sm:$0xf]
      %v4087 = vsel %vm284, %v4052, 0
      %v4090 = vsel %vm284, %v4053, 0
      %v4093 = vsel %vm284, %v4054, 0
      %v4096 = vsel %vm284, %v4055, 0
      %v4099 = vsel %vm284, %v4056, 0
      %v4102 = vsel %vm284, %v4057, 0
      %v4105 = vsel %vm284, %v4058, 0
      %v4108 = vsel %vm284, %v4059, 0
      %v4111 = vsel %vm284, %v4060, 0
      %v4114 = vsel %vm284, %v4061, 0
      %v4117 = vsel %vm284, %v4062, 0
      %v4120 = vsel %vm284, %v4063, 0
      %v4123 = vsel %vm284, %v4064, 0
      %v4126 = vsel %vm284, %v4065, 0
      %v4129 = vsel %vm284, %v4066, 0
      %v4132 = vsel %vm284, %v4067, 0
      %v4135 = vsel %vm284, %v4068, 0
      %v4138 = vsel %vm284, %v4069, 0
      %v4141 = vsel %vm284, %v4070, 0
      %v4144 = vsel %vm284, %v4071, 0
      %v4147 = vsel %vm284, %v4072, 0
      %v4150 = vsel %vm284, %v4073, 0
      %v4153 = vsel %vm284, %v4074, 0
      %v4156 = vsel %vm284, %v4075, 0
      %v4159 = vsel %vm284, %v4076, 0
      %v4162 = vsel %vm284, %v4077, 0
      %v4165 = vsel %vm284, %v4078, 0
      %v4168 = vsel %vm284, %v4079, 0
      %v4171 = vsel %vm284, %v4080, 0
      %v4174 = vsel %vm284, %v4081, 0
      %v4177 = vsel %vm284, %v4082, 0
      %v4180 = vsel %vm284, %v4083, 0
      %v4183 = vsel %vm999, %v4085, 0
      %4185 = vmatprep.subr.mxu0 0.0
      %4186 = vmatpush1.msra.mxu0 0.0
      %4187 = vmatprep.subr.mxu0 0.0
      %4188 = vmatpush1.msra.mxu0 0.0
      %4189 = vmatprep.subr.mxu0 0.0
      %4190 = vmatpush1.msra.mxu0 0.0
      %4191 = vmatprep.subr.mxu0 0.0
      %4192 = vmatpush1.msra.mxu0 0.0
      %4193 = vmatprep.subr.mxu0 0.0
      %4194 = vmatpush1.msra.mxu0 0.0
      %4195 = vmatprep.subr.mxu0 0.0
      %4196 = vmatpush1.msra.mxu0 0.0
      %4197 = vmatprep.subr.mxu0 0.0
      %4198 = vmatpush1.msra.mxu0 0.0
      %4199 = vmatprep.subr.mxu0 0.0
      %4200 = vmatpush1.msra.mxu0 0.0
      %4201 = vmatprep.subr.mxu0 0.0
      %4202 = vmatpush1.msra.mxu0 0.0
      %4203 = vmatprep.subr.mxu0 0.0
      %4204 = vmatpush1.msra.mxu0 0.0
      %4205 = vmatprep.subr.mxu0 0.0
      %4206 = vmatpush1.msra.mxu0 0.0
      %4207 = vmatprep.subr.mxu0 0.0
      %4208 = vmatpush1.msra.mxu0 0.0
      %4209 = vmatprep.subr.mxu0 0.0
      %4210 = vmatpush1.msra.mxu0 0.0
      %4211 = vmatprep.subr.mxu0 0.0
      %4212 = vmatpush1.msra.mxu0 0.0
      %4213 = vmatprep.subr.mxu0 0.0
      %4214 = vmatpush1.msra.mxu0 0.0
      %4215 = vmatprep.subr.mxu0 0.0
      %4216 = vmatpush1.msra.mxu0 %v4183
      %4217 = vmatprep.subr.mxu0 0.0
      %4218 = vmatpush2.msra.mxu0 0.0
      %4219 = vmatprep.subr.mxu0 0.0
      %4220 = vmatpush2.msra.mxu0 0.0
      %4221 = vmatprep.subr.mxu0 0.0
      %4222 = vmatpush2.msra.mxu0 0.0
      %4223 = vmatprep.subr.mxu0 0.0
      %4224 = vmatpush2.msra.mxu0 0.0
      %4225 = vmatprep.subr.mxu0 0.0
      %4226 = vmatpush2.msra.mxu0 0.0
      %4227 = vmatprep.subr.mxu0 0.0
      %4228 = vmatpush2.msra.mxu0 0.0
      %4229 = vmatprep.subr.mxu0 0.0
      %4230 = vmatpush2.msra.mxu0 0.0
      %4231 = vmatprep.subr.mxu0 0.0
      %4232 = vmatpush2.msra.mxu0 0.0
      %4233 = vmatprep.subr.mxu0 0.0
      %4234 = vmatpush2.msra.mxu0 0.0
      %4235 = vmatprep.subr.mxu0 0.0
      %4236 = vmatpush2.msra.mxu0 0.0
      %4237 = vmatprep.subr.mxu0 0.0
      %4238 = vmatpush2.msra.mxu0 0.0
      %4239 = vmatprep.subr.mxu0 0.0
      %4240 = vmatpush2.msra.mxu0 0.0
      %4241 = vmatprep.subr.mxu0 0.0
      %4242 = vmatpush2.msra.mxu0 0.0
      %4243 = vmatprep.subr.mxu0 0.0
      %4244 = vmatpush2.msra.mxu0 0.0
      %4245 = vmatprep.subr.mxu0 0.0
      %4246 = vmatpush2.msra.mxu0 0.0
      %4247 = vmatprep.subr.mxu0 0.0
      %4248 = vmatpush2.msra.mxu0 0.0
      %4249 = vmatprep.mubr.f32.mxu0 0.0
      %4250 = vmatmul.mubr.f32.gmra.mxu0 %v4087
      %v4251 = vpop.f32.mrf.mxu0
      %v4252 = vadd.f32 0.0, %v4251
      %v4253 = vpop.f32.mrf.mxu0
      %4254 = vmatprep.mubr.f32.mxu0 0.0
      %4255 = vmatmul.mubr.f32.gmra.mxu0 %v4090
      %v4256 = vpop.f32.mrf.mxu0
      %v4257 = vadd.f32 0.0, %v4256
      %v4258 = vpop.f32.mrf.mxu0
      %4259 = vmatprep.mubr.f32.mxu0 0.0
      %4260 = vmatmul.mubr.f32.gmra.mxu0 %v4093
      %v4261 = vpop.f32.mrf.mxu0
      %v4262 = vadd.f32 0.0, %v4261
      %v4263 = vpop.f32.mrf.mxu0
      %4264 = vmatprep.mubr.f32.mxu0 0.0
      %4265 = vmatmul.mubr.f32.gmra.mxu0 %v4096
      %v4266 = vpop.f32.mrf.mxu0
      %v4267 = vadd.f32 0.0, %v4266
      %v4268 = vpop.f32.mrf.mxu0
      %4269 = vmatprep.mubr.f32.mxu0 0.0
      %4270 = vmatmul.mubr.f32.gmra.mxu0 %v4099
      %v4271 = vpop.f32.mrf.mxu0
      %v4272 = vadd.f32 0.0, %v4271
      %v4273 = vpop.f32.mrf.mxu0
      %4274 = vmatprep.mubr.f32.mxu0 0.0
      %4275 = vmatmul.mubr.f32.gmra.mxu0 %v4102
      %v4276 = vpop.f32.mrf.mxu0
      %v4277 = vadd.f32 0.0, %v4276
      %v4278 = vpop.f32.mrf.mxu0
      %4279 = vmatprep.mubr.f32.mxu0 0.0
      %4280 = vmatmul.mubr.f32.gmra.mxu0 %v4105
      %v4281 = vpop.f32.mrf.mxu0
      %v4282 = vadd.f32 0.0, %v4281
      %v4283 = vpop.f32.mrf.mxu0
      %4284 = vmatprep.mubr.f32.mxu0 0.0
      %4285 = vmatmul.mubr.f32.gmra.mxu0 %v4108
      %v4286 = vpop.f32.mrf.mxu0
      %v4287 = vadd.f32 0.0, %v4286
      %v4288 = vpop.f32.mrf.mxu0
      %4289 = vmatprep.mubr.f32.mxu0 0.0
      %4290 = vmatmul.mubr.f32.gmra.mxu0 %v4111
      %v4291 = vpop.f32.mrf.mxu0
      %v4292 = vadd.f32 0.0, %v4291
      %v4293 = vpop.f32.mrf.mxu0
      %4294 = vmatprep.mubr.f32.mxu0 0.0
      %4295 = vmatmul.mubr.f32.gmra.mxu0 %v4114
      %v4296 = vpop.f32.mrf.mxu0
      %v4297 = vadd.f32 0.0, %v4296
      %v4298 = vpop.f32.mrf.mxu0
      %4299 = vmatprep.mubr.f32.mxu0 0.0
      %4300 = vmatmul.mubr.f32.gmra.mxu0 %v4117
      %v4301 = vpop.f32.mrf.mxu0
      %v4302 = vadd.f32 0.0, %v4301
      %v4303 = vpop.f32.mrf.mxu0
      %4304 = vmatprep.mubr.f32.mxu0 0.0
      %4305 = vmatmul.mubr.f32.gmra.mxu0 %v4120
      %v4306 = vpop.f32.mrf.mxu0
      %v4307 = vadd.f32 0.0, %v4306
      %v4308 = vpop.f32.mrf.mxu0
      %4309 = vmatprep.mubr.f32.mxu0 0.0
      %4310 = vmatmul.mubr.f32.gmra.mxu0 %v4123
      %v4311 = vpop.f32.mrf.mxu0
      %v4312 = vadd.f32 0.0, %v4311
      %v4313 = vpop.f32.mrf.mxu0
      %4314 = vmatprep.mubr.f32.mxu0 0.0
      %4315 = vmatmul.mubr.f32.gmra.mxu0 %v4126
      %v4316 = vpop.f32.mrf.mxu0
      %v4317 = vadd.f32 0.0, %v4316
      %v4318 = vpop.f32.mrf.mxu0
      %4319 = vmatprep.mubr.f32.mxu0 0.0
      %4320 = vmatmul.mubr.f32.gmra.mxu0 %v4129
      %v4321 = vpop.f32.mrf.mxu0
      %v4322 = vadd.f32 0.0, %v4321
      %v4323 = vpop.f32.mrf.mxu0
      %4324 = vmatprep.mubr.f32.mxu0 0.0
      %4325 = vmatmul.mubr.f32.gmra.mxu0 %v4132
      %v4326 = vpop.f32.mrf.mxu0
      %v4327 = vadd.f32 0.0, %v4326
      %v4328 = vpop.f32.mrf.mxu0
      %4329 = vmatprep.mubr.f32.mxu0 0.0
      %4330 = vmatmul.mubr.f32.gmra.mxu0 %v4135
      %v4331 = vpop.f32.mrf.mxu0
      %v4332 = vadd.f32 0.0, %v4331
      %v4333 = vpop.f32.mrf.mxu0
      %4334 = vmatprep.mubr.f32.mxu0 0.0
      %4335 = vmatmul.mubr.f32.gmra.mxu0 %v4138
      %v4336 = vpop.f32.mrf.mxu0
      %v4337 = vadd.f32 0.0, %v4336
      %v4338 = vpop.f32.mrf.mxu0
      %4339 = vmatprep.mubr.f32.mxu0 0.0
      %4340 = vmatmul.mubr.f32.gmra.mxu0 %v4141
      %v4341 = vpop.f32.mrf.mxu0
      %v4342 = vadd.f32 0.0, %v4341
      %v4343 = vpop.f32.mrf.mxu0
      %4344 = vmatprep.mubr.f32.mxu0 0.0
      %4345 = vmatmul.mubr.f32.gmra.mxu0 %v4144
      %v4346 = vpop.f32.mrf.mxu0
      %v4347 = vadd.f32 0.0, %v4346
      %v4348 = vpop.f32.mrf.mxu0
      %4349 = vmatprep.mubr.f32.mxu0 0.0
      %4350 = vmatmul.mubr.f32.gmra.mxu0 %v4147
      %v4351 = vpop.f32.mrf.mxu0
      %v4352 = vadd.f32 0.0, %v4351
      %v4353 = vpop.f32.mrf.mxu0
      %4354 = vmatprep.mubr.f32.mxu0 0.0
      %4355 = vmatmul.mubr.f32.gmra.mxu0 %v4150
      %v4356 = vpop.f32.mrf.mxu0
      %v4357 = vadd.f32 0.0, %v4356
      %v4358 = vpop.f32.mrf.mxu0
      %4359 = vmatprep.mubr.f32.mxu0 0.0
      %4360 = vmatmul.mubr.f32.gmra.mxu0 %v4153
      %v4361 = vpop.f32.mrf.mxu0
      %v4362 = vadd.f32 0.0, %v4361
      %v4363 = vpop.f32.mrf.mxu0
      %4364 = vmatprep.mubr.f32.mxu0 0.0
      %4365 = vmatmul.mubr.f32.gmra.mxu0 %v4156
      %v4366 = vpop.f32.mrf.mxu0
      %v4367 = vadd.f32 0.0, %v4366
      %v4368 = vpop.f32.mrf.mxu0
      %4369 = vmatprep.mubr.f32.mxu0 0.0
      %4370 = vmatmul.mubr.f32.gmra.mxu0 %v4159
      %v4371 = vpop.f32.mrf.mxu0
      %v4372 = vadd.f32 0.0, %v4371
      %v4373 = vpop.f32.mrf.mxu0
      %4374 = vmatprep.mubr.f32.mxu0 0.0
      %4375 = vmatmul.mubr.f32.gmra.mxu0 %v4162
      %v4376 = vpop.f32.mrf.mxu0
      %v4377 = vadd.f32 0.0, %v4376
      %v4378 = vpop.f32.mrf.mxu0
      %4379 = vmatprep.mubr.f32.mxu0 0.0
      %4380 = vmatmul.mubr.f32.gmra.mxu0 %v4165
      %v4381 = vpop.f32.mrf.mxu0
      %v4382 = vadd.f32 0.0, %v4381
      %v4383 = vpop.f32.mrf.mxu0
      %4384 = vmatprep.mubr.f32.mxu0 0.0
      %4385 = vmatmul.mubr.f32.gmra.mxu0 %v4168
      %v4386 = vpop.f32.mrf.mxu0
      %v4387 = vadd.f32 0.0, %v4386
      %v4388 = vpop.f32.mrf.mxu0
      %4389 = vmatprep.mubr.f32.mxu0 0.0
      %4390 = vmatmul.mubr.f32.gmra.mxu0 %v4171
      %v4391 = vpop.f32.mrf.mxu0
      %v4392 = vadd.f32 0.0, %v4391
      %v4393 = vpop.f32.mrf.mxu0
      %4394 = vmatprep.mubr.f32.mxu0 0.0
      %4395 = vmatmul.mubr.f32.gmra.mxu0 %v4174
      %v4396 = vpop.f32.mrf.mxu0
      %v4397 = vadd.f32 0.0, %v4396
      %v4398 = vpop.f32.mrf.mxu0
      %4399 = vmatprep.mubr.f32.mxu0 0.0
      %4400 = vmatmul.mubr.f32.gmra.mxu0 %v4177
      %v4401 = vpop.f32.mrf.mxu0
      %v4402 = vadd.f32 0.0, %v4401
      %v4403 = vpop.f32.mrf.mxu0
      %4404 = vmatprep.mubr.f32.mxu0 0.0
      %4405 = vmatmul.mubr.f32.gmra.mxu0 %v4180
      %v4406 = vpop.f32.mrf.mxu0
      %v4407 = vadd.f32 0.0, %v4406
      %v4408 = vpop.f32.mrf.mxu0
      %4409 = vdwg.mxu0
      %v4410 = vadd.f32 %v3988, %v4252
      %v4411 = vadd.f32 %v3989, %v4257
      %v4412 = vadd.f32 %v3990, %v4262
      %v4413 = vadd.f32 %v3991, %v4267
      %v4414 = vadd.f32 %v3992, %v4272
      %v4415 = vadd.f32 %v3993, %v4277
      %v4416 = vadd.f32 %v3994, %v4282
      %v4417 = vadd.f32 %v3995, %v4287
      %v4418 = vadd.f32 %v3996, %v4292
      %v4419 = vadd.f32 %v3997, %v4297
      %v4420 = vadd.f32 %v3998, %v4302
      %v4421 = vadd.f32 %v3999, %v4307
      %v4422 = vadd.f32 %v4000, %v4312
      %v4423 = vadd.f32 %v4001, %v4317
      %v4424 = vadd.f32 %v4002, %v4322
      %v4425 = vadd.f32 %v4003, %v4327
      %v4426 = vadd.f32 %v4004, %v4332
      %v4427 = vadd.f32 %v4005, %v4337
      %v4428 = vadd.f32 %v4006, %v4342
      %v4429 = vadd.f32 %v4007, %v4347
      %v4430 = vadd.f32 %v4008, %v4352
      %v4431 = vadd.f32 %v4009, %v4357
      %v4432 = vadd.f32 %v4010, %v4362
      %v4433 = vadd.f32 %v4011, %v4367
      %v4434 = vadd.f32 %v4012, %v4372
      %v4435 = vadd.f32 %v4013, %v4377
      %v4436 = vadd.f32 %v4014, %v4382
      %v4437 = vadd.f32 %v4015, %v4387
      %v4438 = vadd.f32 %v4016, %v4392
      %v4439 = vadd.f32 %v4017, %v4397
      %v4440 = vadd.f32 %v4018, %v4402
      %v4441 = vadd.f32 %v4019, %v4407
      %v4442 = vld [vmem:[%s2] sm:$0x1]
      %v4444 = vlaneseq
      %v4445 = vshrl.u32 %v4444, 7
      %v4446 = vsub.s32 0, %v4445
      %v4447 = vrot.slane %v4442, %v4446
      %v4449 = vadd.f32 %v4410, %v4447
      %v4450 = vadd.f32 %v4411, %v4447
      %v4451 = vadd.f32 %v4412, %v4447
      %v4452 = vadd.f32 %v4413, %v4447
      %v4453 = vadd.f32 %v4414, %v4447
      %v4454 = vadd.f32 %v4415, %v4447
      %v4455 = vadd.f32 %v4416, %v4447
      %v4456 = vadd.f32 %v4417, %v4447
      %v4457 = vadd.f32 %v4418, %v4447
      %v4458 = vadd.f32 %v4419, %v4447
      %v4459 = vadd.f32 %v4420, %v4447
      %v4460 = vadd.f32 %v4421, %v4447
      %v4461 = vadd.f32 %v4422, %v4447
      %v4462 = vadd.f32 %v4423, %v4447
      %v4463 = vadd.f32 %v4424, %v4447
      %v4464 = vadd.f32 %v4425, %v4447
      %v4465 = vadd.f32 %v4426, %v4447
      %v4466 = vadd.f32 %v4427, %v4447
      %v4467 = vadd.f32 %v4428, %v4447
      %v4468 = vadd.f32 %v4429, %v4447
      %v4469 = vadd.f32 %v4430, %v4447
      %v4470 = vadd.f32 %v4431, %v4447
      %v4471 = vadd.f32 %v4432, %v4447
      %v4472 = vadd.f32 %v4433, %v4447
      %v4473 = vadd.f32 %v4434, %v4447
      %v4474 = vadd.f32 %v4435, %v4447
      %v4475 = vadd.f32 %v4436, %v4447
      %v4476 = vadd.f32 %v4437, %v4447
      %v4477 = vadd.f32 %v4438, %v4447
      %v4478 = vadd.f32 %v4439, %v4447
      %v4479 = vadd.f32 %v4440, %v4447
      %v4480 = vadd.f32 %v4441, %v4447
      %v4481 = vxor.u32 %v4449, 2147483648
      %v4482 = vxor.u32 %v4450, 2147483648
      %v4483 = vxor.u32 %v4451, 2147483648
      %v4484 = vxor.u32 %v4452, 2147483648
      %v4485 = vxor.u32 %v4453, 2147483648
      %v4486 = vxor.u32 %v4454, 2147483648
      %v4487 = vxor.u32 %v4455, 2147483648
      %v4488 = vxor.u32 %v4456, 2147483648
      %v4489 = vxor.u32 %v4457, 2147483648
      %v4490 = vxor.u32 %v4458, 2147483648
      %v4491 = vxor.u32 %v4459, 2147483648
      %v4492 = vxor.u32 %v4460, 2147483648
      %v4493 = vxor.u32 %v4461, 2147483648
      %v4494 = vxor.u32 %v4462, 2147483648
      %v4495 = vxor.u32 %v4463, 2147483648
      %v4496 = vxor.u32 %v4464, 2147483648
      %v4497 = vxor.u32 %v4465, 2147483648
      %v4498 = vxor.u32 %v4466, 2147483648
      %v4499 = vxor.u32 %v4467, 2147483648
      %v4500 = vxor.u32 %v4468, 2147483648
      %v4501 = vxor.u32 %v4469, 2147483648
      %v4502 = vxor.u32 %v4470, 2147483648
      %v4503 = vxor.u32 %v4471, 2147483648
      %v4504 = vxor.u32 %v4472, 2147483648
      %v4505 = vxor.u32 %v4473, 2147483648
      %v4506 = vxor.u32 %v4474, 2147483648
      %v4507 = vxor.u32 %v4475, 2147483648
      %v4508 = vxor.u32 %v4476, 2147483648
      %v4509 = vxor.u32 %v4477, 2147483648
      %v4510 = vxor.u32 %v4478, 2147483648
      %v4511 = vxor.u32 %v4479, 2147483648
      %v4512 = vxor.u32 %v4480, 2147483648
      %v4513 = vmul.f32 %v4481, 1.442695
      %v4514 = vpow.pop %v4513
      %v4515 = vmul.f32 %v4482, 1.442695
      %v4516 = vpow.pop %v4515
      %v4517 = vmul.f32 %v4483, 1.442695
      %v4518 = vpow.pop %v4517
      %v4519 = vmul.f32 %v4484, 1.442695
      %v4520 = vpow.pop %v4519
      %v4521 = vmul.f32 %v4485, 1.442695
      %v4522 = vpow.pop %v4521
      %v4523 = vmul.f32 %v4486, 1.442695
      %v4524 = vpow.pop %v4523
      %v4525 = vmul.f32 %v4487, 1.442695
      %v4526 = vpow.pop %v4525
      %v4527 = vmul.f32 %v4488, 1.442695
      %v4528 = vpow.pop %v4527
      %v4529 = vmul.f32 %v4489, 1.442695
      %v4530 = vpow.pop %v4529
      %v4531 = vmul.f32 %v4490, 1.442695
      %v4532 = vpow.pop %v4531
      %v4533 = vmul.f32 %v4491, 1.442695
      %v4534 = vpow.pop %v4533
      %v4535 = vmul.f32 %v4492, 1.442695
      %v4536 = vpow.pop %v4535
      %v4537 = vmul.f32 %v4493, 1.442695
      %v4538 = vpow.pop %v4537
      %v4539 = vmul.f32 %v4494, 1.442695
      %v4540 = vpow.pop %v4539
      %v4541 = vmul.f32 %v4495, 1.442695
      %v4542 = vpow.pop %v4541
      %v4543 = vmul.f32 %v4496, 1.442695
      %v4544 = vpow.pop %v4543
      %v4545 = vmul.f32 %v4497, 1.442695
      %v4546 = vpow.pop %v4545
      %v4547 = vmul.f32 %v4498, 1.442695
      %v4548 = vpow.pop %v4547
      %v4549 = vmul.f32 %v4499, 1.442695
      %v4550 = vpow.pop %v4549
      %v4551 = vmul.f32 %v4500, 1.442695
      %v4552 = vpow.pop %v4551
      %v4553 = vmul.f32 %v4501, 1.442695
      %v4554 = vpow.pop %v4553
      %v4555 = vmul.f32 %v4502, 1.442695
      %v4556 = vpow.pop %v4555
      %v4557 = vmul.f32 %v4503, 1.442695
      %v4558 = vpow.pop %v4557
      %v4559 = vmul.f32 %v4504, 1.442695
      %v4560 = vpow.pop %v4559
      %v4561 = vmul.f32 %v4505, 1.442695
      %v4562 = vpow.pop %v4561
      %v4563 = vmul.f32 %v4506, 1.442695
      %v4564 = vpow.pop %v4563
      %v4565 = vmul.f32 %v4507, 1.442695
      %v4566 = vpow.pop %v4565
      %v4567 = vmul.f32 %v4508, 1.442695
      %v4568 = vpow.pop %v4567
      %v4569 = vmul.f32 %v4509, 1.442695
      %v4570 = vpow.pop %v4569
      %v4571 = vmul.f32 %v4510, 1.442695
      %v4572 = vpow.pop %v4571
      %v4573 = vmul.f32 %v4511, 1.442695
      %v4574 = vpow.pop %v4573
      %v4575 = vmul.f32 %v4512, 1.442695
      %v4576 = vpow.pop %v4575
      %v4577 = vadd.f32 %v4514, 1.0
      %v4578 = vadd.f32 %v4516, 1.0
      %v4579 = vadd.f32 %v4518, 1.0
      %v4580 = vadd.f32 %v4520, 1.0
      %v4581 = vadd.f32 %v4522, 1.0
      %v4582 = vadd.f32 %v4524, 1.0
      %v4583 = vadd.f32 %v4526, 1.0
      %v4584 = vadd.f32 %v4528, 1.0
      %v4585 = vadd.f32 %v4530, 1.0
      %v4586 = vadd.f32 %v4532, 1.0
      %v4587 = vadd.f32 %v4534, 1.0
      %v4588 = vadd.f32 %v4536, 1.0
      %v4589 = vadd.f32 %v4538, 1.0
      %v4590 = vadd.f32 %v4540, 1.0
      %v4591 = vadd.f32 %v4542, 1.0
      %v4592 = vadd.f32 %v4544, 1.0
      %v4593 = vadd.f32 %v4546, 1.0
      %v4594 = vadd.f32 %v4548, 1.0
      %v4595 = vadd.f32 %v4550, 1.0
      %v4596 = vadd.f32 %v4552, 1.0
      %v4597 = vadd.f32 %v4554, 1.0
      %v4598 = vadd.f32 %v4556, 1.0
      %v4599 = vadd.f32 %v4558, 1.0
      %v4600 = vadd.f32 %v4560, 1.0
      %v4601 = vadd.f32 %v4562, 1.0
      %v4602 = vadd.f32 %v4564, 1.0
      %v4603 = vadd.f32 %v4566, 1.0
      %v4604 = vadd.f32 %v4568, 1.0
      %v4605 = vadd.f32 %v4570, 1.0
      %v4606 = vadd.f32 %v4572, 1.0
      %v4607 = vadd.f32 %v4574, 1.0
      %v4608 = vadd.f32 %v4576, 1.0
      %v4609 = vrcp.pop %v4577
      %v4610 = vmul.f32 1.0, %v4609
      %v4611 = vrcp.pop %v4578
      %v4612 = vmul.f32 1.0, %v4611
      %v4613 = vrcp.pop %v4579
      %v4614 = vmul.f32 1.0, %v4613
      %v4615 = vrcp.pop %v4580
      %v4616 = vmul.f32 1.0, %v4615
      %v4617 = vrcp.pop %v4581
      %v4618 = vmul.f32 1.0, %v4617
      %v4619 = vrcp.pop %v4582
      %v4620 = vmul.f32 1.0, %v4619
      %v4621 = vrcp.pop %v4583
      %v4622 = vmul.f32 1.0, %v4621
      %v4623 = vrcp.pop %v4584
      %v4624 = vmul.f32 1.0, %v4623
      %v4625 = vrcp.pop %v4585
      %v4626 = vmul.f32 1.0, %v4625
      %v4627 = vrcp.pop %v4586
      %v4628 = vmul.f32 1.0, %v4627
      %v4629 = vrcp.pop %v4587
      %v4630 = vmul.f32 1.0, %v4629
      %v4631 = vrcp.pop %v4588
      %v4632 = vmul.f32 1.0, %v4631
      %v4633 = vrcp.pop %v4589
      %v4634 = vmul.f32 1.0, %v4633
      %v4635 = vrcp.pop %v4590
      %v4636 = vmul.f32 1.0, %v4635
      %v4637 = vrcp.pop %v4591
      %v4638 = vmul.f32 1.0, %v4637
      %v4639 = vrcp.pop %v4592
      %v4640 = vmul.f32 1.0, %v4639
      %v4641 = vrcp.pop %v4593
      %v4642 = vmul.f32 1.0, %v4641
      %v4643 = vrcp.pop %v4594
      %v4644 = vmul.f32 1.0, %v4643
      %v4645 = vrcp.pop %v4595
      %v4646 = vmul.f32 1.0, %v4645
      %v4647 = vrcp.pop %v4596
      %v4648 = vmul.f32 1.0, %v4647
      %v4649 = vrcp.pop %v4597
      %v4650 = vmul.f32 1.0, %v4649
      %v4651 = vrcp.pop %v4598
      %v4652 = vmul.f32 1.0, %v4651
      %v4653 = vrcp.pop %v4599
      %v4654 = vmul.f32 1.0, %v4653
      %v4655 = vrcp.pop %v4600
      %v4656 = vmul.f32 1.0, %v4655
      %v4657 = vrcp.pop %v4601
      %v4658 = vmul.f32 1.0, %v4657
      %v4659 = vrcp.pop %v4602
      %v4660 = vmul.f32 1.0, %v4659
      %v4661 = vrcp.pop %v4603
      %v4662 = vmul.f32 1.0, %v4661
      %v4663 = vrcp.pop %v4604
      %v4664 = vmul.f32 1.0, %v4663
      %v4665 = vrcp.pop %v4605
      %v4666 = vmul.f32 1.0, %v4665
      %v4667 = vrcp.pop %v4606
      %v4668 = vmul.f32 1.0, %v4667
      %v4669 = vrcp.pop %v4607
      %v4670 = vmul.f32 1.0, %v4669
      %v4671 = vrcp.pop %v4608
      %v4672 = vmul.f32 1.0, %v4671
      %v4673 = vmul.f32 %v4449, %v4610
      %v4674 = vmul.f32 %v4450, %v4612
      %v4675 = vmul.f32 %v4451, %v4614
      %v4676 = vmul.f32 %v4452, %v4616
      %v4677 = vmul.f32 %v4453, %v4618
      %v4678 = vmul.f32 %v4454, %v4620
      %v4679 = vmul.f32 %v4455, %v4622
      %v4680 = vmul.f32 %v4456, %v4624
      %v4681 = vmul.f32 %v4457, %v4626
      %v4682 = vmul.f32 %v4458, %v4628
      %v4683 = vmul.f32 %v4459, %v4630
      %v4684 = vmul.f32 %v4460, %v4632
      %v4685 = vmul.f32 %v4461, %v4634
      %v4686 = vmul.f32 %v4462, %v4636
      %v4687 = vmul.f32 %v4463, %v4638
      %v4688 = vmul.f32 %v4464, %v4640
      %v4689 = vmul.f32 %v4465, %v4642
      %v4690 = vmul.f32 %v4466, %v4644
      %v4691 = vmul.f32 %v4467, %v4646
      %v4692 = vmul.f32 %v4468, %v4648
      %v4693 = vmul.f32 %v4469, %v4650
      %v4694 = vmul.f32 %v4470, %v4652
      %v4695 = vmul.f32 %v4471, %v4654
      %v4696 = vmul.f32 %v4472, %v4656
      %v4697 = vmul.f32 %v4473, %v4658
      %v4698 = vmul.f32 %v4474, %v4660
      %v4699 = vmul.f32 %v4475, %v4662
      %v4700 = vmul.f32 %v4476, %v4664
      %v4701 = vmul.f32 %v4477, %v4666
      %v4702 = vmul.f32 %v4478, %v4668
      %v4703 = vmul.f32 %v4479, %v4670
      %v4704 = vmul.f32 %v4480, %v4672
      %v4705 = vld [vmem:[%s3] sm:$0xff]
      %v4706 = vld [vmem:[%s4] sm:$0xf]
      %v4708 = vsel %vm284, %v252, 0
      %v4711 = vsel %vm284, %v253, 0
      %v4714 = vsel %vm284, %v254, 0
      %v4717 = vsel %vm284, %v255, 0
      %v4720 = vsel %vm284, %v256, 0
      %v4723 = vsel %vm284, %v257, 0
      %v4726 = vsel %vm284, %v258, 0
      %v4729 = vsel %vm284, %v259, 0
      %v4732 = vsel %vm284, %v260, 0
      %v4735 = vsel %vm284, %v261, 0
      %v4738 = vsel %vm284, %v262, 0
      %v4741 = vsel %vm284, %v263, 0
      %v4744 = vsel %vm284, %v264, 0
      %v4747 = vsel %vm284, %v265, 0
      %v4750 = vsel %vm284, %v266, 0
      %v4753 = vsel %vm284, %v267, 0
      %v4756 = vsel %vm284, %v268, 0
      %v4759 = vsel %vm284, %v269, 0
      %v4762 = vsel %vm284, %v270, 0
      %v4765 = vsel %vm284, %v271, 0
      %v4768 = vsel %vm284, %v272, 0
      %v4771 = vsel %vm284, %v273, 0
      %v4774 = vsel %vm284, %v274, 0
      %v4777 = vsel %vm284, %v275, 0
      %v4780 = vsel %vm284, %v276, 0
      %v4783 = vsel %vm284, %v277, 0
      %v4786 = vsel %vm284, %v278, 0
      %v4789 = vsel %vm284, %v279, 0
      %v4792 = vsel %vm284, %v280, 0
      %v4795 = vsel %vm284, %v281, 0
      %v4798 = vsel %vm284, %v282, 0
      %v4801 = vsel %vm284, %v283, 0
      %v4804 = vsel %vm999, %v4706, 0
      %4806 = vmatprep.subr.mxu0 0.0
      %4807 = vmatpush1.msra.mxu0 0.0
      %4808 = vmatprep.subr.mxu0 0.0
      %4809 = vmatpush1.msra.mxu0 0.0
      %4810 = vmatprep.subr.mxu0 0.0
      %4811 = vmatpush1.msra.mxu0 0.0
      %4812 = vmatprep.subr.mxu0 0.0
      %4813 = vmatpush1.msra.mxu0 0.0
      %4814 = vmatprep.subr.mxu0 0.0
      %4815 = vmatpush1.msra.mxu0 0.0
      %4816 = vmatprep.subr.mxu0 0.0
      %4817 = vmatpush1.msra.mxu0 0.0
      %4818 = vmatprep.subr.mxu0 0.0
      %4819 = vmatpush1.msra.mxu0 0.0
      %4820 = vmatprep.subr.mxu0 0.0
      %4821 = vmatpush1.msra.mxu0 0.0
      %4822 = vmatprep.subr.mxu0 0.0
      %4823 = vmatpush1.msra.mxu0 0.0
      %4824 = vmatprep.subr.mxu0 0.0
      %4825 = vmatpush1.msra.mxu0 0.0
      %4826 = vmatprep.subr.mxu0 0.0
      %4827 = vmatpush1.msra.mxu0 0.0
      %4828 = vmatprep.subr.mxu0 0.0
      %4829 = vmatpush1.msra.mxu0 0.0
      %4830 = vmatprep.subr.mxu0 0.0
      %4831 = vmatpush1.msra.mxu0 0.0
      %4832 = vmatprep.subr.mxu0 0.0
      %4833 = vmatpush1.msra.mxu0 0.0
      %4834 = vmatprep.subr.mxu0 0.0
      %4835 = vmatpush1.msra.mxu0 0.0
      %4836 = vmatprep.subr.mxu0 0.0
      %4837 = vmatpush1.msra.mxu0 %v4804
      %4838 = vmatprep.subr.mxu0 0.0
      %4839 = vmatpush2.msra.mxu0 0.0
      %4840 = vmatprep.subr.mxu0 0.0
      %4841 = vmatpush2.msra.mxu0 0.0
      %4842 = vmatprep.subr.mxu0 0.0
      %4843 = vmatpush2.msra.mxu0 0.0
      %4844 = vmatprep.subr.mxu0 0.0
      %4845 = vmatpush2.msra.mxu0 0.0
      %4846 = vmatprep.subr.mxu0 0.0
      %4847 = vmatpush2.msra.mxu0 0.0
      %4848 = vmatprep.subr.mxu0 0.0
      %4849 = vmatpush2.msra.mxu0 0.0
      %4850 = vmatprep.subr.mxu0 0.0
      %4851 = vmatpush2.msra.mxu0 0.0
      %4852 = vmatprep.subr.mxu0 0.0
      %4853 = vmatpush2.msra.mxu0 0.0
      %4854 = vmatprep.subr.mxu0 0.0
      %4855 = vmatpush2.msra.mxu0 0.0
      %4856 = vmatprep.subr.mxu0 0.0
      %4857 = vmatpush2.msra.mxu0 0.0
      %4858 = vmatprep.subr.mxu0 0.0
      %4859 = vmatpush2.msra.mxu0 0.0
      %4860 = vmatprep.subr.mxu0 0.0
      %4861 = vmatpush2.msra.mxu0 0.0
      %4862 = vmatprep.subr.mxu0 0.0
      %4863 = vmatpush2.msra.mxu0 0.0
      %4864 = vmatprep.subr.mxu0 0.0
      %4865 = vmatpush2.msra.mxu0 0.0
      %4866 = vmatprep.subr.mxu0 0.0
      %4867 = vmatpush2.msra.mxu0 0.0
      %4868 = vmatprep.subr.mxu0 0.0
      %4869 = vmatpush2.msra.mxu0 0.0
      %4870 = vmatprep.mubr.f32.mxu0 0.0
      %4871 = vmatmul.mubr.f32.gmra.mxu0 %v4708
      %v4872 = vpop.f32.mrf.mxu0
      %v4873 = vadd.f32 0.0, %v4872
      %v4874 = vpop.f32.mrf.mxu0
      %4875 = vmatprep.mubr.f32.mxu0 0.0
      %4876 = vmatmul.mubr.f32.gmra.mxu0 %v4711
      %v4877 = vpop.f32.mrf.mxu0
      %v4878 = vadd.f32 0.0, %v4877
      %v4879 = vpop.f32.mrf.mxu0
      %4880 = vmatprep.mubr.f32.mxu0 0.0
      %4881 = vmatmul.mubr.f32.gmra.mxu0 %v4714
      %v4882 = vpop.f32.mrf.mxu0
      %v4883 = vadd.f32 0.0, %v4882
      %v4884 = vpop.f32.mrf.mxu0
      %4885 = vmatprep.mubr.f32.mxu0 0.0
      %4886 = vmatmul.mubr.f32.gmra.mxu0 %v4717
      %v4887 = vpop.f32.mrf.mxu0
      %v4888 = vadd.f32 0.0, %v4887
      %v4889 = vpop.f32.mrf.mxu0
      %4890 = vmatprep.mubr.f32.mxu0 0.0
      %4891 = vmatmul.mubr.f32.gmra.mxu0 %v4720
      %v4892 = vpop.f32.mrf.mxu0
      %v4893 = vadd.f32 0.0, %v4892
      %v4894 = vpop.f32.mrf.mxu0
      %4895 = vmatprep.mubr.f32.mxu0 0.0
      %4896 = vmatmul.mubr.f32.gmra.mxu0 %v4723
      %v4897 = vpop.f32.mrf.mxu0
      %v4898 = vadd.f32 0.0, %v4897
      %v4899 = vpop.f32.mrf.mxu0
      %4900 = vmatprep.mubr.f32.mxu0 0.0
      %4901 = vmatmul.mubr.f32.gmra.mxu0 %v4726
      %v4902 = vpop.f32.mrf.mxu0
      %v4903 = vadd.f32 0.0, %v4902
      %v4904 = vpop.f32.mrf.mxu0
      %4905 = vmatprep.mubr.f32.mxu0 0.0
      %4906 = vmatmul.mubr.f32.gmra.mxu0 %v4729
      %v4907 = vpop.f32.mrf.mxu0
      %v4908 = vadd.f32 0.0, %v4907
      %v4909 = vpop.f32.mrf.mxu0
      %4910 = vmatprep.mubr.f32.mxu0 0.0
      %4911 = vmatmul.mubr.f32.gmra.mxu0 %v4732
      %v4912 = vpop.f32.mrf.mxu0
      %v4913 = vadd.f32 0.0, %v4912
      %v4914 = vpop.f32.mrf.mxu0
      %4915 = vmatprep.mubr.f32.mxu0 0.0
      %4916 = vmatmul.mubr.f32.gmra.mxu0 %v4735
      %v4917 = vpop.f32.mrf.mxu0
      %v4918 = vadd.f32 0.0, %v4917
      %v4919 = vpop.f32.mrf.mxu0
      %4920 = vmatprep.mubr.f32.mxu0 0.0
      %4921 = vmatmul.mubr.f32.gmra.mxu0 %v4738
      %v4922 = vpop.f32.mrf.mxu0
      %v4923 = vadd.f32 0.0, %v4922
      %v4924 = vpop.f32.mrf.mxu0
      %4925 = vmatprep.mubr.f32.mxu0 0.0
      %4926 = vmatmul.mubr.f32.gmra.mxu0 %v4741
      %v4927 = vpop.f32.mrf.mxu0
      %v4928 = vadd.f32 0.0, %v4927
      %v4929 = vpop.f32.mrf.mxu0
      %4930 = vmatprep.mubr.f32.mxu0 0.0
      %4931 = vmatmul.mubr.f32.gmra.mxu0 %v4744
      %v4932 = vpop.f32.mrf.mxu0
      %v4933 = vadd.f32 0.0, %v4932
      %v4934 = vpop.f32.mrf.mxu0
      %4935 = vmatprep.mubr.f32.mxu0 0.0
      %4936 = vmatmul.mubr.f32.gmra.mxu0 %v4747
      %v4937 = vpop.f32.mrf.mxu0
      %v4938 = vadd.f32 0.0, %v4937
      %v4939 = vpop.f32.mrf.mxu0
      %4940 = vmatprep.mubr.f32.mxu0 0.0
      %4941 = vmatmul.mubr.f32.gmra.mxu0 %v4750
      %v4942 = vpop.f32.mrf.mxu0
      %v4943 = vadd.f32 0.0, %v4942
      %v4944 = vpop.f32.mrf.mxu0
      %4945 = vmatprep.mubr.f32.mxu0 0.0
      %4946 = vmatmul.mubr.f32.gmra.mxu0 %v4753
      %v4947 = vpop.f32.mrf.mxu0
      %v4948 = vadd.f32 0.0, %v4947
      %v4949 = vpop.f32.mrf.mxu0
      %4950 = vmatprep.mubr.f32.mxu0 0.0
      %4951 = vmatmul.mubr.f32.gmra.mxu0 %v4756
      %v4952 = vpop.f32.mrf.mxu0
      %v4953 = vadd.f32 0.0, %v4952
      %v4954 = vpop.f32.mrf.mxu0
      %4955 = vmatprep.mubr.f32.mxu0 0.0
      %4956 = vmatmul.mubr.f32.gmra.mxu0 %v4759
      %v4957 = vpop.f32.mrf.mxu0
      %v4958 = vadd.f32 0.0, %v4957
      %v4959 = vpop.f32.mrf.mxu0
      %4960 = vmatprep.mubr.f32.mxu0 0.0
      %4961 = vmatmul.mubr.f32.gmra.mxu0 %v4762
      %v4962 = vpop.f32.mrf.mxu0
      %v4963 = vadd.f32 0.0, %v4962
      %v4964 = vpop.f32.mrf.mxu0
      %4965 = vmatprep.mubr.f32.mxu0 0.0
      %4966 = vmatmul.mubr.f32.gmra.mxu0 %v4765
      %v4967 = vpop.f32.mrf.mxu0
      %v4968 = vadd.f32 0.0, %v4967
      %v4969 = vpop.f32.mrf.mxu0
      %4970 = vmatprep.mubr.f32.mxu0 0.0
      %4971 = vmatmul.mubr.f32.gmra.mxu0 %v4768
      %v4972 = vpop.f32.mrf.mxu0
      %v4973 = vadd.f32 0.0, %v4972
      %v4974 = vpop.f32.mrf.mxu0
      %4975 = vmatprep.mubr.f32.mxu0 0.0
      %4976 = vmatmul.mubr.f32.gmra.mxu0 %v4771
      %v4977 = vpop.f32.mrf.mxu0
      %v4978 = vadd.f32 0.0, %v4977
      %v4979 = vpop.f32.mrf.mxu0
      %4980 = vmatprep.mubr.f32.mxu0 0.0
      %4981 = vmatmul.mubr.f32.gmra.mxu0 %v4774
      %v4982 = vpop.f32.mrf.mxu0
      %v4983 = vadd.f32 0.0, %v4982
      %v4984 = vpop.f32.mrf.mxu0
      %4985 = vmatprep.mubr.f32.mxu0 0.0
      %4986 = vmatmul.mubr.f32.gmra.mxu0 %v4777
      %v4987 = vpop.f32.mrf.mxu0
      %v4988 = vadd.f32 0.0, %v4987
      %v4989 = vpop.f32.mrf.mxu0
      %4990 = vmatprep.mubr.f32.mxu0 0.0
      %4991 = vmatmul.mubr.f32.gmra.mxu0 %v4780
      %v4992 = vpop.f32.mrf.mxu0
      %v4993 = vadd.f32 0.0, %v4992
      %v4994 = vpop.f32.mrf.mxu0
      %4995 = vmatprep.mubr.f32.mxu0 0.0
      %4996 = vmatmul.mubr.f32.gmra.mxu0 %v4783
      %v4997 = vpop.f32.mrf.mxu0
      %v4998 = vadd.f32 0.0, %v4997
      %v4999 = vpop.f32.mrf.mxu0
      %5000 = vmatprep.mubr.f32.mxu0 0.0
      %5001 = vmatmul.mubr.f32.gmra.mxu0 %v4786
      %v5002 = vpop.f32.mrf.mxu0
      %v5003 = vadd.f32 0.0, %v5002
      %v5004 = vpop.f32.mrf.mxu0
      %5005 = vmatprep.mubr.f32.mxu0 0.0
      %5006 = vmatmul.mubr.f32.gmra.mxu0 %v4789
      %v5007 = vpop.f32.mrf.mxu0
      %v5008 = vadd.f32 0.0, %v5007
      %v5009 = vpop.f32.mrf.mxu0
      %5010 = vmatprep.mubr.f32.mxu0 0.0
      %5011 = vmatmul.mubr.f32.gmra.mxu0 %v4792
      %v5012 = vpop.f32.mrf.mxu0
      %v5013 = vadd.f32 0.0, %v5012
      %v5014 = vpop.f32.mrf.mxu0
      %5015 = vmatprep.mubr.f32.mxu0 0.0
      %5016 = vmatmul.mubr.f32.gmra.mxu0 %v4795
      %v5017 = vpop.f32.mrf.mxu0
      %v5018 = vadd.f32 0.0, %v5017
      %v5019 = vpop.f32.mrf.mxu0
      %5020 = vmatprep.mubr.f32.mxu0 0.0
      %5021 = vmatmul.mubr.f32.gmra.mxu0 %v4798
      %v5022 = vpop.f32.mrf.mxu0
      %v5023 = vadd.f32 0.0, %v5022
      %v5024 = vpop.f32.mrf.mxu0
      %5025 = vmatprep.mubr.f32.mxu0 0.0
      %5026 = vmatmul.mubr.f32.gmra.mxu0 %v4801
      %v5027 = vpop.f32.mrf.mxu0
      %v5028 = vadd.f32 0.0, %v5027
      %v5029 = vpop.f32.mrf.mxu0
      %5030 = vdwg.mxu0
      %vm5031 = vcmask 64512
      %v5033 = vsel %vm5031, %v4673, 0
      %v5036 = vsel %vm5031, %v4674, 0
      %v5039 = vsel %vm5031, %v4675, 0
      %v5042 = vsel %vm5031, %v4676, 0
      %v5045 = vsel %vm5031, %v4677, 0
      %v5048 = vsel %vm5031, %v4678, 0
      %v5051 = vsel %vm5031, %v4679, 0
      %v5054 = vsel %vm5031, %v4680, 0
      %v5057 = vsel %vm5031, %v4681, 0
      %v5060 = vsel %vm5031, %v4682, 0
      %v5063 = vsel %vm5031, %v4683, 0
      %v5066 = vsel %vm5031, %v4684, 0
      %v5069 = vsel %vm5031, %v4685, 0
      %v5072 = vsel %vm5031, %v4686, 0
      %v5075 = vsel %vm5031, %v4687, 0
      %v5078 = vsel %vm5031, %v4688, 0
      %v5081 = vsel %vm5031, %v4689, 0
      %v5084 = vsel %vm5031, %v4690, 0
      %v5087 = vsel %vm5031, %v4691, 0
      %v5090 = vsel %vm5031, %v4692, 0
      %v5093 = vsel %vm5031, %v4693, 0
      %v5096 = vsel %vm5031, %v4694, 0
      %v5099 = vsel %vm5031, %v4695, 0
      %v5102 = vsel %vm5031, %v4696, 0
      %v5105 = vsel %vm5031, %v4697, 0
      %v5108 = vsel %vm5031, %v4698, 0
      %v5111 = vsel %vm5031, %v4699, 0
      %v5114 = vsel %vm5031, %v4700, 0
      %v5117 = vsel %vm5031, %v4701, 0
      %v5120 = vsel %vm5031, %v4702, 0
      %v5123 = vsel %vm5031, %v4703, 0
      %v5126 = vsel %vm5031, %v4704, 0
      %5128 = vmatprep.subr.mxu0 0.0
      %5129 = vmatpush1.msra.mxu0 0.0
      %5130 = vmatprep.subr.mxu0 0.0
      %5131 = vmatpush1.msra.mxu0 0.0
      %5132 = vmatprep.subr.mxu0 0.0
      %5133 = vmatpush1.msra.mxu0 0.0
      %5134 = vmatprep.subr.mxu0 0.0
      %5135 = vmatpush1.msra.mxu0 0.0
      %5136 = vmatprep.subr.mxu0 0.0
      %5137 = vmatpush1.msra.mxu0 0.0
      %5138 = vmatprep.subr.mxu0 0.0
      %5139 = vmatpush1.msra.mxu0 0.0
      %5140 = vmatprep.subr.mxu0 0.0
      %5141 = vmatpush1.msra.mxu0 0.0
      %5142 = vmatprep.subr.mxu0 0.0
      %5143 = vmatpush1.msra.mxu0 0.0
      %5144 = vmatprep.subr.mxu0 0.0
      %5145 = vmatpush1.msra.mxu0 0.0
      %5146 = vmatprep.subr.mxu0 0.0
      %5147 = vmatpush1.msra.mxu0 0.0
      %5148 = vmatprep.subr.mxu0 0.0
      %5149 = vmatpush1.msra.mxu0 0.0
      %5150 = vmatprep.subr.mxu0 0.0
      %5151 = vmatpush1.msra.mxu0 0.0
      %5152 = vmatprep.subr.mxu0 0.0
      %5153 = vmatpush1.msra.mxu0 0.0
      %5154 = vmatprep.subr.mxu0 0.0
      %5155 = vmatpush1.msra.mxu0 0.0
      %5156 = vmatprep.subr.mxu0 0.0
      %5157 = vmatpush1.msra.mxu0 0.0
      %5158 = vmatprep.subr.mxu0 0.0
      %5159 = vmatpush1.msra.mxu0 %v4705
      %5160 = vmatprep.subr.mxu0 0.0
      %5161 = vmatpush2.msra.mxu0 0.0
      %5162 = vmatprep.subr.mxu0 0.0
      %5163 = vmatpush2.msra.mxu0 0.0
      %5164 = vmatprep.subr.mxu0 0.0
      %5165 = vmatpush2.msra.mxu0 0.0
      %5166 = vmatprep.subr.mxu0 0.0
      %5167 = vmatpush2.msra.mxu0 0.0
      %5168 = vmatprep.subr.mxu0 0.0
      %5169 = vmatpush2.msra.mxu0 0.0
      %5170 = vmatprep.subr.mxu0 0.0
      %5171 = vmatpush2.msra.mxu0 0.0
      %5172 = vmatprep.subr.mxu0 0.0
      %5173 = vmatpush2.msra.mxu0 0.0
      %5174 = vmatprep.subr.mxu0 0.0
      %5175 = vmatpush2.msra.mxu0 0.0
      %5176 = vmatprep.subr.mxu0 0.0
      %5177 = vmatpush2.msra.mxu0 0.0
      %5178 = vmatprep.subr.mxu0 0.0
      %5179 = vmatpush2.msra.mxu0 0.0
      %5180 = vmatprep.subr.mxu0 0.0
      %5181 = vmatpush2.msra.mxu0 0.0
      %5182 = vmatprep.subr.mxu0 0.0
      %5183 = vmatpush2.msra.mxu0 0.0
      %5184 = vmatprep.subr.mxu0 0.0
      %5185 = vmatpush2.msra.mxu0 0.0
      %5186 = vmatprep.subr.mxu0 0.0
      %5187 = vmatpush2.msra.mxu0 0.0
      %5188 = vmatprep.subr.mxu0 0.0
      %5189 = vmatpush2.msra.mxu0 0.0
      %5190 = vmatprep.subr.mxu0 0.0
      %5191 = vmatpush2.msra.mxu0 0.0
      %5192 = vmatprep.mubr.f32.mxu0 0.0
      %5193 = vmatmul.mubr.f32.gmra.mxu0 %v5033
      %v5194 = vpop.f32.mrf.mxu0
      %v5195 = vadd.f32 %v4873, %v5194
      %v5196 = vpop.f32.mrf.mxu0
      %5197 = vmatprep.mubr.f32.mxu0 0.0
      %5198 = vmatmul.mubr.f32.gmra.mxu0 %v5036
      %v5199 = vpop.f32.mrf.mxu0
      %v5200 = vadd.f32 %v4878, %v5199
      %v5201 = vpop.f32.mrf.mxu0
      %5202 = vmatprep.mubr.f32.mxu0 0.0
      %5203 = vmatmul.mubr.f32.gmra.mxu0 %v5039
      %v5204 = vpop.f32.mrf.mxu0
      %v5205 = vadd.f32 %v4883, %v5204
      %v5206 = vpop.f32.mrf.mxu0
      %5207 = vmatprep.mubr.f32.mxu0 0.0
      %5208 = vmatmul.mubr.f32.gmra.mxu0 %v5042
      %v5209 = vpop.f32.mrf.mxu0
      %v5210 = vadd.f32 %v4888, %v5209
      %v5211 = vpop.f32.mrf.mxu0
      %5212 = vmatprep.mubr.f32.mxu0 0.0
      %5213 = vmatmul.mubr.f32.gmra.mxu0 %v5045
      %v5214 = vpop.f32.mrf.mxu0
      %v5215 = vadd.f32 %v4893, %v5214
      %v5216 = vpop.f32.mrf.mxu0
      %5217 = vmatprep.mubr.f32.mxu0 0.0
      %5218 = vmatmul.mubr.f32.gmra.mxu0 %v5048
      %v5219 = vpop.f32.mrf.mxu0
      %v5220 = vadd.f32 %v4898, %v5219
      %v5221 = vpop.f32.mrf.mxu0
      %5222 = vmatprep.mubr.f32.mxu0 0.0
      %5223 = vmatmul.mubr.f32.gmra.mxu0 %v5051
      %v5224 = vpop.f32.mrf.mxu0
      %v5225 = vadd.f32 %v4903, %v5224
      %v5226 = vpop.f32.mrf.mxu0
      %5227 = vmatprep.mubr.f32.mxu0 0.0
      %5228 = vmatmul.mubr.f32.gmra.mxu0 %v5054
      %v5229 = vpop.f32.mrf.mxu0
      %v5230 = vadd.f32 %v4908, %v5229
      %v5231 = vpop.f32.mrf.mxu0
      %5232 = vmatprep.mubr.f32.mxu0 0.0
      %5233 = vmatmul.mubr.f32.gmra.mxu0 %v5057
      %v5234 = vpop.f32.mrf.mxu0
      %v5235 = vadd.f32 %v4913, %v5234
      %v5236 = vpop.f32.mrf.mxu0
      %5237 = vmatprep.mubr.f32.mxu0 0.0
      %5238 = vmatmul.mubr.f32.gmra.mxu0 %v5060
      %v5239 = vpop.f32.mrf.mxu0
      %v5240 = vadd.f32 %v4918, %v5239
      %v5241 = vpop.f32.mrf.mxu0
      %5242 = vmatprep.mubr.f32.mxu0 0.0
      %5243 = vmatmul.mubr.f32.gmra.mxu0 %v5063
      %v5244 = vpop.f32.mrf.mxu0
      %v5245 = vadd.f32 %v4923, %v5244
      %v5246 = vpop.f32.mrf.mxu0
      %5247 = vmatprep.mubr.f32.mxu0 0.0
      %5248 = vmatmul.mubr.f32.gmra.mxu0 %v5066
      %v5249 = vpop.f32.mrf.mxu0
      %v5250 = vadd.f32 %v4928, %v5249
      %v5251 = vpop.f32.mrf.mxu0
      %5252 = vmatprep.mubr.f32.mxu0 0.0
      %5253 = vmatmul.mubr.f32.gmra.mxu0 %v5069
      %v5254 = vpop.f32.mrf.mxu0
      %v5255 = vadd.f32 %v4933, %v5254
      %v5256 = vpop.f32.mrf.mxu0
      %5257 = vmatprep.mubr.f32.mxu0 0.0
      %5258 = vmatmul.mubr.f32.gmra.mxu0 %v5072
      %v5259 = vpop.f32.mrf.mxu0
      %v5260 = vadd.f32 %v4938, %v5259
      %v5261 = vpop.f32.mrf.mxu0
      %5262 = vmatprep.mubr.f32.mxu0 0.0
      %5263 = vmatmul.mubr.f32.gmra.mxu0 %v5075
      %v5264 = vpop.f32.mrf.mxu0
      %v5265 = vadd.f32 %v4943, %v5264
      %v5266 = vpop.f32.mrf.mxu0
      %5267 = vmatprep.mubr.f32.mxu0 0.0
      %5268 = vmatmul.mubr.f32.gmra.mxu0 %v5078
      %v5269 = vpop.f32.mrf.mxu0
      %v5270 = vadd.f32 %v4948, %v5269
      %v5271 = vpop.f32.mrf.mxu0
      %5272 = vmatprep.mubr.f32.mxu0 0.0
      %5273 = vmatmul.mubr.f32.gmra.mxu0 %v5081
      %v5274 = vpop.f32.mrf.mxu0
      %v5275 = vadd.f32 %v4953, %v5274
      %v5276 = vpop.f32.mrf.mxu0
      %5277 = vmatprep.mubr.f32.mxu0 0.0
      %5278 = vmatmul.mubr.f32.gmra.mxu0 %v5084
      %v5279 = vpop.f32.mrf.mxu0
      %v5280 = vadd.f32 %v4958, %v5279
      %v5281 = vpop.f32.mrf.mxu0
      %5282 = vmatprep.mubr.f32.mxu0 0.0
      %5283 = vmatmul.mubr.f32.gmra.mxu0 %v5087
      %v5284 = vpop.f32.mrf.mxu0
      %v5285 = vadd.f32 %v4963, %v5284
      %v5286 = vpop.f32.mrf.mxu0
      %5287 = vmatprep.mubr.f32.mxu0 0.0
      %5288 = vmatmul.mubr.f32.gmra.mxu0 %v5090
      %v5289 = vpop.f32.mrf.mxu0
      %v5290 = vadd.f32 %v4968, %v5289
      %v5291 = vpop.f32.mrf.mxu0
      %5292 = vmatprep.mubr.f32.mxu0 0.0
      %5293 = vmatmul.mubr.f32.gmra.mxu0 %v5093
      %v5294 = vpop.f32.mrf.mxu0
      %v5295 = vadd.f32 %v4973, %v5294
      %v5296 = vpop.f32.mrf.mxu0
      %5297 = vmatprep.mubr.f32.mxu0 0.0
      %5298 = vmatmul.mubr.f32.gmra.mxu0 %v5096
      %v5299 = vpop.f32.mrf.mxu0
      %v5300 = vadd.f32 %v4978, %v5299
      %v5301 = vpop.f32.mrf.mxu0
      %5302 = vmatprep.mubr.f32.mxu0 0.0
      %5303 = vmatmul.mubr.f32.gmra.mxu0 %v5099
      %v5304 = vpop.f32.mrf.mxu0
      %v5305 = vadd.f32 %v4983, %v5304
      %v5306 = vpop.f32.mrf.mxu0
      %5307 = vmatprep.mubr.f32.mxu0 0.0
      %5308 = vmatmul.mubr.f32.gmra.mxu0 %v5102
      %v5309 = vpop.f32.mrf.mxu0
      %v5310 = vadd.f32 %v4988, %v5309
      %v5311 = vpop.f32.mrf.mxu0
      %5312 = vmatprep.mubr.f32.mxu0 0.0
      %5313 = vmatmul.mubr.f32.gmra.mxu0 %v5105
      %v5314 = vpop.f32.mrf.mxu0
      %v5315 = vadd.f32 %v4993, %v5314
      %v5316 = vpop.f32.mrf.mxu0
      %5317 = vmatprep.mubr.f32.mxu0 0.0
      %5318 = vmatmul.mubr.f32.gmra.mxu0 %v5108
      %v5319 = vpop.f32.mrf.mxu0
      %v5320 = vadd.f32 %v4998, %v5319
      %v5321 = vpop.f32.mrf.mxu0
      %5322 = vmatprep.mubr.f32.mxu0 0.0
      %5323 = vmatmul.mubr.f32.gmra.mxu0 %v5111
      %v5324 = vpop.f32.mrf.mxu0
      %v5325 = vadd.f32 %v5003, %v5324
      %v5326 = vpop.f32.mrf.mxu0
      %5327 = vmatprep.mubr.f32.mxu0 0.0
      %5328 = vmatmul.mubr.f32.gmra.mxu0 %v5114
      %v5329 = vpop.f32.mrf.mxu0
      %v5330 = vadd.f32 %v5008, %v5329
      %v5331 = vpop.f32.mrf.mxu0
      %5332 = vmatprep.mubr.f32.mxu0 0.0
      %5333 = vmatmul.mubr.f32.gmra.mxu0 %v5117
      %v5334 = vpop.f32.mrf.mxu0
      %v5335 = vadd.f32 %v5013, %v5334
      %v5336 = vpop.f32.mrf.mxu0
      %5337 = vmatprep.mubr.f32.mxu0 0.0
      %5338 = vmatmul.mubr.f32.gmra.mxu0 %v5120
      %v5339 = vpop.f32.mrf.mxu0
      %v5340 = vadd.f32 %v5018, %v5339
      %v5341 = vpop.f32.mrf.mxu0
      %5342 = vmatprep.mubr.f32.mxu0 0.0
      %5343 = vmatmul.mubr.f32.gmra.mxu0 %v5123
      %v5344 = vpop.f32.mrf.mxu0
      %v5345 = vadd.f32 %v5023, %v5344
      %v5346 = vpop.f32.mrf.mxu0
      %5347 = vmatprep.mubr.f32.mxu0 0.0
      %5348 = vmatmul.mubr.f32.gmra.mxu0 %v5126
      %v5349 = vpop.f32.mrf.mxu0
      %v5350 = vadd.f32 %v5028, %v5349
      %v5351 = vpop.f32.mrf.mxu0
      %5352 = vdwg.mxu0
      %v5353 = vld [vmem:[%s5] sm:$0x1]
      %v5355 = vlaneseq
      %v5356 = vshrl.u32 %v5355, 7
      %v5357 = vsub.s32 0, %v5356
      %v5358 = vrot.slane %v5353, %v5357
      %v5360 = vadd.f32 %v5195, %v5358
      %v5361 = vadd.f32 %v5200, %v5358
      %v5362 = vadd.f32 %v5205, %v5358
      %v5363 = vadd.f32 %v5210, %v5358
      %v5364 = vadd.f32 %v5215, %v5358
      %v5365 = vadd.f32 %v5220, %v5358
      %v5366 = vadd.f32 %v5225, %v5358
      %v5367 = vadd.f32 %v5230, %v5358
      %v5368 = vadd.f32 %v5235, %v5358
      %v5369 = vadd.f32 %v5240, %v5358
      %v5370 = vadd.f32 %v5245, %v5358
      %v5371 = vadd.f32 %v5250, %v5358
      %v5372 = vadd.f32 %v5255, %v5358
      %v5373 = vadd.f32 %v5260, %v5358
      %v5374 = vadd.f32 %v5265, %v5358
      %v5375 = vadd.f32 %v5270, %v5358
      %v5376 = vadd.f32 %v5275, %v5358
      %v5377 = vadd.f32 %v5280, %v5358
      %v5378 = vadd.f32 %v5285, %v5358
      %v5379 = vadd.f32 %v5290, %v5358
      %v5380 = vadd.f32 %v5295, %v5358
      %v5381 = vadd.f32 %v5300, %v5358
      %v5382 = vadd.f32 %v5305, %v5358
      %v5383 = vadd.f32 %v5310, %v5358
      %v5384 = vadd.f32 %v5315, %v5358
      %v5385 = vadd.f32 %v5320, %v5358
      %v5386 = vadd.f32 %v5325, %v5358
      %v5387 = vadd.f32 %v5330, %v5358
      %v5388 = vadd.f32 %v5335, %v5358
      %v5389 = vadd.f32 %v5340, %v5358
      %v5390 = vadd.f32 %v5345, %v5358
      %v5391 = vadd.f32 %v5350, %v5358
      %v5392 = vlaneseq
      %v5393 = vand.u32 %v5392, 127
      %vm5394 = vcmp.lt.s32.totalorder %v5393, 4
      %v5395 = vxor.u32 %v5360, 2147483648
      %v5396 = vxor.u32 %v5361, 2147483648
      %v5397 = vxor.u32 %v5362, 2147483648
      %v5398 = vxor.u32 %v5363, 2147483648
      %v5399 = vxor.u32 %v5364, 2147483648
      %v5400 = vxor.u32 %v5365, 2147483648
      %v5401 = vxor.u32 %v5366, 2147483648
      %v5402 = vxor.u32 %v5367, 2147483648
      %v5403 = vxor.u32 %v5368, 2147483648
      %v5404 = vxor.u32 %v5369, 2147483648
      %v5405 = vxor.u32 %v5370, 2147483648
      %v5406 = vxor.u32 %v5371, 2147483648
      %v5407 = vxor.u32 %v5372, 2147483648
      %v5408 = vxor.u32 %v5373, 2147483648
      %v5409 = vxor.u32 %v5374, 2147483648
      %v5410 = vxor.u32 %v5375, 2147483648
      %v5411 = vxor.u32 %v5376, 2147483648
      %v5412 = vxor.u32 %v5377, 2147483648
      %v5413 = vxor.u32 %v5378, 2147483648
      %v5414 = vxor.u32 %v5379, 2147483648
      %v5415 = vxor.u32 %v5380, 2147483648
      %v5416 = vxor.u32 %v5381, 2147483648
      %v5417 = vxor.u32 %v5382, 2147483648
      %v5418 = vxor.u32 %v5383, 2147483648
      %v5419 = vxor.u32 %v5384, 2147483648
      %v5420 = vxor.u32 %v5385, 2147483648
      %v5421 = vxor.u32 %v5386, 2147483648
      %v5422 = vxor.u32 %v5387, 2147483648
      %v5423 = vxor.u32 %v5388, 2147483648
      %v5424 = vxor.u32 %v5389, 2147483648
      %v5425 = vxor.u32 %v5390, 2147483648
      %v5426 = vxor.u32 %v5391, 2147483648
      %v5427 = vmul.f32 %v5395, 1.442695
      %v5428 = vpow.pop %v5427
      %v5429 = vmul.f32 %v5396, 1.442695
      %v5430 = vpow.pop %v5429
      %v5431 = vmul.f32 %v5397, 1.442695
      %v5432 = vpow.pop %v5431
      %v5433 = vmul.f32 %v5398, 1.442695
      %v5434 = vpow.pop %v5433
      %v5435 = vmul.f32 %v5399, 1.442695
      %v5436 = vpow.pop %v5435
      %v5437 = vmul.f32 %v5400, 1.442695
      %v5438 = vpow.pop %v5437
      %v5439 = vmul.f32 %v5401, 1.442695
      %v5440 = vpow.pop %v5439
      %v5441 = vmul.f32 %v5402, 1.442695
      %v5442 = vpow.pop %v5441
      %v5443 = vmul.f32 %v5403, 1.442695
      %v5444 = vpow.pop %v5443
      %v5445 = vmul.f32 %v5404, 1.442695
      %v5446 = vpow.pop %v5445
      %v5447 = vmul.f32 %v5405, 1.442695
      %v5448 = vpow.pop %v5447
      %v5449 = vmul.f32 %v5406, 1.442695
      %v5450 = vpow.pop %v5449
      %v5451 = vmul.f32 %v5407, 1.442695
      %v5452 = vpow.pop %v5451
      %v5453 = vmul.f32 %v5408, 1.442695
      %v5454 = vpow.pop %v5453
      %v5455 = vmul.f32 %v5409, 1.442695
      %v5456 = vpow.pop %v5455
      %v5457 = vmul.f32 %v5410, 1.442695
      %v5458 = vpow.pop %v5457
      %v5459 = vmul.f32 %v5411, 1.442695
      %v5460 = vpow.pop %v5459
      %v5461 = vmul.f32 %v5412, 1.442695
      %v5462 = vpow.pop %v5461
      %v5463 = vmul.f32 %v5413, 1.442695
      %v5464 = vpow.pop %v5463
      %v5465 = vmul.f32 %v5414, 1.442695
      %v5466 = vpow.pop %v5465
      %v5467 = vmul.f32 %v5415, 1.442695
      %v5468 = vpow.pop %v5467
      %v5469 = vmul.f32 %v5416, 1.442695
      %v5470 = vpow.pop %v5469
      %v5471 = vmul.f32 %v5417, 1.442695
      %v5472 = vpow.pop %v5471
      %v5473 = vmul.f32 %v5418, 1.442695
      %v5474 = vpow.pop %v5473
      %v5475 = vmul.f32 %v5419, 1.442695
      %v5476 = vpow.pop %v5475
      %v5477 = vmul.f32 %v5420, 1.442695
      %v5478 = vpow.pop %v5477
      %v5479 = vmul.f32 %v5421, 1.442695
      %v5480 = vpow.pop %v5479
      %v5481 = vmul.f32 %v5422, 1.442695
      %v5482 = vpow.pop %v5481
      %v5483 = vmul.f32 %v5423, 1.442695
      %v5484 = vpow.pop %v5483
      %v5485 = vmul.f32 %v5424, 1.442695
      %v5486 = vpow.pop %v5485
      %v5487 = vmul.f32 %v5425, 1.442695
      %v5488 = vpow.pop %v5487
      %v5489 = vmul.f32 %v5426, 1.442695
      %v5490 = vpow.pop %v5489
      %v5491 = vadd.f32 %v5428, 1.0
      %v5492 = vadd.f32 %v5430, 1.0
      %v5493 = vadd.f32 %v5432, 1.0
      %v5494 = vadd.f32 %v5434, 1.0
      %v5495 = vadd.f32 %v5436, 1.0
      %v5496 = vadd.f32 %v5438, 1.0
      %v5497 = vadd.f32 %v5440, 1.0
      %v5498 = vadd.f32 %v5442, 1.0
      %v5499 = vadd.f32 %v5444, 1.0
      %v5500 = vadd.f32 %v5446, 1.0
      %v5501 = vadd.f32 %v5448, 1.0
      %v5502 = vadd.f32 %v5450, 1.0
      %v5503 = vadd.f32 %v5452, 1.0
      %v5504 = vadd.f32 %v5454, 1.0
      %v5505 = vadd.f32 %v5456, 1.0
      %v5506 = vadd.f32 %v5458, 1.0
      %v5507 = vadd.f32 %v5460, 1.0
      %v5508 = vadd.f32 %v5462, 1.0
      %v5509 = vadd.f32 %v5464, 1.0
      %v5510 = vadd.f32 %v5466, 1.0
      %v5511 = vadd.f32 %v5468, 1.0
      %v5512 = vadd.f32 %v5470, 1.0
      %v5513 = vadd.f32 %v5472, 1.0
      %v5514 = vadd.f32 %v5474, 1.0
      %v5515 = vadd.f32 %v5476, 1.0
      %v5516 = vadd.f32 %v5478, 1.0
      %v5517 = vadd.f32 %v5480, 1.0
      %v5518 = vadd.f32 %v5482, 1.0
      %v5519 = vadd.f32 %v5484, 1.0
      %v5520 = vadd.f32 %v5486, 1.0
      %v5521 = vadd.f32 %v5488, 1.0
      %v5522 = vadd.f32 %v5490, 1.0
      %v5523 = vrcp.pop %v5491
      %v5524 = vmul.f32 1.0, %v5523
      %v5525 = vrcp.pop %v5492
      %v5526 = vmul.f32 1.0, %v5525
      %v5527 = vrcp.pop %v5493
      %v5528 = vmul.f32 1.0, %v5527
      %v5529 = vrcp.pop %v5494
      %v5530 = vmul.f32 1.0, %v5529
      %v5531 = vrcp.pop %v5495
      %v5532 = vmul.f32 1.0, %v5531
      %v5533 = vrcp.pop %v5496
      %v5534 = vmul.f32 1.0, %v5533
      %v5535 = vrcp.pop %v5497
      %v5536 = vmul.f32 1.0, %v5535
      %v5537 = vrcp.pop %v5498
      %v5538 = vmul.f32 1.0, %v5537
      %v5539 = vrcp.pop %v5499
      %v5540 = vmul.f32 1.0, %v5539
      %v5541 = vrcp.pop %v5500
      %v5542 = vmul.f32 1.0, %v5541
      %v5543 = vrcp.pop %v5501
      %v5544 = vmul.f32 1.0, %v5543
      %v5545 = vrcp.pop %v5502
      %v5546 = vmul.f32 1.0, %v5545
      %v5547 = vrcp.pop %v5503
      %v5548 = vmul.f32 1.0, %v5547
      %v5549 = vrcp.pop %v5504
      %v5550 = vmul.f32 1.0, %v5549
      %v5551 = vrcp.pop %v5505
      %v5552 = vmul.f32 1.0, %v5551
      %v5553 = vrcp.pop %v5506
      %v5554 = vmul.f32 1.0, %v5553
      %v5555 = vrcp.pop %v5507
      %v5556 = vmul.f32 1.0, %v5555
      %v5557 = vrcp.pop %v5508
      %v5558 = vmul.f32 1.0, %v5557
      %v5559 = vrcp.pop %v5509
      %v5560 = vmul.f32 1.0, %v5559
      %v5561 = vrcp.pop %v5510
      %v5562 = vmul.f32 1.0, %v5561
      %v5563 = vrcp.pop %v5511
      %v5564 = vmul.f32 1.0, %v5563
      %v5565 = vrcp.pop %v5512
      %v5566 = vmul.f32 1.0, %v5565
      %v5567 = vrcp.pop %v5513
      %v5568 = vmul.f32 1.0, %v5567
      %v5569 = vrcp.pop %v5514
      %v5570 = vmul.f32 1.0, %v5569
      %v5571 = vrcp.pop %v5515
      %v5572 = vmul.f32 1.0, %v5571
      %v5573 = vrcp.pop %v5516
      %v5574 = vmul.f32 1.0, %v5573
      %v5575 = vrcp.pop %v5517
      %v5576 = vmul.f32 1.0, %v5575
      %v5577 = vrcp.pop %v5518
      %v5578 = vmul.f32 1.0, %v5577
      %v5579 = vrcp.pop %v5519
      %v5580 = vmul.f32 1.0, %v5579
      %v5581 = vrcp.pop %v5520
      %v5582 = vmul.f32 1.0, %v5581
      %v5583 = vrcp.pop %v5521
      %v5584 = vmul.f32 1.0, %v5583
      %v5585 = vrcp.pop %v5522
      %v5586 = vmul.f32 1.0, %v5585
      %v5587 = vtanh.pop %v5360
      %v5588 = vtanh.pop %v5361
      %v5589 = vtanh.pop %v5362
      %v5590 = vtanh.pop %v5363
      %v5591 = vtanh.pop %v5364
      %v5592 = vtanh.pop %v5365
      %v5593 = vtanh.pop %v5366
      %v5594 = vtanh.pop %v5367
      %v5595 = vtanh.pop %v5368
      %v5596 = vtanh.pop %v5369
      %v5597 = vtanh.pop %v5370
      %v5598 = vtanh.pop %v5371
      %v5599 = vtanh.pop %v5372
      %v5600 = vtanh.pop %v5373
      %v5601 = vtanh.pop %v5374
      %v5602 = vtanh.pop %v5375
      %v5603 = vtanh.pop %v5376
      %v5604 = vtanh.pop %v5377
      %v5605 = vtanh.pop %v5378
      %v5606 = vtanh.pop %v5379
      %v5607 = vtanh.pop %v5380
      %v5608 = vtanh.pop %v5381
      %v5609 = vtanh.pop %v5382
      %v5610 = vtanh.pop %v5383
      %v5611 = vtanh.pop %v5384
      %v5612 = vtanh.pop %v5385
      %v5613 = vtanh.pop %v5386
      %v5614 = vtanh.pop %v5387
      %v5615 = vtanh.pop %v5388
      %v5616 = vtanh.pop %v5389
      %v5617 = vtanh.pop %v5390
      %v5618 = vtanh.pop %v5391
      %v5619 = vsel %vm5394, %v5524, %v5587
      %v5620 = vsel %vm5394, %v5526, %v5588
      %v5621 = vsel %vm5394, %v5528, %v5589
      %v5622 = vsel %vm5394, %v5530, %v5590
      %v5623 = vsel %vm5394, %v5532, %v5591
      %v5624 = vsel %vm5394, %v5534, %v5592
      %v5625 = vsel %vm5394, %v5536, %v5593
      %v5626 = vsel %vm5394, %v5538, %v5594
      %v5627 = vsel %vm5394, %v5540, %v5595
      %v5628 = vsel %vm5394, %v5542, %v5596
      %v5629 = vsel %vm5394, %v5544, %v5597
      %v5630 = vsel %vm5394, %v5546, %v5598
      %v5631 = vsel %vm5394, %v5548, %v5599
      %v5632 = vsel %vm5394, %v5550, %v5600
      %v5633 = vsel %vm5394, %v5552, %v5601
      %v5634 = vsel %vm5394, %v5554, %v5602
      %v5635 = vsel %vm5394, %v5556, %v5603
      %v5636 = vsel %vm5394, %v5558, %v5604
      %v5637 = vsel %vm5394, %v5560, %v5605
      %v5638 = vsel %vm5394, %v5562, %v5606
      %v5639 = vsel %vm5394, %v5564, %v5607
      %v5640 = vsel %vm5394, %v5566, %v5608
      %v5641 = vsel %vm5394, %v5568, %v5609
      %v5642 = vsel %vm5394, %v5570, %v5610
      %v5643 = vsel %vm5394, %v5572, %v5611
      %v5644 = vsel %vm5394, %v5574, %v5612
      %v5645 = vsel %vm5394, %v5576, %v5613
      %v5646 = vsel %vm5394, %v5578, %v5614
      %v5647 = vsel %vm5394, %v5580, %v5615
      %v5648 = vsel %vm5394, %v5582, %v5616
      %v5649 = vsel %vm5394, %v5584, %v5617
      %v5650 = vsel %vm5394, %v5586, %v5618
      %vm5651 = vcmask 48128
      %5652 = vst.msk [vmem:[%s251] sm:$0xff] %vm5651, %v5619
      %5653 = vst.msk [vmem:[%s251 + $0x8] sm:$0xff] %vm5651, %v5620
      %5654 = vst.msk [vmem:[%s251 + $0x10] sm:$0xff] %vm5651, %v5621
      %5655 = vst.msk [vmem:[%s251 + $0x18] sm:$0xff] %vm5651, %v5622
      %5656 = vst.msk [vmem:[%s251 + $0x20] sm:$0xff] %vm5651, %v5623
      %5657 = vst.msk [vmem:[%s251 + $0x28] sm:$0xff] %vm5651, %v5624
      %5658 = vst.msk [vmem:[%s251 + $0x30] sm:$0xff] %vm5651, %v5625
      %5659 = vst.msk [vmem:[%s251 + $0x38] sm:$0xff] %vm5651, %v5626
      %5660 = vst.msk [vmem:[%s251 + $0x40] sm:$0xff] %vm5651, %v5627
      %5661 = vst.msk [vmem:[%s251 + $0x48] sm:$0xff] %vm5651, %v5628
      %5662 = vst.msk [vmem:[%s251 + $0x50] sm:$0xff] %vm5651, %v5629
      %5663 = vst.msk [vmem:[%s251 + $0x58] sm:$0xff] %vm5651, %v5630
      %5664 = vst.msk [vmem:[%s251 + $0x60] sm:$0xff] %vm5651, %v5631
      %5665 = vst.msk [vmem:[%s251 + $0x68] sm:$0xff] %vm5651, %v5632
      %5666 = vst.msk [vmem:[%s251 + $0x70] sm:$0xff] %vm5651, %v5633
      %5667 = vst.msk [vmem:[%s251 + $0x78] sm:$0xff] %vm5651, %v5634
      %5668 = vst.msk [vmem:[%s251 + $0x80] sm:$0xff] %vm5651, %v5635
      %5669 = vst.msk [vmem:[%s251 + $0x88] sm:$0xff] %vm5651, %v5636
      %5670 = vst.msk [vmem:[%s251 + $0x90] sm:$0xff] %vm5651, %v5637
      %5671 = vst.msk [vmem:[%s251 + $0x98] sm:$0xff] %vm5651, %v5638
      %5672 = vst.msk [vmem:[%s251 + $0xa0] sm:$0xff] %vm5651, %v5639
      %5673 = vst.msk [vmem:[%s251 + $0xa8] sm:$0xff] %vm5651, %v5640
      %5674 = vst.msk [vmem:[%s251 + $0xb0] sm:$0xff] %vm5651, %v5641
      %5675 = vst.msk [vmem:[%s251 + $0xb8] sm:$0xff] %vm5651, %v5642
      %5676 = vst.msk [vmem:[%s251 + $0xc0] sm:$0xff] %vm5651, %v5643
      %5677 = vst.msk [vmem:[%s251 + $0xc8] sm:$0xff] %vm5651, %v5644
      %5678 = vst.msk [vmem:[%s251 + $0xd0] sm:$0xff] %vm5651, %v5645
      %5679 = vst.msk [vmem:[%s251 + $0xd8] sm:$0xff] %vm5651, %v5646
      %5680 = vst.msk [vmem:[%s251 + $0xe0] sm:$0xff] %vm5651, %v5647
      %5681 = vst.msk [vmem:[%s251 + $0xe8] sm:$0xff] %vm5651, %v5648
      %5682 = vst.msk [vmem:[%s251 + $0xf0] sm:$0xff] %vm5651, %v5649
      %5683 = vst.msk [vmem:[%s251 + $0xf8] sm:$0xff] %vm5651, %v5650
      %p5684 = scmp.lt.s32.totalorder %s17, 1
      %s5685 = scalar_select %p5684, %s17, 1
      %s5686 = smul.addr %s5685, 32
      %s5687 = smul.addr %s5686, 8
      %s5688 = scalar_lea.vmem %s6, %s5687
      // Predicated region
      $region45: #{tpu_custom_call.1} parent=43 // pred_check
        %p5689 = pneg %p166
      $region46: #{tpu_custom_call.1} parent=43 // pred_check_branch
        %5691 = sbr.rel (%p5689) target = $region48
      $region47: #{tpu_custom_call.1} parent=43 // pred_region
        _
      $region48: #{tpu_custom_call.1} parent=43 // pred_fallthru
        _
    $region44: #{tpu_custom_call.1} parent=5 // pred_fallthru
      _
    %p5692 = scmp.le.s32.totalorder 2, %s12
    // Predicated region
    $region49: #{tpu_custom_call.1} parent=5 // pred_check
      %p5693 = pneg %p5692
    $region50: #{tpu_custom_call.1} parent=5 // pred_check_branch
      %5695 = sbr.rel (%p5693) target = $region52
    $region51: #{tpu_custom_call.1} parent=5 // pred_region
      %s5696 = ssub.s32 %s12, 2
      // Predicated region
      $region53: #{tpu_custom_call.1} parent=51 // pred_check
        %p5697 = pneg %p172
      $region54: #{tpu_custom_call.1} parent=51 // pred_check_branch
        %5699 = sbr.rel (%p5697) target = $region56
      $region55: #{tpu_custom_call.1} parent=51 // pred_region
        %p5700 = scmp.lt.s32.totalorder %s18, 1
        %s5701 = scalar_select %p5700, %s18, 1
        %s5702 = smul.addr %s5701, 32
        %s5703 = smul.addr %s5702, 8
        %s5704 = scalar_lea.vmem %s6, %s5703
      $region56: #{tpu_custom_call.1} parent=51 // pred_fallthru
        _
    $region52: #{tpu_custom_call.1} parent=5 // pred_fallthru
      _
  $region6: #{tpu_custom_call.1} parent=0 // loop_footer
    %s16 = sadd.s32 1, %s12
  $region7: #{tpu_custom_call.1} parent=0 // loop_footer_branch
    %11 = sbr.rel target = $region3
  $region8: #{tpu_custom_call.1} parent=0 // loop_exit
    _

</llo_original>
